<compile_context>
chip_gen: v7x
topology: tpu7x:2x2x1
jax: 0.10.0
libtpu: 0.0.40
codegen_flags: <defaults>
</compile_context>

<pallas_src>
import functools
import numpy as np

import jax
import jax.numpy as jnp
from jax.experimental import pallas as pl
from jax.experimental.pallas import tpu as pltpu


# ----------------------------------------------------------------------------- fused kernel
def _downdsconv3_kernel(
    x_ref,
    wd1_ref, wp1_ref, g1_ref, b1_ref,
    wd2_ref, wp2_ref, g2_ref, b2_ref,
    wd3_ref, wp3_ref, g3_ref, b3_ref,
    mask_ref, sidx_ref,
    pval_ref, pidx_ref,
    xpad_ref,
    *, shifts, pool_offs, off, m, eps,
):
    """Fused 3x(depthwise-separable conv + BN + ReLU) + 2x2 maxpool-with-indices.

    Activations live as (C, M) slabs (channels on sublanes, flat N*H*W on lanes).
    xpad_ref is a zero-margined staging buffer so every depthwise tap and every
    pooling candidate is a static shifted-window load from VMEM.
    """
    xpad_ref[...] = jnp.zeros_like(xpad_ref)   # zero margins once; center is overwritten

    def stage(a, wd_ref, wp_ref, g_ref, b_ref):
        c = a.shape[0]
        # Stage activation into the padded slab (lane-aligned store at offset `off`).
        xpad_ref[0:c, off:off + m] = a

        # Depthwise conv: sum over k*k taps of (per-channel weight) * (shifted window).
        acc = None
        for t, s in enumerate(shifts):
            if s == 0:
                masked = a                                     # center tap: mask is all-ones
            else:
                win = xpad_ref[0:c, off + s:off + s + m]
                masked = mask_ref[t] * win                     # (1,m) * (c,m)
            term = wd_ref[t] * masked                          # (c,1) * (c,m)
            acc = term if acc is None else acc + term

        # Pointwise 1x1 conv: one lane-dense MXU matmul (Cout, Cin) @ (Cin, M).
        p = jnp.dot(wp_ref[...], acc, preferred_element_type=jnp.float32)

        # BatchNorm2d (training-mode batch stats over N*H*W) + ReLU.
        mu = jnp.mean(p, axis=1, keepdims=True)
        var = jnp.mean(jnp.square(p - mu), axis=1, keepdims=True)
        scale = jax.lax.rsqrt(var + eps) * g_ref[...]          # fold gamma at (Cout,1)
        y = (p - mu) * scale + b_ref[...]
        return jnp.maximum(y, 0.0)

    a = x_ref[...]
    a = stage(a, wd1_ref, wp1_ref, g1_ref, b1_ref)
    a = stage(a, wd2_ref, wp2_ref, g2_ref, b2_ref)
    a = stage(a, wd3_ref, wp3_ref, g3_ref, b3_ref)

    # Fused 2x2 maxpool with argmax. Results are only consumed at window top-left
    # positions (even row / even col), where all 4 candidate offsets stay inside the image.
    c = a.shape[0]
    xpad_ref[0:c, off:off + m] = a
    sidx = sidx_ref[...]                        # (1, M) within-image flat index i*W + j
    best = a
    bidx = jnp.broadcast_to(sidx, (c, m))
    for o in pool_offs:                         # (1, W, W+1)
        v = xpad_ref[0:c, off + o:off + o + m]
        gt = v > best                           # strict '>': first (row-major) max wins ties
        bidx = jnp.where(gt, sidx + o, bidx)
        best = jnp.where(gt, v, best)
    pval_ref[...] = best
    pidx_ref[...] = bidx


# ----------------------------------------------------------------------------- wrapper
def downdsconv3_forward(x_nchw, params, eps=1e-5):
    """Forward of DownDSConv3. x_nchw: (N, Cin, H, W). Returns (pooled NCHW, indices NCHW int32, pool_shape)."""
    N, Cin, H, W = x_nchw.shape
    k = params["dw1"].shape[-1]
    Cout = params["pw1"].shape[0]
    p = k // 2
    assert H % 2 == 0 and W % 2 == 0
    M = N * H * W
    HW = H * W
    T = k * k

    # ---- static layout glue (tiny; taps are NOT materialized, only masks/shift metadata) ----
    mm = np.arange(M)
    ii = (mm % HW) // W
    jj = mm % W
    shifts, masks = [], []
    for kh in range(k):
        for kw in range(k):
            dh, dw = kh - p, kw - p
            shifts.append(dh * W + dw)
            valid = (ii + dh >= 0) & (ii + dh < H) & (jj + dw >= 0) & (jj + dw < W)
            masks.append(valid.astype(np.float32))
    shifts = tuple(shifts)
    mask = jnp.asarray(np.stack(masks, 0)[:, None, :])           # (T, 1, M) f32
    sidx = jnp.asarray((mm % HW).astype(np.int32)[None, :])      # (1, M) int32

    smax = p * W + p                                             # largest |shift|
    off = 128 * ((smax + 127) // 128)                            # lane-aligned placement offset
    pad_lanes = off + M + 128                                    # zero right margin >= max(smax, W+1)
    rows = max(Cin, Cout)

    # channel-major lane-dense activation: (C, M)
    x_cm = jnp.transpose(x_nchw, (1, 0, 2, 3)).reshape(Cin, M).astype(jnp.float32)

    def dw_flat(w_dw):   # (C, 1, k, k) -> (T, C, 1), tap order kh*k + kw
        C = w_dw.shape[0]
        return jnp.transpose(w_dw.reshape(C, T), (1, 0)).reshape(T, C, 1).astype(jnp.float32)

    def pw_flat(w_pw):   # (Co, Ci, 1, 1) -> (Co, Ci)
        return w_pw.reshape(w_pw.shape[0], w_pw.shape[1]).astype(jnp.float32)

    def col(v):          # (C,) -> (C, 1)
        return v.reshape(-1, 1).astype(jnp.float32)

    ins = (
        x_cm,
        dw_flat(params["dw1"]), pw_flat(params["pw1"]), col(params["g1"]), col(params["b1"]),
        dw_flat(params["dw2"]), pw_flat(params["pw2"]), col(params["g2"]), col(params["b2"]),
        dw_flat(params["dw3"]), pw_flat(params["pw3"]), col(params["g3"]), col(params["b3"]),
        mask, sidx,
    )

    def full_spec(a):
        nd = a.ndim
        return pl.BlockSpec(a.shape, lambda i, _nd=nd: (0,) * _nd)

    kernel = functools.partial(
        _downdsconv3_kernel,
        shifts=shifts, pool_offs=(1, W, W + 1), off=off, m=M, eps=eps)

    pval, pidx = pl.pallas_call(
        kernel,
        out_shape=(
            jax.ShapeDtypeStruct((Cout, M), jnp.float32),
            jax.ShapeDtypeStruct((Cout, M), jnp.int32),
        ),
        grid_spec=pltpu.PrefetchScalarGridSpec(
            num_scalar_prefetch=0,
            grid=(1,),
            in_specs=[full_spec(a) for a in ins],
            out_specs=(
                pl.BlockSpec((Cout, M), lambda i: (0, 0)),
                pl.BlockSpec((Cout, M), lambda i: (0, 0)),
            ),
            scratch_shapes=[pltpu.VMEM((rows, pad_lanes), jnp.float32)],
        ),
        compiler_params=pltpu.CompilerParams(dimension_semantics=("arbitrary",)),
    )(*ins)

    # ---- layout glue: select window top-left results (2x downsample) and go back to NCHW ----
    pooled = pval.reshape(Cout, N, H, W)[:, :, ::2, ::2].transpose(1, 0, 2, 3)
    indices = pidx.reshape(Cout, N, H, W)[:, :, ::2, ::2].transpose(1, 0, 2, 3)
    pool_shape = (N, Cout, H, W)
    return pooled, indices, pool_shape


# ----------------------------------------------------------------------------- reference (check only)
def _reference(x, params, eps=1e-5):
    k = params["dw1"].shape[-1]
    p = k // 2

    def dsconv(z, wdw, wpw):
        groups = z.shape[1]
        zd = jax.lax.conv_general_dilated(
            z, wdw, (1, 1), [(p, p), (p, p)],
            dimension_numbers=("NCHW", "OIHW", "NCHW"),
            feature_group_count=groups, precision=jax.lax.Precision.HIGHEST)
        return jax.lax.conv_general_dilated(
            zd, wpw, (1, 1), [(0, 0), (0, 0)],
            dimension_numbers=("NCHW", "OIHW", "NCHW"),
            precision=jax.lax.Precision.HIGHEST)

    def bn_relu(z, g, b):
        mean = z.mean(axis=(0, 2, 3), keepdims=True)
        var = ((z - mean) ** 2).mean(axis=(0, 2, 3), keepdims=True)
        zn = (z - mean) / jnp.sqrt(var + eps) * g.reshape(1, -1, 1, 1) + b.reshape(1, -1, 1, 1)
        return jnp.maximum(zn, 0.0)

    y = bn_relu(dsconv(x, params["dw1"], params["pw1"]), params["g1"], params["b1"])
    y = bn_relu(dsconv(y, params["dw2"], params["pw2"]), params["g2"], params["b2"])
    y = bn_relu(dsconv(y, params["dw3"], params["pw3"]), params["g3"], params["b3"])

    yn = np.asarray(y)
    N, C, H, W = yn.shape
    Hp, Wp = H // 2, W // 2
    out = np.zeros((N, C, Hp, Wp), np.float32)
    ind = np.zeros((N, C, Hp, Wp), np.int64)
    for n in range(N):
        for c in range(C):
            for i in range(Hp):
                for j in range(Wp):
                    win = yn[n, c, 2 * i:2 * i + 2, 2 * j:2 * j + 2]
                    a, b = np.unravel_index(np.argmax(win), (2, 2))
                    out[n, c, i, j] = win[a, b]
                    ind[n, c, i, j] = (2 * i + a) * W + (2 * j + b)
    return yn, out, ind


if __name__ == "__main__":
    N, Cin, Cout, H, W, k = 2, 4, 8, 16, 16, 3
    key = jax.random.PRNGKey(0)
    kx, k1, k2, k3, k4, k5, k6 = jax.random.split(key, 7)

    x = jax.random.normal(kx, (N, Cin, H, W), dtype=jnp.float32)
    params = {
        # DepthwiseSeparableConv2d weights (bias=False, as in DownDSConv3)
        "dw1": 0.4 * jax.random.normal(k1, (Cin, 1, k, k), dtype=jnp.float32),
        "pw1": 0.4 * jax.random.normal(k2, (Cout, Cin, 1, 1), dtype=jnp.float32),
        "dw2": 0.4 * jax.random.normal(k3, (Cout, 1, k, k), dtype=jnp.float32),
        "pw2": 0.4 * jax.random.normal(k4, (Cout, Cout, 1, 1), dtype=jnp.float32),
        "dw3": 0.4 * jax.random.normal(k5, (Cout, 1, k, k), dtype=jnp.float32),
        "pw3": 0.4 * jax.random.normal(k6, (Cout, Cout, 1, 1), dtype=jnp.float32),
        # BatchNorm2d defaults: gamma=1, beta=0
        "g1": jnp.ones((Cout,), jnp.float32), "b1": jnp.zeros((Cout,), jnp.float32),
        "g2": jnp.ones((Cout,), jnp.float32), "b2": jnp.zeros((Cout,), jnp.float32),
        "g3": jnp.ones((Cout,), jnp.float32), "b3": jnp.zeros((Cout,), jnp.float32),
    }

    fwd = jax.jit(downdsconv3_forward, static_argnames=("eps",))
    pooled, idx, pool_shape = fwd(x, params)
    jax.block_until_ready((pooled, idx))

    # Correctness check against a plain-JAX/numpy reference of the PyTorch module.
    ref_y, ref_pool, ref_idx = _reference(x, params)
    pooled_np = np.asarray(pooled)
    idx_np = np.asarray(idx)

    assert pool_shape == (N, Cout, H, W)
    assert pooled_np.shape == (N, Cout, H // 2, W // 2) and idx_np.shape == pooled_np.shape
    assert np.allclose(pooled_np, ref_pool, rtol=5e-2, atol=5e-2)
    # Indices must point at (a value equal to) the window max in the reference pre-pool tensor.
    vals_at_idx = np.take_along_axis(
        ref_y.reshape(N, Cout, H * W), idx_np.reshape(N, Cout, -1).astype(np.int64), axis=2
    ).reshape(N, Cout, H // 2, W // 2)
    assert np.allclose(vals_at_idx, ref_pool, rtol=5e-2, atol=5e-2)

    print("KERNEL_OK")
</pallas_src>

<mosaic_0001>
module attributes {stable_mosaic.version = 11 : i64} {
  func.func @_downdsconv3_kernel(%arg0: i32, %arg1: memref<4x512xf32, #tpu.memory_space<vmem>>, %arg2: memref<9x4x1xf32, #tpu.memory_space<vmem>>, %arg3: memref<8x4xf32, #tpu.memory_space<vmem>>, %arg4: memref<8x1xf32, #tpu.memory_space<vmem>>, %arg5: memref<8x1xf32, #tpu.memory_space<vmem>>, %arg6: memref<9x8x1xf32, #tpu.memory_space<vmem>>, %arg7: memref<8x8xf32, #tpu.memory_space<vmem>>, %arg8: memref<8x1xf32, #tpu.memory_space<vmem>>, %arg9: memref<8x1xf32, #tpu.memory_space<vmem>>, %arg10: memref<9x8x1xf32, #tpu.memory_space<vmem>>, %arg11: memref<8x8xf32, #tpu.memory_space<vmem>>, %arg12: memref<8x1xf32, #tpu.memory_space<vmem>>, %arg13: memref<8x1xf32, #tpu.memory_space<vmem>>, %arg14: memref<9x1x512xf32, #tpu.memory_space<vmem>>, %arg15: memref<1x512xi32, #tpu.memory_space<vmem>>, %arg16: memref<8x512xf32, #tpu.memory_space<vmem>>, %arg17: memref<8x512xi32, #tpu.memory_space<vmem>>, %arg18: memref<8x768xf32, #tpu.memory_space<vmem>>) attributes {dimension_semantics = [#tpu.dimension_semantics<arbitrary>], iteration_bounds = array<i64: 1>, scalar_prefetch = 0 : i64, scratch_operands = 1 : i64, tpu.core_type = #tpu.core_type<tc>, window_params = [{pipeline_mode = #tpu.pipeline_mode<synchronous>, transform_indices = @transform_0, window_bounds = array<i64: 4, 512>}, {pipeline_mode = #tpu.pipeline_mode<synchronous>, transform_indices = @transform_1, window_bounds = array<i64: 9, 4, 1>}, {pipeline_mode = #tpu.pipeline_mode<synchronous>, transform_indices = @transform_2, window_bounds = array<i64: 8, 4>}, {pipeline_mode = #tpu.pipeline_mode<synchronous>, transform_indices = @transform_3, window_bounds = array<i64: 8, 1>}, {pipeline_mode = #tpu.pipeline_mode<synchronous>, transform_indices = @transform_4, window_bounds = array<i64: 8, 1>}, {pipeline_mode = #tpu.pipeline_mode<synchronous>, transform_indices = @transform_5, window_bounds = array<i64: 9, 8, 1>}, {pipeline_mode = #tpu.pipeline_mode<synchronous>, transform_indices = @transform_6, window_bounds = array<i64: 8, 8>}, {pipeline_mode = #tpu.pipeline_mode<synchronous>, transform_indices = @transform_7, window_bounds = array<i64: 8, 1>}, {pipeline_mode = #tpu.pipeline_mode<synchronous>, transform_indices = @transform_8, window_bounds = array<i64: 8, 1>}, {pipeline_mode = #tpu.pipeline_mode<synchronous>, transform_indices = @transform_9, window_bounds = array<i64: 9, 8, 1>}, {pipeline_mode = #tpu.pipeline_mode<synchronous>, transform_indices = @transform_10, window_bounds = array<i64: 8, 8>}, {pipeline_mode = #tpu.pipeline_mode<synchronous>, transform_indices = @transform_11, window_bounds = array<i64: 8, 1>}, {pipeline_mode = #tpu.pipeline_mode<synchronous>, transform_indices = @transform_12, window_bounds = array<i64: 8, 1>}, {pipeline_mode = #tpu.pipeline_mode<synchronous>, transform_indices = @transform_13, window_bounds = array<i64: 9, 1, 512>}, {pipeline_mode = #tpu.pipeline_mode<synchronous>, transform_indices = @transform_14, window_bounds = array<i64: 1, 512>}, {pipeline_mode = #tpu.pipeline_mode<synchronous>, transform_indices = @transform_15, window_bounds = array<i64: 8, 512>}, {pipeline_mode = #tpu.pipeline_mode<synchronous>, transform_indices = @transform_16, window_bounds = array<i64: 8, 512>}]} {
    %cst = arith.constant 0.000000e+00 : f32
    %0 = vector.broadcast %cst : f32 to vector<8x768xf32>
    %c0 = arith.constant 0 : index
    %c0_0 = arith.constant 0 : index
    %1 = vector.load %arg18[%c0, %c0_0] : memref<8x768xf32, #tpu.memory_space<vmem>>, vector<8x768xf32>
    tpu.vector_store %arg18[%c0, %c0_0], %0 {strides = array<i32>} : memref<8x768xf32, #tpu.memory_space<vmem>>, vector<8x768xf32>,
    %c0_1 = arith.constant 0 : index
    %c0_2 = arith.constant 0 : index
    %2 = vector.load %arg1[%c0_1, %c0_2] : memref<4x512xf32, #tpu.memory_space<vmem>>, vector<4x512xf32>
    %c0_3 = arith.constant 0 : index
    %c128 = arith.constant 128 : index
    %3 = vector.load %arg18[%c0_3, %c128] : memref<8x768xf32, #tpu.memory_space<vmem>>, vector<4x512xf32>
    tpu.vector_store %arg18[%c0_3, %c128], %2 {strides = array<i32>} : memref<8x768xf32, #tpu.memory_space<vmem>>, vector<4x512xf32>,
    %c0_4 = arith.constant 0 : index
    %c111 = arith.constant 111 : index
    %4 = vector.load %arg18[%c0_4, %c111] : memref<8x768xf32, #tpu.memory_space<vmem>>, vector<4x512xf32>
    %c0_5 = arith.constant 0 : index
    %c0_6 = arith.constant 0 : index
    %c0_7 = arith.constant 0 : index
    %5 = vector.load %arg14[%c0_5, %c0_6, %c0_7] : memref<9x1x512xf32, #tpu.memory_space<vmem>>, vector<1x1x512xf32>
    %6 = vector.shape_cast %5 : vector<1x1x512xf32> to vector<1x512xf32>
    %7 = vector.broadcast %6 : vector<1x512xf32> to vector<4x512xf32>
    %8 = arith.mulf %7, %4 : vector<4x512xf32>
    %c0_8 = arith.constant 0 : index
    %c0_9 = arith.constant 0 : index
    %c0_10 = arith.constant 0 : index
    %9 = vector.load %arg2[%c0_8, %c0_9, %c0_10] : memref<9x4x1xf32, #tpu.memory_space<vmem>>, vector<1x4x1xf32>
    %10 = vector.shape_cast %9 : vector<1x4x1xf32> to vector<4x1xf32>
    %11 = vector.broadcast %10 : vector<4x1xf32> to vector<4x512xf32>
    %12 = arith.mulf %11, %8 : vector<4x512xf32>
    %c0_11 = arith.constant 0 : index
    %c112 = arith.constant 112 : index
    %13 = vector.load %arg18[%c0_11, %c112] : memref<8x768xf32, #tpu.memory_space<vmem>>, vector<4x512xf32>
    %c1 = arith.constant 1 : index
    %c0_12 = arith.constant 0 : index
    %c0_13 = arith.constant 0 : index
    %14 = vector.load %arg14[%c1, %c0_12, %c0_13] : memref<9x1x512xf32, #tpu.memory_space<vmem>>, vector<1x1x512xf32>
    %15 = vector.shape_cast %14 : vector<1x1x512xf32> to vector<1x512xf32>
    %16 = vector.broadcast %15 : vector<1x512xf32> to vector<4x512xf32>
    %17 = arith.mulf %16, %13 : vector<4x512xf32>
    %c1_14 = arith.constant 1 : index
    %c0_15 = arith.constant 0 : index
    %c0_16 = arith.constant 0 : index
    %18 = vector.load %arg2[%c1_14, %c0_15, %c0_16] : memref<9x4x1xf32, #tpu.memory_space<vmem>>, vector<1x4x1xf32>
    %19 = vector.shape_cast %18 : vector<1x4x1xf32> to vector<4x1xf32>
    %20 = vector.broadcast %19 : vector<4x1xf32> to vector<4x512xf32>
    %21 = arith.mulf %20, %17 : vector<4x512xf32>
    %22 = arith.addf %12, %21 : vector<4x512xf32>
    %c0_17 = arith.constant 0 : index
    %c113 = arith.constant 113 : index
    %23 = vector.load %arg18[%c0_17, %c113] : memref<8x768xf32, #tpu.memory_space<vmem>>, vector<4x512xf32>
    %c2 = arith.constant 2 : index
    %c0_18 = arith.constant 0 : index
    %c0_19 = arith.constant 0 : index
    %24 = vector.load %arg14[%c2, %c0_18, %c0_19] : memref<9x1x512xf32, #tpu.memory_space<vmem>>, vector<1x1x512xf32>
    %25 = vector.shape_cast %24 : vector<1x1x512xf32> to vector<1x512xf32>
    %26 = vector.broadcast %25 : vector<1x512xf32> to vector<4x512xf32>
    %27 = arith.mulf %26, %23 : vector<4x512xf32>
    %c2_20 = arith.constant 2 : index
    %c0_21 = arith.constant 0 : index
    %c0_22 = arith.constant 0 : index
    %28 = vector.load %arg2[%c2_20, %c0_21, %c0_22] : memref<9x4x1xf32, #tpu.memory_space<vmem>>, vector<1x4x1xf32>
    %29 = vector.shape_cast %28 : vector<1x4x1xf32> to vector<4x1xf32>
    %30 = vector.broadcast %29 : vector<4x1xf32> to vector<4x512xf32>
    %31 = arith.mulf %30, %27 : vector<4x512xf32>
    %32 = arith.addf %22, %31 : vector<4x512xf32>
    %c0_23 = arith.constant 0 : index
    %c127 = arith.constant 127 : index
    %33 = vector.load %arg18[%c0_23, %c127] : memref<8x768xf32, #tpu.memory_space<vmem>>, vector<4x512xf32>
    %c3 = arith.constant 3 : index
    %c0_24 = arith.constant 0 : index
    %c0_25 = arith.constant 0 : index
    %34 = vector.load %arg14[%c3, %c0_24, %c0_25] : memref<9x1x512xf32, #tpu.memory_space<vmem>>, vector<1x1x512xf32>
    %35 = vector.shape_cast %34 : vector<1x1x512xf32> to vector<1x512xf32>
    %36 = vector.broadcast %35 : vector<1x512xf32> to vector<4x512xf32>
    %37 = arith.mulf %36, %33 : vector<4x512xf32>
    %c3_26 = arith.constant 3 : index
    %c0_27 = arith.constant 0 : index
    %c0_28 = arith.constant 0 : index
    %38 = vector.load %arg2[%c3_26, %c0_27, %c0_28] : memref<9x4x1xf32, #tpu.memory_space<vmem>>, vector<1x4x1xf32>
    %39 = vector.shape_cast %38 : vector<1x4x1xf32> to vector<4x1xf32>
    %40 = vector.broadcast %39 : vector<4x1xf32> to vector<4x512xf32>
    %41 = arith.mulf %40, %37 : vector<4x512xf32>
    %42 = arith.addf %32, %41 : vector<4x512xf32>
    %c4 = arith.constant 4 : index
    %c0_29 = arith.constant 0 : index
    %c0_30 = arith.constant 0 : index
    %43 = vector.load %arg2[%c4, %c0_29, %c0_30] : memref<9x4x1xf32, #tpu.memory_space<vmem>>, vector<1x4x1xf32>
    %44 = vector.shape_cast %43 : vector<1x4x1xf32> to vector<4x1xf32>
    %45 = vector.broadcast %44 : vector<4x1xf32> to vector<4x512xf32>
    %46 = arith.mulf %45, %2 : vector<4x512xf32>
    %47 = arith.addf %42, %46 : vector<4x512xf32>
    %c0_31 = arith.constant 0 : index
    %c129 = arith.constant 129 : index
    %48 = vector.load %arg18[%c0_31, %c129] : memref<8x768xf32, #tpu.memory_space<vmem>>, vector<4x512xf32>
    %c5 = arith.constant 5 : index
    %c0_32 = arith.constant 0 : index
    %c0_33 = arith.constant 0 : index
    %49 = vector.load %arg14[%c5, %c0_32, %c0_33] : memref<9x1x512xf32, #tpu.memory_space<vmem>>, vector<1x1x512xf32>
    %50 = vector.shape_cast %49 : vector<1x1x512xf32> to vector<1x512xf32>
    %51 = vector.broadcast %50 : vector<1x512xf32> to vector<4x512xf32>
    %52 = arith.mulf %51, %48 : vector<4x512xf32>
    %c5_34 = arith.constant 5 : index
    %c0_35 = arith.constant 0 : index
    %c0_36 = arith.constant 0 : index
    %53 = vector.load %arg2[%c5_34, %c0_35, %c0_36] : memref<9x4x1xf32, #tpu.memory_space<vmem>>, vector<1x4x1xf32>
    %54 = vector.shape_cast %53 : vector<1x4x1xf32> to vector<4x1xf32>
    %55 = vector.broadcast %54 : vector<4x1xf32> to vector<4x512xf32>
    %56 = arith.mulf %55, %52 : vector<4x512xf32>
    %57 = arith.addf %47, %56 : vector<4x512xf32>
    %c0_37 = arith.constant 0 : index
    %c143 = arith.constant 143 : index
    %58 = vector.load %arg18[%c0_37, %c143] : memref<8x768xf32, #tpu.memory_space<vmem>>, vector<4x512xf32>
    %c6 = arith.constant 6 : index
    %c0_38 = arith.constant 0 : index
    %c0_39 = arith.constant 0 : index
    %59 = vector.load %arg14[%c6, %c0_38, %c0_39] : memref<9x1x512xf32, #tpu.memory_space<vmem>>, vector<1x1x512xf32>
    %60 = vector.shape_cast %59 : vector<1x1x512xf32> to vector<1x512xf32>
    %61 = vector.broadcast %60 : vector<1x512xf32> to vector<4x512xf32>
    %62 = arith.mulf %61, %58 : vector<4x512xf32>
    %c6_40 = arith.constant 6 : index
    %c0_41 = arith.constant 0 : index
    %c0_42 = arith.constant 0 : index
    %63 = vector.load %arg2[%c6_40, %c0_41, %c0_42] : memref<9x4x1xf32, #tpu.memory_space<vmem>>, vector<1x4x1xf32>
    %64 = vector.shape_cast %63 : vector<1x4x1xf32> to vector<4x1xf32>
    %65 = vector.broadcast %64 : vector<4x1xf32> to vector<4x512xf32>
    %66 = arith.mulf %65, %62 : vector<4x512xf32>
    %67 = arith.addf %57, %66 : vector<4x512xf32>
    %c0_43 = arith.constant 0 : index
    %c144 = arith.constant 144 : index
    %68 = vector.load %arg18[%c0_43, %c144] : memref<8x768xf32, #tpu.memory_space<vmem>>, vector<4x512xf32>
    %c7 = arith.constant 7 : index
    %c0_44 = arith.constant 0 : index
    %c0_45 = arith.constant 0 : index
    %69 = vector.load %arg14[%c7, %c0_44, %c0_45] : memref<9x1x512xf32, #tpu.memory_space<vmem>>, vector<1x1x512xf32>
    %70 = vector.shape_cast %69 : vector<1x1x512xf32> to vector<1x512xf32>
    %71 = vector.broadcast %70 : vector<1x512xf32> to vector<4x512xf32>
    %72 = arith.mulf %71, %68 : vector<4x512xf32>
    %c7_46 = arith.constant 7 : index
    %c0_47 = arith.constant 0 : index
    %c0_48 = arith.constant 0 : index
    %73 = vector.load %arg2[%c7_46, %c0_47, %c0_48] : memref<9x4x1xf32, #tpu.memory_space<vmem>>, vector<1x4x1xf32>
    %74 = vector.shape_cast %73 : vector<1x4x1xf32> to vector<4x1xf32>
    %75 = vector.broadcast %74 : vector<4x1xf32> to vector<4x512xf32>
    %76 = arith.mulf %75, %72 : vector<4x512xf32>
    %77 = arith.addf %67, %76 : vector<4x512xf32>
    %c0_49 = arith.constant 0 : index
    %c145 = arith.constant 145 : index
    %78 = vector.load %arg18[%c0_49, %c145] : memref<8x768xf32, #tpu.memory_space<vmem>>, vector<4x512xf32>
    %c8 = arith.constant 8 : index
    %c0_50 = arith.constant 0 : index
    %c0_51 = arith.constant 0 : index
    %79 = vector.load %arg14[%c8, %c0_50, %c0_51] : memref<9x1x512xf32, #tpu.memory_space<vmem>>, vector<1x1x512xf32>
    %80 = vector.shape_cast %79 : vector<1x1x512xf32> to vector<1x512xf32>
    %81 = vector.broadcast %80 : vector<1x512xf32> to vector<4x512xf32>
    %82 = arith.mulf %81, %78 : vector<4x512xf32>
    %c8_52 = arith.constant 8 : index
    %c0_53 = arith.constant 0 : index
    %c0_54 = arith.constant 0 : index
    %83 = vector.load %arg2[%c8_52, %c0_53, %c0_54] : memref<9x4x1xf32, #tpu.memory_space<vmem>>, vector<1x4x1xf32>
    %84 = vector.shape_cast %83 : vector<1x4x1xf32> to vector<4x1xf32>
    %85 = vector.broadcast %84 : vector<4x1xf32> to vector<4x512xf32>
    %86 = arith.mulf %85, %82 : vector<4x512xf32>
    %87 = arith.addf %77, %86 : vector<4x512xf32>
    %c0_55 = arith.constant 0 : index
    %c0_56 = arith.constant 0 : index
    %88 = vector.load %arg3[%c0_55, %c0_56] : memref<8x4xf32, #tpu.memory_space<vmem>>, vector<8x4xf32>
    %cst_57 = arith.constant dense<0.000000e+00> : vector<8x512xf32>
    %89 = tpu.matmul %88, %87, %cst_57 {dimension_numbers = #tpu.dot_dimension_numbers<[1], [0], [0], [1], [0, 0, 1, 1], [], []>} : vector<8x4xf32>, vector<4x512xf32>, vector<8x512xf32> -> vector<8x512xf32>
    %cst_58 = arith.constant dense<0.000000e+00> : vector<8xf32>
    %90 = vector.multi_reduction <add>, %89, %cst_58 [1] : vector<8x512xf32> to vector<8xf32>
    %91 = vector.shape_cast %90 : vector<8xf32> to vector<8x1xf32>
    %cst_59 = arith.constant 5.120000e+02 : f32
    %92 = vector.broadcast %cst_59 : f32 to vector<8x1xf32>
    %93 = arith.divf %91, %92 : vector<8x1xf32>
    %94 = vector.broadcast %93 : vector<8x1xf32> to vector<8x512xf32>
    %95 = arith.subf %89, %94 : vector<8x512xf32>
    %96 = arith.mulf %95, %95 : vector<8x512xf32>
    %cst_60 = arith.constant dense<0.000000e+00> : vector<8xf32>
    %97 = vector.multi_reduction <add>, %96, %cst_60 [1] : vector<8x512xf32> to vector<8xf32>
    %98 = vector.shape_cast %97 : vector<8xf32> to vector<8x1xf32>
    %cst_61 = arith.constant 5.120000e+02 : f32
    %99 = vector.broadcast %cst_61 : f32 to vector<8x1xf32>
    %100 = arith.divf %98, %99 : vector<8x1xf32>
    %cst_62 = arith.constant 9.99999974E-6 : f32
    %101 = vector.broadcast %cst_62 : f32 to vector<8x1xf32>
    %102 = arith.addf %100, %101 : vector<8x1xf32>
    %103 = math.rsqrt %102 : vector<8x1xf32>
    %c0_63 = arith.constant 0 : index
    %c0_64 = arith.constant 0 : index
    %104 = vector.load %arg4[%c0_63, %c0_64] : memref<8x1xf32, #tpu.memory_space<vmem>>, vector<8x1xf32>
    %105 = arith.mulf %103, %104 : vector<8x1xf32>
    %106 = vector.broadcast %93 : vector<8x1xf32> to vector<8x512xf32>
    %107 = arith.subf %89, %106 : vector<8x512xf32>
    %108 = vector.broadcast %105 : vector<8x1xf32> to vector<8x512xf32>
    %109 = arith.mulf %107, %108 : vector<8x512xf32>
    %c0_65 = arith.constant 0 : index
    %c0_66 = arith.constant 0 : index
    %110 = vector.load %arg5[%c0_65, %c0_66] : memref<8x1xf32, #tpu.memory_space<vmem>>, vector<8x1xf32>
    %111 = vector.broadcast %110 : vector<8x1xf32> to vector<8x512xf32>
    %112 = arith.addf %109, %111 : vector<8x512xf32>
    %cst_67 = arith.constant 0.000000e+00 : f32
    %113 = vector.broadcast %cst_67 : f32 to vector<8x512xf32>
    %114 = arith.maximumf %112, %113 : vector<8x512xf32>
    %c0_68 = arith.constant 0 : index
    %c128_69 = arith.constant 128 : index
    %115 = vector.load %arg18[%c0_68, %c128_69] : memref<8x768xf32, #tpu.memory_space<vmem>>, vector<8x512xf32>
    tpu.vector_store %arg18[%c0_68, %c128_69], %114 {strides = array<i32>} : memref<8x768xf32, #tpu.memory_space<vmem>>, vector<8x512xf32>,
    %c0_70 = arith.constant 0 : index
    %c111_71 = arith.constant 111 : index
    %116 = vector.load %arg18[%c0_70, %c111_71] : memref<8x768xf32, #tpu.memory_space<vmem>>, vector<8x512xf32>
    %c0_72 = arith.constant 0 : index
    %c0_73 = arith.constant 0 : index
    %c0_74 = arith.constant 0 : index
    %117 = vector.load %arg14[%c0_72, %c0_73, %c0_74] : memref<9x1x512xf32, #tpu.memory_space<vmem>>, vector<1x1x512xf32>
    %118 = vector.shape_cast %117 : vector<1x1x512xf32> to vector<1x512xf32>
    %119 = vector.broadcast %118 : vector<1x512xf32> to vector<8x512xf32>
    %120 = arith.mulf %119, %116 : vector<8x512xf32>
    %c0_75 = arith.constant 0 : index
    %c0_76 = arith.constant 0 : index
    %c0_77 = arith.constant 0 : index
    %121 = vector.load %arg6[%c0_75, %c0_76, %c0_77] : memref<9x8x1xf32, #tpu.memory_space<vmem>>, vector<1x8x1xf32>
    %122 = vector.shape_cast %121 : vector<1x8x1xf32> to vector<8x1xf32>
    %123 = vector.broadcast %122 : vector<8x1xf32> to vector<8x512xf32>
    %124 = arith.mulf %123, %120 : vector<8x512xf32>
    %c0_78 = arith.constant 0 : index
    %c112_79 = arith.constant 112 : index
    %125 = vector.load %arg18[%c0_78, %c112_79] : memref<8x768xf32, #tpu.memory_space<vmem>>, vector<8x512xf32>
    %c1_80 = arith.constant 1 : index
    %c0_81 = arith.constant 0 : index
    %c0_82 = arith.constant 0 : index
    %126 = vector.load %arg14[%c1_80, %c0_81, %c0_82] : memref<9x1x512xf32, #tpu.memory_space<vmem>>, vector<1x1x512xf32>
    %127 = vector.shape_cast %126 : vector<1x1x512xf32> to vector<1x512xf32>
    %128 = vector.broadcast %127 : vector<1x512xf32> to vector<8x512xf32>
    %129 = arith.mulf %128, %125 : vector<8x512xf32>
    %c1_83 = arith.constant 1 : index
    %c0_84 = arith.constant 0 : index
    %c0_85 = arith.constant 0 : index
    %130 = vector.load %arg6[%c1_83, %c0_84, %c0_85] : memref<9x8x1xf32, #tpu.memory_space<vmem>>, vector<1x8x1xf32>
    %131 = vector.shape_cast %130 : vector<1x8x1xf32> to vector<8x1xf32>
    %132 = vector.broadcast %131 : vector<8x1xf32> to vector<8x512xf32>
    %133 = arith.mulf %132, %129 : vector<8x512xf32>
    %134 = arith.addf %124, %133 : vector<8x512xf32>
    %c0_86 = arith.constant 0 : index
    %c113_87 = arith.constant 113 : index
    %135 = vector.load %arg18[%c0_86, %c113_87] : memref<8x768xf32, #tpu.memory_space<vmem>>, vector<8x512xf32>
    %c2_88 = arith.constant 2 : index
    %c0_89 = arith.constant 0 : index
    %c0_90 = arith.constant 0 : index
    %136 = vector.load %arg14[%c2_88, %c0_89, %c0_90] : memref<9x1x512xf32, #tpu.memory_space<vmem>>, vector<1x1x512xf32>
    %137 = vector.shape_cast %136 : vector<1x1x512xf32> to vector<1x512xf32>
    %138 = vector.broadcast %137 : vector<1x512xf32> to vector<8x512xf32>
    %139 = arith.mulf %138, %135 : vector<8x512xf32>
    %c2_91 = arith.constant 2 : index
    %c0_92 = arith.constant 0 : index
    %c0_93 = arith.constant 0 : index
    %140 = vector.load %arg6[%c2_91, %c0_92, %c0_93] : memref<9x8x1xf32, #tpu.memory_space<vmem>>, vector<1x8x1xf32>
    %141 = vector.shape_cast %140 : vector<1x8x1xf32> to vector<8x1xf32>
    %142 = vector.broadcast %141 : vector<8x1xf32> to vector<8x512xf32>
    %143 = arith.mulf %142, %139 : vector<8x512xf32>
    %144 = arith.addf %134, %143 : vector<8x512xf32>
    %c0_94 = arith.constant 0 : index
    %c127_95 = arith.constant 127 : index
    %145 = vector.load %arg18[%c0_94, %c127_95] : memref<8x768xf32, #tpu.memory_space<vmem>>, vector<8x512xf32>
    %c3_96 = arith.constant 3 : index
    %c0_97 = arith.constant 0 : index
    %c0_98 = arith.constant 0 : index
    %146 = vector.load %arg14[%c3_96, %c0_97, %c0_98] : memref<9x1x512xf32, #tpu.memory_space<vmem>>, vector<1x1x512xf32>
    %147 = vector.shape_cast %146 : vector<1x1x512xf32> to vector<1x512xf32>
    %148 = vector.broadcast %147 : vector<1x512xf32> to vector<8x512xf32>
    %149 = arith.mulf %148, %145 : vector<8x512xf32>
    %c3_99 = arith.constant 3 : index
    %c0_100 = arith.constant 0 : index
    %c0_101 = arith.constant 0 : index
    %150 = vector.load %arg6[%c3_99, %c0_100, %c0_101] : memref<9x8x1xf32, #tpu.memory_space<vmem>>, vector<1x8x1xf32>
    %151 = vector.shape_cast %150 : vector<1x8x1xf32> to vector<8x1xf32>
    %152 = vector.broadcast %151 : vector<8x1xf32> to vector<8x512xf32>
    %153 = arith.mulf %152, %149 : vector<8x512xf32>
    %154 = arith.addf %144, %153 : vector<8x512xf32>
    %c4_102 = arith.constant 4 : index
    %c0_103 = arith.constant 0 : index
    %c0_104 = arith.constant 0 : index
    %155 = vector.load %arg6[%c4_102, %c0_103, %c0_104] : memref<9x8x1xf32, #tpu.memory_space<vmem>>, vector<1x8x1xf32>
    %156 = vector.shape_cast %155 : vector<1x8x1xf32> to vector<8x1xf32>
    %157 = vector.broadcast %156 : vector<8x1xf32> to vector<8x512xf32>
    %158 = arith.mulf %157, %114 : vector<8x512xf32>
    %159 = arith.addf %154, %158 : vector<8x512xf32>
    %c0_105 = arith.constant 0 : index
    %c129_106 = arith.constant 129 : index
    %160 = vector.load %arg18[%c0_105, %c129_106] : memref<8x768xf32, #tpu.memory_space<vmem>>, vector<8x512xf32>
    %c5_107 = arith.constant 5 : index
    %c0_108 = arith.constant 0 : index
    %c0_109 = arith.constant 0 : index
    %161 = vector.load %arg14[%c5_107, %c0_108, %c0_109] : memref<9x1x512xf32, #tpu.memory_space<vmem>>, vector<1x1x512xf32>
    %162 = vector.shape_cast %161 : vector<1x1x512xf32> to vector<1x512xf32>
    %163 = vector.broadcast %162 : vector<1x512xf32> to vector<8x512xf32>
    %164 = arith.mulf %163, %160 : vector<8x512xf32>
    %c5_110 = arith.constant 5 : index
    %c0_111 = arith.constant 0 : index
    %c0_112 = arith.constant 0 : index
    %165 = vector.load %arg6[%c5_110, %c0_111, %c0_112] : memref<9x8x1xf32, #tpu.memory_space<vmem>>, vector<1x8x1xf32>
    %166 = vector.shape_cast %165 : vector<1x8x1xf32> to vector<8x1xf32>
    %167 = vector.broadcast %166 : vector<8x1xf32> to vector<8x512xf32>
    %168 = arith.mulf %167, %164 : vector<8x512xf32>
    %169 = arith.addf %159, %168 : vector<8x512xf32>
    %c0_113 = arith.constant 0 : index
    %c143_114 = arith.constant 143 : index
    %170 = vector.load %arg18[%c0_113, %c143_114] : memref<8x768xf32, #tpu.memory_space<vmem>>, vector<8x512xf32>
    %c6_115 = arith.constant 6 : index
    %c0_116 = arith.constant 0 : index
    %c0_117 = arith.constant 0 : index
    %171 = vector.load %arg14[%c6_115, %c0_116, %c0_117] : memref<9x1x512xf32, #tpu.memory_space<vmem>>, vector<1x1x512xf32>
    %172 = vector.shape_cast %171 : vector<1x1x512xf32> to vector<1x512xf32>
    %173 = vector.broadcast %172 : vector<1x512xf32> to vector<8x512xf32>
    %174 = arith.mulf %173, %170 : vector<8x512xf32>
    %c6_118 = arith.constant 6 : index
    %c0_119 = arith.constant 0 : index
    %c0_120 = arith.constant 0 : index
    %175 = vector.load %arg6[%c6_118, %c0_119, %c0_120] : memref<9x8x1xf32, #tpu.memory_space<vmem>>, vector<1x8x1xf32>
    %176 = vector.shape_cast %175 : vector<1x8x1xf32> to vector<8x1xf32>
    %177 = vector.broadcast %176 : vector<8x1xf32> to vector<8x512xf32>
    %178 = arith.mulf %177, %174 : vector<8x512xf32>
    %179 = arith.addf %169, %178 : vector<8x512xf32>
    %c0_121 = arith.constant 0 : index
    %c144_122 = arith.constant 144 : index
    %180 = vector.load %arg18[%c0_121, %c144_122] : memref<8x768xf32, #tpu.memory_space<vmem>>, vector<8x512xf32>
    %c7_123 = arith.constant 7 : index
    %c0_124 = arith.constant 0 : index
    %c0_125 = arith.constant 0 : index
    %181 = vector.load %arg14[%c7_123, %c0_124, %c0_125] : memref<9x1x512xf32, #tpu.memory_space<vmem>>, vector<1x1x512xf32>
    %182 = vector.shape_cast %181 : vector<1x1x512xf32> to vector<1x512xf32>
    %183 = vector.broadcast %182 : vector<1x512xf32> to vector<8x512xf32>
    %184 = arith.mulf %183, %180 : vector<8x512xf32>
    %c7_126 = arith.constant 7 : index
    %c0_127 = arith.constant 0 : index
    %c0_128 = arith.constant 0 : index
    %185 = vector.load %arg6[%c7_126, %c0_127, %c0_128] : memref<9x8x1xf32, #tpu.memory_space<vmem>>, vector<1x8x1xf32>
    %186 = vector.shape_cast %185 : vector<1x8x1xf32> to vector<8x1xf32>
    %187 = vector.broadcast %186 : vector<8x1xf32> to vector<8x512xf32>
    %188 = arith.mulf %187, %184 : vector<8x512xf32>
    %189 = arith.addf %179, %188 : vector<8x512xf32>
    %c0_129 = arith.constant 0 : index
    %c145_130 = arith.constant 145 : index
    %190 = vector.load %arg18[%c0_129, %c145_130] : memref<8x768xf32, #tpu.memory_space<vmem>>, vector<8x512xf32>
    %c8_131 = arith.constant 8 : index
    %c0_132 = arith.constant 0 : index
    %c0_133 = arith.constant 0 : index
    %191 = vector.load %arg14[%c8_131, %c0_132, %c0_133] : memref<9x1x512xf32, #tpu.memory_space<vmem>>, vector<1x1x512xf32>
    %192 = vector.shape_cast %191 : vector<1x1x512xf32> to vector<1x512xf32>
    %193 = vector.broadcast %192 : vector<1x512xf32> to vector<8x512xf32>
    %194 = arith.mulf %193, %190 : vector<8x512xf32>
    %c8_134 = arith.constant 8 : index
    %c0_135 = arith.constant 0 : index
    %c0_136 = arith.constant 0 : index
    %195 = vector.load %arg6[%c8_134, %c0_135, %c0_136] : memref<9x8x1xf32, #tpu.memory_space<vmem>>, vector<1x8x1xf32>
    %196 = vector.shape_cast %195 : vector<1x8x1xf32> to vector<8x1xf32>
    %197 = vector.broadcast %196 : vector<8x1xf32> to vector<8x512xf32>
    %198 = arith.mulf %197, %194 : vector<8x512xf32>
    %199 = arith.addf %189, %198 : vector<8x512xf32>
    %c0_137 = arith.constant 0 : index
    %c0_138 = arith.constant 0 : index
    %200 = vector.load %arg7[%c0_137, %c0_138] : memref<8x8xf32, #tpu.memory_space<vmem>>, vector<8x8xf32>
    %cst_139 = arith.constant dense<0.000000e+00> : vector<8x512xf32>
    %201 = tpu.matmul %200, %199, %cst_139 {dimension_numbers = #tpu.dot_dimension_numbers<[1], [0], [0], [1], [0, 0, 1, 1], [], []>} : vector<8x8xf32>, vector<8x512xf32>, vector<8x512xf32> -> vector<8x512xf32>
    %cst_140 = arith.constant dense<0.000000e+00> : vector<8xf32>
    %202 = vector.multi_reduction <add>, %201, %cst_140 [1] : vector<8x512xf32> to vector<8xf32>
    %203 = vector.shape_cast %202 : vector<8xf32> to vector<8x1xf32>
    %cst_141 = arith.constant 5.120000e+02 : f32
    %204 = vector.broadcast %cst_141 : f32 to vector<8x1xf32>
    %205 = arith.divf %203, %204 : vector<8x1xf32>
    %206 = vector.broadcast %205 : vector<8x1xf32> to vector<8x512xf32>
    %207 = arith.subf %201, %206 : vector<8x512xf32>
    %208 = arith.mulf %207, %207 : vector<8x512xf32>
    %cst_142 = arith.constant dense<0.000000e+00> : vector<8xf32>
    %209 = vector.multi_reduction <add>, %208, %cst_142 [1] : vector<8x512xf32> to vector<8xf32>
    %210 = vector.shape_cast %209 : vector<8xf32> to vector<8x1xf32>
    %cst_143 = arith.constant 5.120000e+02 : f32
    %211 = vector.broadcast %cst_143 : f32 to vector<8x1xf32>
    %212 = arith.divf %210, %211 : vector<8x1xf32>
    %cst_144 = arith.constant 9.99999974E-6 : f32
    %213 = vector.broadcast %cst_144 : f32 to vector<8x1xf32>
    %214 = arith.addf %212, %213 : vector<8x1xf32>
    %215 = math.rsqrt %214 : vector<8x1xf32>
    %c0_145 = arith.constant 0 : index
    %c0_146 = arith.constant 0 : index
    %216 = vector.load %arg8[%c0_145, %c0_146] : memref<8x1xf32, #tpu.memory_space<vmem>>, vector<8x1xf32>
    %217 = arith.mulf %215, %216 : vector<8x1xf32>
    %218 = vector.broadcast %205 : vector<8x1xf32> to vector<8x512xf32>
    %219 = arith.subf %201, %218 : vector<8x512xf32>
    %220 = vector.broadcast %217 : vector<8x1xf32> to vector<8x512xf32>
    %221 = arith.mulf %219, %220 : vector<8x512xf32>
    %c0_147 = arith.constant 0 : index
    %c0_148 = arith.constant 0 : index
    %222 = vector.load %arg9[%c0_147, %c0_148] : memref<8x1xf32, #tpu.memory_space<vmem>>, vector<8x1xf32>
    %223 = vector.broadcast %222 : vector<8x1xf32> to vector<8x512xf32>
    %224 = arith.addf %221, %223 : vector<8x512xf32>
    %cst_149 = arith.constant 0.000000e+00 : f32
    %225 = vector.broadcast %cst_149 : f32 to vector<8x512xf32>
    %226 = arith.maximumf %224, %225 : vector<8x512xf32>
    %c0_150 = arith.constant 0 : index
    %c128_151 = arith.constant 128 : index
    %227 = vector.load %arg18[%c0_150, %c128_151] : memref<8x768xf32, #tpu.memory_space<vmem>>, vector<8x512xf32>
    tpu.vector_store %arg18[%c0_150, %c128_151], %226 {strides = array<i32>} : memref<8x768xf32, #tpu.memory_space<vmem>>, vector<8x512xf32>,
    %c0_152 = arith.constant 0 : index
    %c111_153 = arith.constant 111 : index
    %228 = vector.load %arg18[%c0_152, %c111_153] : memref<8x768xf32, #tpu.memory_space<vmem>>, vector<8x512xf32>
    %c0_154 = arith.constant 0 : index
    %c0_155 = arith.constant 0 : index
    %c0_156 = arith.constant 0 : index
    %229 = vector.load %arg14[%c0_154, %c0_155, %c0_156] : memref<9x1x512xf32, #tpu.memory_space<vmem>>, vector<1x1x512xf32>
    %230 = vector.shape_cast %229 : vector<1x1x512xf32> to vector<1x512xf32>
    %231 = vector.broadcast %230 : vector<1x512xf32> to vector<8x512xf32>
    %232 = arith.mulf %231, %228 : vector<8x512xf32>
    %c0_157 = arith.constant 0 : index
    %c0_158 = arith.constant 0 : index
    %c0_159 = arith.constant 0 : index
    %233 = vector.load %arg10[%c0_157, %c0_158, %c0_159] : memref<9x8x1xf32, #tpu.memory_space<vmem>>, vector<1x8x1xf32>
    %234 = vector.shape_cast %233 : vector<1x8x1xf32> to vector<8x1xf32>
    %235 = vector.broadcast %234 : vector<8x1xf32> to vector<8x512xf32>
    %236 = arith.mulf %235, %232 : vector<8x512xf32>
    %c0_160 = arith.constant 0 : index
    %c112_161 = arith.constant 112 : index
    %237 = vector.load %arg18[%c0_160, %c112_161] : memref<8x768xf32, #tpu.memory_space<vmem>>, vector<8x512xf32>
    %c1_162 = arith.constant 1 : index
    %c0_163 = arith.constant 0 : index
    %c0_164 = arith.constant 0 : index
    %238 = vector.load %arg14[%c1_162, %c0_163, %c0_164] : memref<9x1x512xf32, #tpu.memory_space<vmem>>, vector<1x1x512xf32>
    %239 = vector.shape_cast %238 : vector<1x1x512xf32> to vector<1x512xf32>
    %240 = vector.broadcast %239 : vector<1x512xf32> to vector<8x512xf32>
    %241 = arith.mulf %240, %237 : vector<8x512xf32>
    %c1_165 = arith.constant 1 : index
    %c0_166 = arith.constant 0 : index
    %c0_167 = arith.constant 0 : index
    %242 = vector.load %arg10[%c1_165, %c0_166, %c0_167] : memref<9x8x1xf32, #tpu.memory_space<vmem>>, vector<1x8x1xf32>
    %243 = vector.shape_cast %242 : vector<1x8x1xf32> to vector<8x1xf32>
    %244 = vector.broadcast %243 : vector<8x1xf32> to vector<8x512xf32>
    %245 = arith.mulf %244, %241 : vector<8x512xf32>
    %246 = arith.addf %236, %245 : vector<8x512xf32>
    %c0_168 = arith.constant 0 : index
    %c113_169 = arith.constant 113 : index
    %247 = vector.load %arg18[%c0_168, %c113_169] : memref<8x768xf32, #tpu.memory_space<vmem>>, vector<8x512xf32>
    %c2_170 = arith.constant 2 : index
    %c0_171 = arith.constant 0 : index
    %c0_172 = arith.constant 0 : index
    %248 = vector.load %arg14[%c2_170, %c0_171, %c0_172] : memref<9x1x512xf32, #tpu.memory_space<vmem>>, vector<1x1x512xf32>
    %249 = vector.shape_cast %248 : vector<1x1x512xf32> to vector<1x512xf32>
    %250 = vector.broadcast %249 : vector<1x512xf32> to vector<8x512xf32>
    %251 = arith.mulf %250, %247 : vector<8x512xf32>
    %c2_173 = arith.constant 2 : index
    %c0_174 = arith.constant 0 : index
    %c0_175 = arith.constant 0 : index
    %252 = vector.load %arg10[%c2_173, %c0_174, %c0_175] : memref<9x8x1xf32, #tpu.memory_space<vmem>>, vector<1x8x1xf32>
    %253 = vector.shape_cast %252 : vector<1x8x1xf32> to vector<8x1xf32>
    %254 = vector.broadcast %253 : vector<8x1xf32> to vector<8x512xf32>
    %255 = arith.mulf %254, %251 : vector<8x512xf32>
    %256 = arith.addf %246, %255 : vector<8x512xf32>
    %c0_176 = arith.constant 0 : index
    %c127_177 = arith.constant 127 : index
    %257 = vector.load %arg18[%c0_176, %c127_177] : memref<8x768xf32, #tpu.memory_space<vmem>>, vector<8x512xf32>
    %c3_178 = arith.constant 3 : index
    %c0_179 = arith.constant 0 : index
    %c0_180 = arith.constant 0 : index
    %258 = vector.load %arg14[%c3_178, %c0_179, %c0_180] : memref<9x1x512xf32, #tpu.memory_space<vmem>>, vector<1x1x512xf32>
    %259 = vector.shape_cast %258 : vector<1x1x512xf32> to vector<1x512xf32>
    %260 = vector.broadcast %259 : vector<1x512xf32> to vector<8x512xf32>
    %261 = arith.mulf %260, %257 : vector<8x512xf32>
    %c3_181 = arith.constant 3 : index
    %c0_182 = arith.constant 0 : index
    %c0_183 = arith.constant 0 : index
    %262 = vector.load %arg10[%c3_181, %c0_182, %c0_183] : memref<9x8x1xf32, #tpu.memory_space<vmem>>, vector<1x8x1xf32>
    %263 = vector.shape_cast %262 : vector<1x8x1xf32> to vector<8x1xf32>
    %264 = vector.broadcast %263 : vector<8x1xf32> to vector<8x512xf32>
    %265 = arith.mulf %264, %261 : vector<8x512xf32>
    %266 = arith.addf %256, %265 : vector<8x512xf32>
    %c4_184 = arith.constant 4 : index
    %c0_185 = arith.constant 0 : index
    %c0_186 = arith.constant 0 : index
    %267 = vector.load %arg10[%c4_184, %c0_185, %c0_186] : memref<9x8x1xf32, #tpu.memory_space<vmem>>, vector<1x8x1xf32>
    %268 = vector.shape_cast %267 : vector<1x8x1xf32> to vector<8x1xf32>
    %269 = vector.broadcast %268 : vector<8x1xf32> to vector<8x512xf32>
    %270 = arith.mulf %269, %226 : vector<8x512xf32>
    %271 = arith.addf %266, %270 : vector<8x512xf32>
    %c0_187 = arith.constant 0 : index
    %c129_188 = arith.constant 129 : index
    %272 = vector.load %arg18[%c0_187, %c129_188] : memref<8x768xf32, #tpu.memory_space<vmem>>, vector<8x512xf32>
    %c5_189 = arith.constant 5 : index
    %c0_190 = arith.constant 0 : index
    %c0_191 = arith.constant 0 : index
    %273 = vector.load %arg14[%c5_189, %c0_190, %c0_191] : memref<9x1x512xf32, #tpu.memory_space<vmem>>, vector<1x1x512xf32>
    %274 = vector.shape_cast %273 : vector<1x1x512xf32> to vector<1x512xf32>
    %275 = vector.broadcast %274 : vector<1x512xf32> to vector<8x512xf32>
    %276 = arith.mulf %275, %272 : vector<8x512xf32>
    %c5_192 = arith.constant 5 : index
    %c0_193 = arith.constant 0 : index
    %c0_194 = arith.constant 0 : index
    %277 = vector.load %arg10[%c5_192, %c0_193, %c0_194] : memref<9x8x1xf32, #tpu.memory_space<vmem>>, vector<1x8x1xf32>
    %278 = vector.shape_cast %277 : vector<1x8x1xf32> to vector<8x1xf32>
    %279 = vector.broadcast %278 : vector<8x1xf32> to vector<8x512xf32>
    %280 = arith.mulf %279, %276 : vector<8x512xf32>
    %281 = arith.addf %271, %280 : vector<8x512xf32>
    %c0_195 = arith.constant 0 : index
    %c143_196 = arith.constant 143 : index
    %282 = vector.load %arg18[%c0_195, %c143_196] : memref<8x768xf32, #tpu.memory_space<vmem>>, vector<8x512xf32>
    %c6_197 = arith.constant 6 : index
    %c0_198 = arith.constant 0 : index
    %c0_199 = arith.constant 0 : index
    %283 = vector.load %arg14[%c6_197, %c0_198, %c0_199] : memref<9x1x512xf32, #tpu.memory_space<vmem>>, vector<1x1x512xf32>
    %284 = vector.shape_cast %283 : vector<1x1x512xf32> to vector<1x512xf32>
    %285 = vector.broadcast %284 : vector<1x512xf32> to vector<8x512xf32>
    %286 = arith.mulf %285, %282 : vector<8x512xf32>
    %c6_200 = arith.constant 6 : index
    %c0_201 = arith.constant 0 : index
    %c0_202 = arith.constant 0 : index
    %287 = vector.load %arg10[%c6_200, %c0_201, %c0_202] : memref<9x8x1xf32, #tpu.memory_space<vmem>>, vector<1x8x1xf32>
    %288 = vector.shape_cast %287 : vector<1x8x1xf32> to vector<8x1xf32>
    %289 = vector.broadcast %288 : vector<8x1xf32> to vector<8x512xf32>
    %290 = arith.mulf %289, %286 : vector<8x512xf32>
    %291 = arith.addf %281, %290 : vector<8x512xf32>
    %c0_203 = arith.constant 0 : index
    %c144_204 = arith.constant 144 : index
    %292 = vector.load %arg18[%c0_203, %c144_204] : memref<8x768xf32, #tpu.memory_space<vmem>>, vector<8x512xf32>
    %c7_205 = arith.constant 7 : index
    %c0_206 = arith.constant 0 : index
    %c0_207 = arith.constant 0 : index
    %293 = vector.load %arg14[%c7_205, %c0_206, %c0_207] : memref<9x1x512xf32, #tpu.memory_space<vmem>>, vector<1x1x512xf32>
    %294 = vector.shape_cast %293 : vector<1x1x512xf32> to vector<1x512xf32>
    %295 = vector.broadcast %294 : vector<1x512xf32> to vector<8x512xf32>
    %296 = arith.mulf %295, %292 : vector<8x512xf32>
    %c7_208 = arith.constant 7 : index
    %c0_209 = arith.constant 0 : index
    %c0_210 = arith.constant 0 : index
    %297 = vector.load %arg10[%c7_208, %c0_209, %c0_210] : memref<9x8x1xf32, #tpu.memory_space<vmem>>, vector<1x8x1xf32>
    %298 = vector.shape_cast %297 : vector<1x8x1xf32> to vector<8x1xf32>
    %299 = vector.broadcast %298 : vector<8x1xf32> to vector<8x512xf32>
    %300 = arith.mulf %299, %296 : vector<8x512xf32>
    %301 = arith.addf %291, %300 : vector<8x512xf32>
    %c0_211 = arith.constant 0 : index
    %c145_212 = arith.constant 145 : index
    %302 = vector.load %arg18[%c0_211, %c145_212] : memref<8x768xf32, #tpu.memory_space<vmem>>, vector<8x512xf32>
    %c8_213 = arith.constant 8 : index
    %c0_214 = arith.constant 0 : index
    %c0_215 = arith.constant 0 : index
    %303 = vector.load %arg14[%c8_213, %c0_214, %c0_215] : memref<9x1x512xf32, #tpu.memory_space<vmem>>, vector<1x1x512xf32>
    %304 = vector.shape_cast %303 : vector<1x1x512xf32> to vector<1x512xf32>
    %305 = vector.broadcast %304 : vector<1x512xf32> to vector<8x512xf32>
    %306 = arith.mulf %305, %302 : vector<8x512xf32>
    %c8_216 = arith.constant 8 : index
    %c0_217 = arith.constant 0 : index
    %c0_218 = arith.constant 0 : index
    %307 = vector.load %arg10[%c8_216, %c0_217, %c0_218] : memref<9x8x1xf32, #tpu.memory_space<vmem>>, vector<1x8x1xf32>
    %308 = vector.shape_cast %307 : vector<1x8x1xf32> to vector<8x1xf32>
    %309 = vector.broadcast %308 : vector<8x1xf32> to vector<8x512xf32>
    %310 = arith.mulf %309, %306 : vector<8x512xf32>
    %311 = arith.addf %301, %310 : vector<8x512xf32>
    %c0_219 = arith.constant 0 : index
    %c0_220 = arith.constant 0 : index
    %312 = vector.load %arg11[%c0_219, %c0_220] : memref<8x8xf32, #tpu.memory_space<vmem>>, vector<8x8xf32>
    %cst_221 = arith.constant dense<0.000000e+00> : vector<8x512xf32>
    %313 = tpu.matmul %312, %311, %cst_221 {dimension_numbers = #tpu.dot_dimension_numbers<[1], [0], [0], [1], [0, 0, 1, 1], [], []>} : vector<8x8xf32>, vector<8x512xf32>, vector<8x512xf32> -> vector<8x512xf32>
    %cst_222 = arith.constant dense<0.000000e+00> : vector<8xf32>
    %314 = vector.multi_reduction <add>, %313, %cst_222 [1] : vector<8x512xf32> to vector<8xf32>
    %315 = vector.shape_cast %314 : vector<8xf32> to vector<8x1xf32>
    %cst_223 = arith.constant 5.120000e+02 : f32
    %316 = vector.broadcast %cst_223 : f32 to vector<8x1xf32>
    %317 = arith.divf %315, %316 : vector<8x1xf32>
    %318 = vector.broadcast %317 : vector<8x1xf32> to vector<8x512xf32>
    %319 = arith.subf %313, %318 : vector<8x512xf32>
    %320 = arith.mulf %319, %319 : vector<8x512xf32>
    %cst_224 = arith.constant dense<0.000000e+00> : vector<8xf32>
    %321 = vector.multi_reduction <add>, %320, %cst_224 [1] : vector<8x512xf32> to vector<8xf32>
    %322 = vector.shape_cast %321 : vector<8xf32> to vector<8x1xf32>
    %cst_225 = arith.constant 5.120000e+02 : f32
    %323 = vector.broadcast %cst_225 : f32 to vector<8x1xf32>
    %324 = arith.divf %322, %323 : vector<8x1xf32>
    %cst_226 = arith.constant 9.99999974E-6 : f32
    %325 = vector.broadcast %cst_226 : f32 to vector<8x1xf32>
    %326 = arith.addf %324, %325 : vector<8x1xf32>
    %327 = math.rsqrt %326 : vector<8x1xf32>
    %c0_227 = arith.constant 0 : index
    %c0_228 = arith.constant 0 : index
    %328 = vector.load %arg12[%c0_227, %c0_228] : memref<8x1xf32, #tpu.memory_space<vmem>>, vector<8x1xf32>
    %329 = arith.mulf %327, %328 : vector<8x1xf32>
    %330 = vector.broadcast %317 : vector<8x1xf32> to vector<8x512xf32>
    %331 = arith.subf %313, %330 : vector<8x512xf32>
    %332 = vector.broadcast %329 : vector<8x1xf32> to vector<8x512xf32>
    %333 = arith.mulf %331, %332 : vector<8x512xf32>
    %c0_229 = arith.constant 0 : index
    %c0_230 = arith.constant 0 : index
    %334 = vector.load %arg13[%c0_229, %c0_230] : memref<8x1xf32, #tpu.memory_space<vmem>>, vector<8x1xf32>
    %335 = vector.broadcast %334 : vector<8x1xf32> to vector<8x512xf32>
    %336 = arith.addf %333, %335 : vector<8x512xf32>
    %cst_231 = arith.constant 0.000000e+00 : f32
    %337 = vector.broadcast %cst_231 : f32 to vector<8x512xf32>
    %338 = arith.maximumf %336, %337 : vector<8x512xf32>
    %c0_232 = arith.constant 0 : index
    %c128_233 = arith.constant 128 : index
    %339 = vector.load %arg18[%c0_232, %c128_233] : memref<8x768xf32, #tpu.memory_space<vmem>>, vector<8x512xf32>
    tpu.vector_store %arg18[%c0_232, %c128_233], %338 {strides = array<i32>} : memref<8x768xf32, #tpu.memory_space<vmem>>, vector<8x512xf32>,
    %c0_234 = arith.constant 0 : index
    %c0_235 = arith.constant 0 : index
    %340 = vector.load %arg15[%c0_234, %c0_235] : memref<1x512xi32, #tpu.memory_space<vmem>>, vector<1x512xi32>
    %341 = vector.shape_cast %340 : vector<1x512xi32> to vector<1x512xi32>
    %342 = vector.broadcast %341 : vector<1x512xi32> to vector<8x512xi32>
    %c0_236 = arith.constant 0 : index
    %c129_237 = arith.constant 129 : index
    %343 = vector.load %arg18[%c0_236, %c129_237] : memref<8x768xf32, #tpu.memory_space<vmem>>, vector<8x512xf32>
    %344 = arith.cmpf ogt, %343, %338 : vector<8x512xf32>
    %c1_i32 = arith.constant 1 : i32
    %345 = vector.broadcast %c1_i32 : i32 to vector<1x512xi32>
    %346 = arith.addi %340, %345 : vector<1x512xi32>
    %347 = vector.shape_cast %346 : vector<1x512xi32> to vector<1x512xi32>
    %348 = vector.broadcast %347 : vector<1x512xi32> to vector<8x512xi32>
    %349 = arith.select %344, %348, %342 : vector<8x512xi1>, vector<8x512xi32>
    %350 = arith.select %344, %343, %338 : vector<8x512xi1>, vector<8x512xf32>
    %c0_238 = arith.constant 0 : index
    %c144_239 = arith.constant 144 : index
    %351 = vector.load %arg18[%c0_238, %c144_239] : memref<8x768xf32, #tpu.memory_space<vmem>>, vector<8x512xf32>
    %352 = arith.cmpf ogt, %351, %350 : vector<8x512xf32>
    %c16_i32 = arith.constant 16 : i32
    %353 = vector.broadcast %c16_i32 : i32 to vector<1x512xi32>
    %354 = arith.addi %340, %353 : vector<1x512xi32>
    %355 = vector.shape_cast %354 : vector<1x512xi32> to vector<1x512xi32>
    %356 = vector.broadcast %355 : vector<1x512xi32> to vector<8x512xi32>
    %357 = arith.select %352, %356, %349 : vector<8x512xi1>, vector<8x512xi32>
    %358 = arith.select %352, %351, %350 : vector<8x512xi1>, vector<8x512xf32>
    %c0_240 = arith.constant 0 : index
    %c145_241 = arith.constant 145 : index
    %359 = vector.load %arg18[%c0_240, %c145_241] : memref<8x768xf32, #tpu.memory_space<vmem>>, vector<8x512xf32>
    %360 = arith.cmpf ogt, %359, %358 : vector<8x512xf32>
    %c17_i32 = arith.constant 17 : i32
    %361 = vector.broadcast %c17_i32 : i32 to vector<1x512xi32>
    %362 = arith.addi %340, %361 : vector<1x512xi32>
    %363 = vector.shape_cast %362 : vector<1x512xi32> to vector<1x512xi32>
    %364 = vector.broadcast %363 : vector<1x512xi32> to vector<8x512xi32>
    %365 = arith.select %360, %364, %357 : vector<8x512xi1>, vector<8x512xi32>
    %366 = arith.select %360, %359, %358 : vector<8x512xi1>, vector<8x512xf32>
    %c0_242 = arith.constant 0 : index
    %c0_243 = arith.constant 0 : index
    %367 = vector.load %arg16[%c0_242, %c0_243] : memref<8x512xf32, #tpu.memory_space<vmem>>, vector<8x512xf32>
    tpu.vector_store %arg16[%c0_242, %c0_243], %366 {strides = array<i32>} : memref<8x512xf32, #tpu.memory_space<vmem>>, vector<8x512xf32>,
    %c0_244 = arith.constant 0 : index
    %c0_245 = arith.constant 0 : index
    %368 = vector.load %arg17[%c0_244, %c0_245] : memref<8x512xi32, #tpu.memory_space<vmem>>, vector<8x512xi32>
    tpu.vector_store %arg17[%c0_244, %c0_245], %365 {strides = array<i32>} : memref<8x512xi32, #tpu.memory_space<vmem>>, vector<8x512xi32>,
    return
  }
  func.func @transform_0(%arg0: i32) -> (i32, i32) {
    %c0_i32 = arith.constant 0 : i32
    %c0_i32_0 = arith.constant 0 : i32
    %c0_i32_1 = arith.constant 0 : i32
    return %c0_i32, %c0_i32_0 : i32, i32
  }
  func.func @transform_1(%arg0: i32) -> (i32, i32, i32) {
    %c0_i32 = arith.constant 0 : i32
    %c0_i32_0 = arith.constant 0 : i32
    %c0_i32_1 = arith.constant 0 : i32
    %c0_i32_2 = arith.constant 0 : i32
    return %c0_i32, %c0_i32_0, %c0_i32_1 : i32, i32, i32
  }
  func.func @transform_2(%arg0: i32) -> (i32, i32) {
    %c0_i32 = arith.constant 0 : i32
    %c0_i32_0 = arith.constant 0 : i32
    %c0_i32_1 = arith.constant 0 : i32
    return %c0_i32, %c0_i32_0 : i32, i32
  }
  func.func @transform_3(%arg0: i32) -> (i32, i32) {
    %c0_i32 = arith.constant 0 : i32
    %c0_i32_0 = arith.constant 0 : i32
    %c0_i32_1 = arith.constant 0 : i32
    return %c0_i32, %c0_i32_0 : i32, i32
  }
  func.func @transform_4(%arg0: i32) -> (i32, i32) {
    %c0_i32 = arith.constant 0 : i32
    %c0_i32_0 = arith.constant 0 : i32
    %c0_i32_1 = arith.constant 0 : i32
    return %c0_i32, %c0_i32_0 : i32, i32
  }
  func.func @transform_5(%arg0: i32) -> (i32, i32, i32) {
    %c0_i32 = arith.constant 0 : i32
    %c0_i32_0 = arith.constant 0 : i32
    %c0_i32_1 = arith.constant 0 : i32
    %c0_i32_2 = arith.constant 0 : i32
    return %c0_i32, %c0_i32_0, %c0_i32_1 : i32, i32, i32
  }
  func.func @transform_6(%arg0: i32) -> (i32, i32) {
    %c0_i32 = arith.constant 0 : i32
    %c0_i32_0 = arith.constant 0 : i32
    %c0_i32_1 = arith.constant 0 : i32
    return %c0_i32, %c0_i32_0 : i32, i32
  }
  func.func @transform_7(%arg0: i32) -> (i32, i32) {
    %c0_i32 = arith.constant 0 : i32
    %c0_i32_0 = arith.constant 0 : i32
    %c0_i32_1 = arith.constant 0 : i32
    return %c0_i32, %c0_i32_0 : i32, i32
  }
  func.func @transform_8(%arg0: i32) -> (i32, i32) {
    %c0_i32 = arith.constant 0 : i32
    %c0_i32_0 = arith.constant 0 : i32
    %c0_i32_1 = arith.constant 0 : i32
    return %c0_i32, %c0_i32_0 : i32, i32
  }
  func.func @transform_9(%arg0: i32) -> (i32, i32, i32) {
    %c0_i32 = arith.constant 0 : i32
    %c0_i32_0 = arith.constant 0 : i32
    %c0_i32_1 = arith.constant 0 : i32
    %c0_i32_2 = arith.constant 0 : i32
    return %c0_i32, %c0_i32_0, %c0_i32_1 : i32, i32, i32
  }
  func.func @transform_10(%arg0: i32) -> (i32, i32) {
    %c0_i32 = arith.constant 0 : i32
    %c0_i32_0 = arith.constant 0 : i32
    %c0_i32_1 = arith.constant 0 : i32
    return %c0_i32, %c0_i32_0 : i32, i32
  }
  func.func @transform_11(%arg0: i32) -> (i32, i32) {
    %c0_i32 = arith.constant 0 : i32
    %c0_i32_0 = arith.constant 0 : i32
    %c0_i32_1 = arith.constant 0 : i32
    return %c0_i32, %c0_i32_0 : i32, i32
  }
  func.func @transform_12(%arg0: i32) -> (i32, i32) {
    %c0_i32 = arith.constant 0 : i32
    %c0_i32_0 = arith.constant 0 : i32
    %c0_i32_1 = arith.constant 0 : i32
    return %c0_i32, %c0_i32_0 : i32, i32
  }
  func.func @transform_13(%arg0: i32) -> (i32, i32, i32) {
    %c0_i32 = arith.constant 0 : i32
    %c0_i32_0 = arith.constant 0 : i32
    %c0_i32_1 = arith.constant 0 : i32
    %c0_i32_2 = arith.constant 0 : i32
    return %c0_i32, %c0_i32_0, %c0_i32_1 : i32, i32, i32
  }
  func.func @transform_14(%arg0: i32) -> (i32, i32) {
    %c0_i32 = arith.constant 0 : i32
    %c0_i32_0 = arith.constant 0 : i32
    %c0_i32_1 = arith.constant 0 : i32
    return %c0_i32, %c0_i32_0 : i32, i32
  }
  func.func @transform_15(%arg0: i32) -> (i32, i32) {
    %c0_i32 = arith.constant 0 : i32
    %c0_i32_0 = arith.constant 0 : i32
    %c0_i32_1 = arith.constant 0 : i32
    return %c0_i32, %c0_i32_0 : i32, i32
  }
  func.func @transform_16(%arg0: i32) -> (i32, i32) {
    %c0_i32 = arith.constant 0 : i32
    %c0_i32_0 = arith.constant 0 : i32
    %c0_i32_1 = arith.constant 0 : i32
    return %c0_i32, %c0_i32_0 : i32, i32
  }
}

</mosaic_0001>

<llo_original>
// kernel: downdsconv3_forward.1
$region0: #{downdsconv3_forward.1}
  #allocation0 [shape = 'u32[]', space=smem, size = 0x4, offset = 0x4, fixed_abs, tag = 'smem constant byte address 0x4 - core index']
  #allocation1 [shape = 'u32[144,128]{1,0:T(1,128)}', space=vmem, size = 0x12000, scoped, tag = 'internal scratch']
  #allocation2 [shape = 'f32[8,768]{1,0:T(8,128)}', space=vmem, size = 0x6000, scoped, tag = 'scratch operand']
  %s0 = inlined_call_operand.vmem [shape: f32[4,512], index: 0, kind: input, shape index: {}]
  %s1 = inlined_call_operand.vmem [shape: f32[9,4,1], index: 1, kind: input, shape index: {}]
  %s2 = inlined_call_operand.vmem [shape: f32[8,4], index: 2, kind: input, shape index: {}]
  %s3 = inlined_call_operand.vmem [shape: f32[8,1], index: 3, kind: input, shape index: {}]
  %s4 = inlined_call_operand.vmem [shape: f32[8,1], index: 4, kind: input, shape index: {}]
  %s5 = inlined_call_operand.vmem [shape: f32[9,8,1], index: 5, kind: input, shape index: {}]
  %s6 = inlined_call_operand.vmem [shape: f32[8,8], index: 6, kind: input, shape index: {}]
  %s7 = inlined_call_operand.vmem [shape: f32[8,1], index: 7, kind: input, shape index: {}]
  %s8 = inlined_call_operand.vmem [shape: f32[8,1], index: 8, kind: input, shape index: {}]
  %s9 = inlined_call_operand.vmem [shape: f32[9,8,1], index: 9, kind: input, shape index: {}]
  %s10 = inlined_call_operand.vmem [shape: f32[8,8], index: 10, kind: input, shape index: {}]
  %s11 = inlined_call_operand.vmem [shape: f32[8,1], index: 11, kind: input, shape index: {}]
  %s12 = inlined_call_operand.vmem [shape: f32[8,1], index: 12, kind: input, shape index: {}]
  %s13 = inlined_call_operand.vmem [shape: f32[9,1,512], index: 13, kind: input, shape index: {}]
  %s14 = inlined_call_operand.vmem [shape: s32[1,512], index: 14, kind: input, shape index: {}]
  %s15 = inlined_call_operand.vmem [shape: f32[8,512], index: 15, kind: output, shape index: {0}]
  %s16 = inlined_call_operand.vmem [shape: s32[8,512], index: 16, kind: output, shape index: {1}]
  %17 = xla_tuple %s15, %s16
  %s18 = sld [smem:[#allocation0]]
  $region78: #{downdsconv3_forward.1} parent=0
    _
  %s20 = ssub.s32 1, %s18
  %s21 = scalar_select 0, %s20, %s18
  // Predicated region
  $region2: #{downdsconv3_forward.1} parent=0 // pred_check
    _
  $region3: #{downdsconv3_forward.1} parent=0 // pred_check_branch
    %23 = sbr.rel (0) target = $region5
  $region4: #{downdsconv3_forward.1} parent=0 // pred_region
    _
  $region5: #{downdsconv3_forward.1} parent=0 // pred_fallthru
    _
  // Predicated region
  $region6: #{downdsconv3_forward.1} parent=0 // pred_check
    _
  $region7: #{downdsconv3_forward.1} parent=0 // pred_check_branch
    %25 = sbr.rel (0) target = $region9
  $region8: #{downdsconv3_forward.1} parent=0 // pred_region
    _
  $region9: #{downdsconv3_forward.1} parent=0 // pred_fallthru
    _
  // Predicated region
  $region10: #{downdsconv3_forward.1} parent=0 // pred_check
    _
  $region11: #{downdsconv3_forward.1} parent=0 // pred_check_branch
    %27 = sbr.rel (0) target = $region13
  $region12: #{downdsconv3_forward.1} parent=0 // pred_region
    _
  $region13: #{downdsconv3_forward.1} parent=0 // pred_fallthru
    _
  // Predicated region
  $region14: #{downdsconv3_forward.1} parent=0 // pred_check
    _
  $region15: #{downdsconv3_forward.1} parent=0 // pred_check_branch
    %29 = sbr.rel (0) target = $region17
  $region16: #{downdsconv3_forward.1} parent=0 // pred_region
    _
  $region17: #{downdsconv3_forward.1} parent=0 // pred_fallthru
    _
  // Predicated region
  $region18: #{downdsconv3_forward.1} parent=0 // pred_check
    _
  $region19: #{downdsconv3_forward.1} parent=0 // pred_check_branch
    %31 = sbr.rel (0) target = $region21
  $region20: #{downdsconv3_forward.1} parent=0 // pred_region
    _
  $region21: #{downdsconv3_forward.1} parent=0 // pred_fallthru
    _
  // Predicated region
  $region22: #{downdsconv3_forward.1} parent=0 // pred_check
    _
  $region23: #{downdsconv3_forward.1} parent=0 // pred_check_branch
    %33 = sbr.rel (0) target = $region25
  $region24: #{downdsconv3_forward.1} parent=0 // pred_region
    _
  $region25: #{downdsconv3_forward.1} parent=0 // pred_fallthru
    _
  // Predicated region
  $region26: #{downdsconv3_forward.1} parent=0 // pred_check
    _
  $region27: #{downdsconv3_forward.1} parent=0 // pred_check_branch
    %35 = sbr.rel (0) target = $region29
  $region28: #{downdsconv3_forward.1} parent=0 // pred_region
    _
  $region29: #{downdsconv3_forward.1} parent=0 // pred_fallthru
    _
  // Predicated region
  $region30: #{downdsconv3_forward.1} parent=0 // pred_check
    _
  $region31: #{downdsconv3_forward.1} parent=0 // pred_check_branch
    %37 = sbr.rel (0) target = $region33
  $region32: #{downdsconv3_forward.1} parent=0 // pred_region
    _
  $region33: #{downdsconv3_forward.1} parent=0 // pred_fallthru
    _
  // Predicated region
  $region34: #{downdsconv3_forward.1} parent=0 // pred_check
    _
  $region35: #{downdsconv3_forward.1} parent=0 // pred_check_branch
    %39 = sbr.rel (0) target = $region37
  $region36: #{downdsconv3_forward.1} parent=0 // pred_region
    _
  $region37: #{downdsconv3_forward.1} parent=0 // pred_fallthru
    _
  // Predicated region
  $region38: #{downdsconv3_forward.1} parent=0 // pred_check
    _
  $region39: #{downdsconv3_forward.1} parent=0 // pred_check_branch
    %41 = sbr.rel (0) target = $region41
  $region40: #{downdsconv3_forward.1} parent=0 // pred_region
    _
  $region41: #{downdsconv3_forward.1} parent=0 // pred_fallthru
    _
  // Predicated region
  $region42: #{downdsconv3_forward.1} parent=0 // pred_check
    _
  $region43: #{downdsconv3_forward.1} parent=0 // pred_check_branch
    %43 = sbr.rel (0) target = $region45
  $region44: #{downdsconv3_forward.1} parent=0 // pred_region
    _
  $region45: #{downdsconv3_forward.1} parent=0 // pred_fallthru
    _
  // Predicated region
  $region46: #{downdsconv3_forward.1} parent=0 // pred_check
    _
  $region47: #{downdsconv3_forward.1} parent=0 // pred_check_branch
    %45 = sbr.rel (0) target = $region49
  $region48: #{downdsconv3_forward.1} parent=0 // pred_region
    _
  $region49: #{downdsconv3_forward.1} parent=0 // pred_fallthru
    _
  // Predicated region
  $region50: #{downdsconv3_forward.1} parent=0 // pred_check
    _
  $region51: #{downdsconv3_forward.1} parent=0 // pred_check_branch
    %47 = sbr.rel (0) target = $region53
  $region52: #{downdsconv3_forward.1} parent=0 // pred_region
    _
  $region53: #{downdsconv3_forward.1} parent=0 // pred_fallthru
    _
  // Predicated region
  $region54: #{downdsconv3_forward.1} parent=0 // pred_check
    _
  $region55: #{downdsconv3_forward.1} parent=0 // pred_check_branch
    %49 = sbr.rel (0) target = $region57
  $region56: #{downdsconv3_forward.1} parent=0 // pred_region
    _
  $region57: #{downdsconv3_forward.1} parent=0 // pred_fallthru
    _
  // Predicated region
  $region58: #{downdsconv3_forward.1} parent=0 // pred_check
    _
  $region59: #{downdsconv3_forward.1} parent=0 // pred_check_branch
    %51 = sbr.rel (0) target = $region61
  $region60: #{downdsconv3_forward.1} parent=0 // pred_region
    _
  $region61: #{downdsconv3_forward.1} parent=0 // pred_fallthru
    _
  %52 = vst [vmem:[#allocation2] sm:$0xff] 0.0
  %53 = vst [vmem:[#allocation2 + $0x8] sm:$0xff] 0.0
  %54 = vst [vmem:[#allocation2 + $0x10] sm:$0xff] 0.0
  %55 = vst [vmem:[#allocation2 + $0x18] sm:$0xff] 0.0
  %56 = vst [vmem:[#allocation2 + $0x20] sm:$0xff] 0.0
  %57 = vst [vmem:[#allocation2 + $0x28] sm:$0xff] 0.0
  %v58 = vld [vmem:[%s0] sm:$0xff]
  %v59 = vld [vmem:[%s0 + $0x8] sm:$0xff]
  %v62 = vcombine.high %v58, %v58
  %v63 = vcombine.high %v59, %v59
  %66 = vst [vmem:[#allocation2 + $0x8] sm:$0xf] %v58
  %67 = vst [vmem:[#allocation2 + $0x10] sm:$0xf] %v62
  %68 = vst [vmem:[#allocation2 + $0x18] sm:$0xf] %v59
  %69 = vst [vmem:[#allocation2 + $0x20] sm:$0xf] %v63
  %v70 = vld [vmem:[#allocation2] sm:$0xf]
  %v71 = vld [vmem:[#allocation2 + $0x8] sm:$0xf]
  %v72 = vld [vmem:[#allocation2 + $0x10] sm:$0xf]
  %v73 = vld [vmem:[#allocation2 + $0x18] sm:$0xf]
  %v74 = vld [vmem:[#allocation2 + $0x20] sm:$0xf]
  %v75 = vld [vmem:[%s13] sm:$0xf]
  %v77 = vlaneseq
  %v78 = vshrl.u32 %v77, 7
  %v79 = vsub.s32 0, %v78
  %v80 = vrot.slane %v75, %v79
  %v81 = vlaneseq
  %v82 = vshrl.u32 %v81, 7
  %v83 = vsub.s32 1, %v82
  %v84 = vrot.slane %v75, %v83
  %v85 = vlaneseq
  %v86 = vshrl.u32 %v85, 7
  %v87 = vsub.s32 2, %v86
  %v88 = vrot.slane %v75, %v87
  %v89 = vlaneseq
  %v90 = vshrl.u32 %v89, 7
  %v91 = vsub.s32 3, %v90
  %v92 = vrot.slane %v75, %v91
  %102 = vrot.lane.b32.xlu0 %v70, 17
  %v103 = vpop.permute.xlu0 %102
  %104 = vrot.lane.b32.xlu0 %v71, 17
  %v105 = vpop.permute.xlu0 %104
  %106 = vrot.lane.b32.xlu0 %v72, 17
  %v107 = vpop.permute.xlu0 %106
  %108 = vrot.lane.b32.xlu0 %v73, 17
  %v109 = vpop.permute.xlu0 %108
  %110 = vrot.lane.b32.xlu0 %v74, 17
  %v111 = vpop.permute.xlu0 %110
  %vm112 = vcmask 138240
  %v113 = vsel %vm112, %v103, %v105
  %v114 = vsel %vm112, %v105, %v107
  %v115 = vsel %vm112, %v107, %v109
  %v116 = vsel %vm112, %v109, %v111
  %v121 = vmul.f32 %v80, %v113
  %v122 = vmul.f32 %v84, %v114
  %v123 = vmul.f32 %v88, %v115
  %v124 = vmul.f32 %v92, %v116
  %v125 = vld [vmem:[%s1] sm:$0xf]
  %127 = vset.pattern.permute.xlu0 0
  %128 = vperm.xlu0 %127, %v125
  %v129 = vpop.permute.xlu0 %128
  %v131 = vmul.f32 %v129, %v121
  %v132 = vmul.f32 %v129, %v122
  %v133 = vmul.f32 %v129, %v123
  %v134 = vmul.f32 %v129, %v124
  %s135 = scalar_lea.vmem %s13, 4
  %v136 = vld [vmem:[%s135] sm:$0xf]
  %v138 = vlaneseq
  %v139 = vshrl.u32 %v138, 7
  %v140 = vsub.s32 0, %v139
  %v141 = vrot.slane %v136, %v140
  %v142 = vlaneseq
  %v143 = vshrl.u32 %v142, 7
  %v144 = vsub.s32 1, %v143
  %v145 = vrot.slane %v136, %v144
  %v146 = vlaneseq
  %v147 = vshrl.u32 %v146, 7
  %v148 = vsub.s32 2, %v147
  %v149 = vrot.slane %v136, %v148
  %v150 = vlaneseq
  %v151 = vshrl.u32 %v150, 7
  %v152 = vsub.s32 3, %v151
  %v153 = vrot.slane %v136, %v152
  %158 = vrot.lane.b32.xlu0 %v70, 16
  %v159 = vpop.permute.xlu0 %158
  %160 = vrot.lane.b32.xlu0 %v71, 16
  %v161 = vpop.permute.xlu0 %160
  %162 = vrot.lane.b32.xlu0 %v72, 16
  %v163 = vpop.permute.xlu0 %162
  %164 = vrot.lane.b32.xlu0 %v73, 16
  %v165 = vpop.permute.xlu0 %164
  %166 = vrot.lane.b32.xlu0 %v74, 16
  %v167 = vpop.permute.xlu0 %166
  %vm168 = vcmask 130048
  %v169 = vsel %vm168, %v159, %v161
  %v170 = vsel %vm168, %v161, %v163
  %v171 = vsel %vm168, %v163, %v165
  %v172 = vsel %vm168, %v165, %v167
  %v177 = vmul.f32 %v141, %v169
  %v178 = vmul.f32 %v145, %v170
  %v179 = vmul.f32 %v149, %v171
  %v180 = vmul.f32 %v153, %v172
  %s181 = scalar_lea.vmem %s1, 4
  %v182 = vld [vmem:[%s181] sm:$0xf]
  %184 = vset.pattern.permute.xlu0 0
  %185 = vperm.xlu0 %184, %v182
  %v186 = vpop.permute.xlu0 %185
  %v188 = vmul.f32 %v186, %v177
  %v189 = vmul.f32 %v186, %v178
  %v190 = vmul.f32 %v186, %v179
  %v191 = vmul.f32 %v186, %v180
  %v192 = vadd.f32 %v131, %v188
  %v193 = vadd.f32 %v132, %v189
  %v194 = vadd.f32 %v133, %v190
  %v195 = vadd.f32 %v134, %v191
  %s196 = scalar_lea.vmem %s13, 8
  %v197 = vld [vmem:[%s196] sm:$0xf]
  %v199 = vlaneseq
  %v200 = vshrl.u32 %v199, 7
  %v201 = vsub.s32 0, %v200
  %v202 = vrot.slane %v197, %v201
  %v203 = vlaneseq
  %v204 = vshrl.u32 %v203, 7
  %v205 = vsub.s32 1, %v204
  %v206 = vrot.slane %v197, %v205
  %v207 = vlaneseq
  %v208 = vshrl.u32 %v207, 7
  %v209 = vsub.s32 2, %v208
  %v210 = vrot.slane %v197, %v209
  %v211 = vlaneseq
  %v212 = vshrl.u32 %v211, 7
  %v213 = vsub.s32 3, %v212
  %v214 = vrot.slane %v197, %v213
  %219 = vrot.lane.b32.xlu0 %v70, 15
  %v220 = vpop.permute.xlu0 %219
  %221 = vrot.lane.b32.xlu0 %v71, 15
  %v222 = vpop.permute.xlu0 %221
  %223 = vrot.lane.b32.xlu0 %v72, 15
  %v224 = vpop.permute.xlu0 %223
  %225 = vrot.lane.b32.xlu0 %v73, 15
  %v226 = vpop.permute.xlu0 %225
  %227 = vrot.lane.b32.xlu0 %v74, 15
  %v228 = vpop.permute.xlu0 %227
  %vm229 = vcmask 121856
  %v230 = vsel %vm229, %v220, %v222
  %v231 = vsel %vm229, %v222, %v224
  %v232 = vsel %vm229, %v224, %v226
  %v233 = vsel %vm229, %v226, %v228
  %v238 = vmul.f32 %v202, %v230
  %v239 = vmul.f32 %v206, %v231
  %v240 = vmul.f32 %v210, %v232
  %v241 = vmul.f32 %v214, %v233
  %s242 = scalar_lea.vmem %s1, 8
  %v243 = vld [vmem:[%s242] sm:$0xf]
  %245 = vset.pattern.permute.xlu0 0
  %246 = vperm.xlu0 %245, %v243
  %v247 = vpop.permute.xlu0 %246
  %v249 = vmul.f32 %v247, %v238
  %v250 = vmul.f32 %v247, %v239
  %v251 = vmul.f32 %v247, %v240
  %v252 = vmul.f32 %v247, %v241
  %v253 = vadd.f32 %v192, %v249
  %v254 = vadd.f32 %v193, %v250
  %v255 = vadd.f32 %v194, %v251
  %v256 = vadd.f32 %v195, %v252
  %s257 = scalar_lea.vmem %s13, 12
  %v258 = vld [vmem:[%s257] sm:$0xf]
  %v260 = vlaneseq
  %v261 = vshrl.u32 %v260, 7
  %v262 = vsub.s32 0, %v261
  %v263 = vrot.slane %v258, %v262
  %v264 = vlaneseq
  %v265 = vshrl.u32 %v264, 7
  %v266 = vsub.s32 1, %v265
  %v267 = vrot.slane %v258, %v266
  %v268 = vlaneseq
  %v269 = vshrl.u32 %v268, 7
  %v270 = vsub.s32 2, %v269
  %v271 = vrot.slane %v258, %v270
  %v272 = vlaneseq
  %v273 = vshrl.u32 %v272, 7
  %v274 = vsub.s32 3, %v273
  %v275 = vrot.slane %v258, %v274
  %280 = vrot.lane.b32.xlu0 %v70, 1
  %v281 = vpop.permute.xlu0 %280
  %282 = vrot.lane.b32.xlu0 %v71, 1
  %v283 = vpop.permute.xlu0 %282
  %284 = vrot.lane.b32.xlu0 %v72, 1
  %v285 = vpop.permute.xlu0 %284
  %286 = vrot.lane.b32.xlu0 %v73, 1
  %v287 = vpop.permute.xlu0 %286
  %288 = vrot.lane.b32.xlu0 %v74, 1
  %v289 = vpop.permute.xlu0 %288
  %vm290 = vcmask 7168
  %v291 = vsel %vm290, %v281, %v283
  %v292 = vsel %vm290, %v283, %v285
  %v293 = vsel %vm290, %v285, %v287
  %v294 = vsel %vm290, %v287, %v289
  %v299 = vmul.f32 %v263, %v291
  %v300 = vmul.f32 %v267, %v292
  %v301 = vmul.f32 %v271, %v293
  %v302 = vmul.f32 %v275, %v294
  %s303 = scalar_lea.vmem %s1, 12
  %v304 = vld [vmem:[%s303] sm:$0xf]
  %306 = vset.pattern.permute.xlu0 0
  %307 = vperm.xlu0 %306, %v304
  %v308 = vpop.permute.xlu0 %307
  %v310 = vmul.f32 %v308, %v299
  %v311 = vmul.f32 %v308, %v300
  %v312 = vmul.f32 %v308, %v301
  %v313 = vmul.f32 %v308, %v302
  %v314 = vadd.f32 %v253, %v310
  %v315 = vadd.f32 %v254, %v311
  %v316 = vadd.f32 %v255, %v312
  %v317 = vadd.f32 %v256, %v313
  %s318 = scalar_lea.vmem %s1, 16
  %v319 = vld [vmem:[%s318] sm:$0xf]
  %321 = vset.pattern.permute.xlu0 0
  %322 = vperm.xlu0 %321, %v319
  %v323 = vpop.permute.xlu0 %322
  %v325 = vmul.f32 %v323, %v58
  %v326 = vmul.f32 %v323, %v62
  %v327 = vmul.f32 %v323, %v59
  %v328 = vmul.f32 %v323, %v63
  %v329 = vadd.f32 %v314, %v325
  %v330 = vadd.f32 %v315, %v326
  %v331 = vadd.f32 %v316, %v327
  %v332 = vadd.f32 %v317, %v328
  %v333 = vld [vmem:[#allocation2 + $0x8] sm:$0xf]
  %v334 = vld [vmem:[#allocation2 + $0x10] sm:$0xf]
  %v335 = vld [vmem:[#allocation2 + $0x18] sm:$0xf]
  %v336 = vld [vmem:[#allocation2 + $0x20] sm:$0xf]
  %v337 = vld [vmem:[#allocation2 + $0x28] sm:$0xf]
  %s338 = scalar_lea.vmem %s13, 20
  %v339 = vld [vmem:[%s338] sm:$0xf]
  %v341 = vlaneseq
  %v342 = vshrl.u32 %v341, 7
  %v343 = vsub.s32 0, %v342
  %v344 = vrot.slane %v339, %v343
  %v345 = vlaneseq
  %v346 = vshrl.u32 %v345, 7
  %v347 = vsub.s32 1, %v346
  %v348 = vrot.slane %v339, %v347
  %v349 = vlaneseq
  %v350 = vshrl.u32 %v349, 7
  %v351 = vsub.s32 2, %v350
  %v352 = vrot.slane %v339, %v351
  %v353 = vlaneseq
  %v354 = vshrl.u32 %v353, 7
  %v355 = vsub.s32 3, %v354
  %v356 = vrot.slane %v339, %v355
  %366 = vrot.lane.b32.xlu0 %v333, 127
  %v367 = vpop.permute.xlu0 %366
  %368 = vrot.lane.b32.xlu0 %v334, 127
  %v369 = vpop.permute.xlu0 %368
  %370 = vrot.lane.b32.xlu0 %v335, 127
  %v371 = vpop.permute.xlu0 %370
  %372 = vrot.lane.b32.xlu0 %v336, 127
  %v373 = vpop.permute.xlu0 %372
  %374 = vrot.lane.b32.xlu0 %v337, 127
  %v375 = vpop.permute.xlu0 %374
  %vm376 = vcmask 1039360
  %v377 = vsel %vm376, %v367, %v369
  %v378 = vsel %vm376, %v369, %v371
  %v379 = vsel %vm376, %v371, %v373
  %v380 = vsel %vm376, %v373, %v375
  %v385 = vmul.f32 %v344, %v377
  %v386 = vmul.f32 %v348, %v378
  %v387 = vmul.f32 %v352, %v379
  %v388 = vmul.f32 %v356, %v380
  %s389 = scalar_lea.vmem %s1, 20
  %v390 = vld [vmem:[%s389] sm:$0xf]
  %392 = vset.pattern.permute.xlu0 0
  %393 = vperm.xlu0 %392, %v390
  %v394 = vpop.permute.xlu0 %393
  %v396 = vmul.f32 %v394, %v385
  %v397 = vmul.f32 %v394, %v386
  %v398 = vmul.f32 %v394, %v387
  %v399 = vmul.f32 %v394, %v388
  %v400 = vadd.f32 %v329, %v396
  %v401 = vadd.f32 %v330, %v397
  %v402 = vadd.f32 %v331, %v398
  %v403 = vadd.f32 %v332, %v399
  %s404 = scalar_lea.vmem %s13, 24
  %v405 = vld [vmem:[%s404] sm:$0xf]
  %v407 = vlaneseq
  %v408 = vshrl.u32 %v407, 7
  %v409 = vsub.s32 0, %v408
  %v410 = vrot.slane %v405, %v409
  %v411 = vlaneseq
  %v412 = vshrl.u32 %v411, 7
  %v413 = vsub.s32 1, %v412
  %v414 = vrot.slane %v405, %v413
  %v415 = vlaneseq
  %v416 = vshrl.u32 %v415, 7
  %v417 = vsub.s32 2, %v416
  %v418 = vrot.slane %v405, %v417
  %v419 = vlaneseq
  %v420 = vshrl.u32 %v419, 7
  %v421 = vsub.s32 3, %v420
  %v422 = vrot.slane %v405, %v421
  %427 = vrot.lane.b32.xlu0 %v333, 113
  %v428 = vpop.permute.xlu0 %427
  %429 = vrot.lane.b32.xlu0 %v334, 113
  %v430 = vpop.permute.xlu0 %429
  %431 = vrot.lane.b32.xlu0 %v335, 113
  %v432 = vpop.permute.xlu0 %431
  %433 = vrot.lane.b32.xlu0 %v336, 113
  %v434 = vpop.permute.xlu0 %433
  %435 = vrot.lane.b32.xlu0 %v337, 113
  %v436 = vpop.permute.xlu0 %435
  %vm437 = vcmask 924672
  %v438 = vsel %vm437, %v428, %v430
  %v439 = vsel %vm437, %v430, %v432
  %v440 = vsel %vm437, %v432, %v434
  %v441 = vsel %vm437, %v434, %v436
  %v446 = vmul.f32 %v410, %v438
  %v447 = vmul.f32 %v414, %v439
  %v448 = vmul.f32 %v418, %v440
  %v449 = vmul.f32 %v422, %v441
  %s450 = scalar_lea.vmem %s1, 24
  %v451 = vld [vmem:[%s450] sm:$0xf]
  %453 = vset.pattern.permute.xlu0 0
  %454 = vperm.xlu0 %453, %v451
  %v455 = vpop.permute.xlu0 %454
  %v457 = vmul.f32 %v455, %v446
  %v458 = vmul.f32 %v455, %v447
  %v459 = vmul.f32 %v455, %v448
  %v460 = vmul.f32 %v455, %v449
  %v461 = vadd.f32 %v400, %v457
  %v462 = vadd.f32 %v401, %v458
  %v463 = vadd.f32 %v402, %v459
  %v464 = vadd.f32 %v403, %v460
  %s465 = scalar_lea.vmem %s13, 28
  %v466 = vld [vmem:[%s465] sm:$0xf]
  %v468 = vlaneseq
  %v469 = vshrl.u32 %v468, 7
  %v470 = vsub.s32 0, %v469
  %v471 = vrot.slane %v466, %v470
  %v472 = vlaneseq
  %v473 = vshrl.u32 %v472, 7
  %v474 = vsub.s32 1, %v473
  %v475 = vrot.slane %v466, %v474
  %v476 = vlaneseq
  %v477 = vshrl.u32 %v476, 7
  %v478 = vsub.s32 2, %v477
  %v479 = vrot.slane %v466, %v478
  %v480 = vlaneseq
  %v481 = vshrl.u32 %v480, 7
  %v482 = vsub.s32 3, %v481
  %v483 = vrot.slane %v466, %v482
  %488 = vrot.lane.b32.xlu0 %v333, 112
  %v489 = vpop.permute.xlu0 %488
  %490 = vrot.lane.b32.xlu0 %v334, 112
  %v491 = vpop.permute.xlu0 %490
  %492 = vrot.lane.b32.xlu0 %v335, 112
  %v493 = vpop.permute.xlu0 %492
  %494 = vrot.lane.b32.xlu0 %v336, 112
  %v495 = vpop.permute.xlu0 %494
  %496 = vrot.lane.b32.xlu0 %v337, 112
  %v497 = vpop.permute.xlu0 %496
  %vm498 = vcmask 916480
  %v499 = vsel %vm498, %v489, %v491
  %v500 = vsel %vm498, %v491, %v493
  %v501 = vsel %vm498, %v493, %v495
  %v502 = vsel %vm498, %v495, %v497
  %v507 = vmul.f32 %v471, %v499
  %v508 = vmul.f32 %v475, %v500
  %v509 = vmul.f32 %v479, %v501
  %v510 = vmul.f32 %v483, %v502
  %s511 = scalar_lea.vmem %s1, 28
  %v512 = vld [vmem:[%s511] sm:$0xf]
  %514 = vset.pattern.permute.xlu0 0
  %515 = vperm.xlu0 %514, %v512
  %v516 = vpop.permute.xlu0 %515
  %v518 = vmul.f32 %v516, %v507
  %v519 = vmul.f32 %v516, %v508
  %v520 = vmul.f32 %v516, %v509
  %v521 = vmul.f32 %v516, %v510
  %v522 = vadd.f32 %v461, %v518
  %v523 = vadd.f32 %v462, %v519
  %v524 = vadd.f32 %v463, %v520
  %v525 = vadd.f32 %v464, %v521
  %s526 = scalar_lea.vmem %s13, 32
  %v527 = vld [vmem:[%s526] sm:$0xf]
  %v529 = vlaneseq
  %v530 = vshrl.u32 %v529, 7
  %v531 = vsub.s32 0, %v530
  %v532 = vrot.slane %v527, %v531
  %v533 = vlaneseq
  %v534 = vshrl.u32 %v533, 7
  %v535 = vsub.s32 1, %v534
  %v536 = vrot.slane %v527, %v535
  %v537 = vlaneseq
  %v538 = vshrl.u32 %v537, 7
  %v539 = vsub.s32 2, %v538
  %v540 = vrot.slane %v527, %v539
  %v541 = vlaneseq
  %v542 = vshrl.u32 %v541, 7
  %v543 = vsub.s32 3, %v542
  %v544 = vrot.slane %v527, %v543
  %549 = vrot.lane.b32.xlu0 %v333, 111
  %v550 = vpop.permute.xlu0 %549
  %551 = vrot.lane.b32.xlu0 %v334, 111
  %v552 = vpop.permute.xlu0 %551
  %553 = vrot.lane.b32.xlu0 %v335, 111
  %v554 = vpop.permute.xlu0 %553
  %555 = vrot.lane.b32.xlu0 %v336, 111
  %v556 = vpop.permute.xlu0 %555
  %557 = vrot.lane.b32.xlu0 %v337, 111
  %v558 = vpop.permute.xlu0 %557
  %vm559 = vcmask 908288
  %v560 = vsel %vm559, %v550, %v552
  %v561 = vsel %vm559, %v552, %v554
  %v562 = vsel %vm559, %v554, %v556
  %v563 = vsel %vm559, %v556, %v558
  %v568 = vmul.f32 %v532, %v560
  %v569 = vmul.f32 %v536, %v561
  %v570 = vmul.f32 %v540, %v562
  %v571 = vmul.f32 %v544, %v563
  %s572 = scalar_lea.vmem %s1, 32
  %v573 = vld [vmem:[%s572] sm:$0xf]
  %575 = vset.pattern.permute.xlu0 0
  %576 = vperm.xlu0 %575, %v573
  %v577 = vpop.permute.xlu0 %576
  %v579 = vmul.f32 %v577, %v568
  %v580 = vmul.f32 %v577, %v569
  %v581 = vmul.f32 %v577, %v570
  %v582 = vmul.f32 %v577, %v571
  %v583 = vadd.f32 %v522, %v579
  %v584 = vadd.f32 %v523, %v580
  %v585 = vadd.f32 %v524, %v581
  %v586 = vadd.f32 %v525, %v582
  %v587 = vld [vmem:[%s2] sm:$0xff]
  %vm588 = vcmask 31744
  %v590 = vsel %vm588, %v587, 0
  %vm592 = vcmask 1043456
  %v594 = vsel %vm592, %v583, 0
  %v597 = vsel %vm592, %v584, 0
  %v600 = vsel %vm592, %v585, 0
  %v603 = vsel %vm592, %v586, 0
  %605 = vmatprep.subr.mxu0 %v597
  %606 = vmatpush1.msra.mxu0 %v594
  %607 = vmatprep.subr.mxu0 0.0
  %608 = vmatpush1.msra.mxu0 0.0
  %609 = vmatprep.subr.mxu0 0.0
  %610 = vmatpush1.msra.mxu0 0.0
  %611 = vmatprep.subr.mxu0 0.0
  %612 = vmatpush1.msra.mxu0 0.0
  %613 = vmatprep.subr.mxu0 0.0
  %614 = vmatpush1.msra.mxu0 0.0
  %615 = vmatprep.subr.mxu0 0.0
  %616 = vmatpush1.msra.mxu0 0.0
  %617 = vmatprep.subr.mxu0 0.0
  %618 = vmatpush1.msra.mxu0 0.0
  %619 = vmatprep.subr.mxu0 0.0
  %620 = vmatpush1.msra.mxu0 0.0
  %621 = vmatprep.subr.mxu0 0.0
  %622 = vmatpush1.msra.mxu0 0.0
  %623 = vmatprep.subr.mxu0 0.0
  %624 = vmatpush1.msra.mxu0 0.0
  %625 = vmatprep.subr.mxu0 0.0
  %626 = vmatpush1.msra.mxu0 0.0
  %627 = vmatprep.subr.mxu0 0.0
  %628 = vmatpush1.msra.mxu0 0.0
  %629 = vmatprep.subr.mxu0 0.0
  %630 = vmatpush1.msra.mxu0 0.0
  %631 = vmatprep.subr.mxu0 0.0
  %632 = vmatpush1.msra.mxu0 0.0
  %633 = vmatprep.subr.mxu0 0.0
  %634 = vmatpush1.msra.mxu0 0.0
  %635 = vmatprep.subr.mxu0 0.0
  %636 = vmatpush1.msra.mxu0 0.0
  %637 = vmatprep.subr.mxu0 0.0
  %638 = vmatpush1.msra.mxu0 0.0
  %639 = vmatprep.subr.mxu0 0.0
  %640 = vmatpush1.msra.mxu0 0.0
  %641 = vmatprep.subr.mxu0 0.0
  %642 = vmatpush1.msra.mxu0 0.0
  %643 = vmatprep.subr.mxu0 0.0
  %644 = vmatpush1.msra.mxu0 0.0
  %645 = vmatprep.subr.mxu0 0.0
  %646 = vmatpush1.msra.mxu0 0.0
  %647 = vmatprep.subr.mxu0 0.0
  %648 = vmatpush1.msra.mxu0 0.0
  %649 = vmatprep.subr.mxu0 0.0
  %650 = vmatpush1.msra.mxu0 0.0
  %651 = vmatprep.subr.mxu0 0.0
  %652 = vmatpush1.msra.mxu0 0.0
  %653 = vmatprep.subr.mxu0 0.0
  %654 = vmatpush1.msra.mxu0 0.0
  %655 = vmatprep.subr.mxu0 0.0
  %656 = vmatpush1.msra.mxu0 0.0
  %657 = vmatprep.subr.mxu0 0.0
  %658 = vmatpush1.msra.mxu0 0.0
  %659 = vmatprep.subr.mxu0 0.0
  %660 = vmatpush1.msra.mxu0 0.0
  %661 = vmatprep.subr.mxu0 0.0
  %662 = vmatpush1.msra.mxu0 0.0
  %663 = vmatprep.subr.mxu0 0.0
  %664 = vmatpush1.msra.mxu0 0.0
  %665 = vmatprep.subr.mxu0 0.0
  %666 = vmatpush1.msra.mxu0 0.0
  %667 = vmatprep.subr.mxu0 0.0
  %668 = vmatpush1.msra.mxu0 0.0
  %669 = vmatprep.mubr.f32.mxu0 0.0
  %670 = vmatmul.mubr.f32.gmra.mrb[0].mxu0 %v590
  %v671 = vpop.f32.mrb[0].mxu0
  %v672 = vadd.f32 0.0, %v671
  %v673 = vpop.f32.mrb[0].mxu0
  %v674 = vadd.f32 0.0, %v673
  %675 = vdwg.mxu0
  %676 = vmatprep.subr.mxu0 %v603
  %677 = vmatpush1.msra.mxu0 %v600
  %678 = vmatprep.subr.mxu0 0.0
  %679 = vmatpush1.msra.mxu0 0.0
  %680 = vmatprep.subr.mxu0 0.0
  %681 = vmatpush1.msra.mxu0 0.0
  %682 = vmatprep.subr.mxu0 0.0
  %683 = vmatpush1.msra.mxu0 0.0
  %684 = vmatprep.subr.mxu0 0.0
  %685 = vmatpush1.msra.mxu0 0.0
  %686 = vmatprep.subr.mxu0 0.0
  %687 = vmatpush1.msra.mxu0 0.0
  %688 = vmatprep.subr.mxu0 0.0
  %689 = vmatpush1.msra.mxu0 0.0
  %690 = vmatprep.subr.mxu0 0.0
  %691 = vmatpush1.msra.mxu0 0.0
  %692 = vmatprep.subr.mxu0 0.0
  %693 = vmatpush1.msra.mxu0 0.0
  %694 = vmatprep.subr.mxu0 0.0
  %695 = vmatpush1.msra.mxu0 0.0
  %696 = vmatprep.subr.mxu0 0.0
  %697 = vmatpush1.msra.mxu0 0.0
  %698 = vmatprep.subr.mxu0 0.0
  %699 = vmatpush1.msra.mxu0 0.0
  %700 = vmatprep.subr.mxu0 0.0
  %701 = vmatpush1.msra.mxu0 0.0
  %702 = vmatprep.subr.mxu0 0.0
  %703 = vmatpush1.msra.mxu0 0.0
  %704 = vmatprep.subr.mxu0 0.0
  %705 = vmatpush1.msra.mxu0 0.0
  %706 = vmatprep.subr.mxu0 0.0
  %707 = vmatpush1.msra.mxu0 0.0
  %708 = vmatprep.subr.mxu0 0.0
  %709 = vmatpush1.msra.mxu0 0.0
  %710 = vmatprep.subr.mxu0 0.0
  %711 = vmatpush1.msra.mxu0 0.0
  %712 = vmatprep.subr.mxu0 0.0
  %713 = vmatpush1.msra.mxu0 0.0
  %714 = vmatprep.subr.mxu0 0.0
  %715 = vmatpush1.msra.mxu0 0.0
  %716 = vmatprep.subr.mxu0 0.0
  %717 = vmatpush1.msra.mxu0 0.0
  %718 = vmatprep.subr.mxu0 0.0
  %719 = vmatpush1.msra.mxu0 0.0
  %720 = vmatprep.subr.mxu0 0.0
  %721 = vmatpush1.msra.mxu0 0.0
  %722 = vmatprep.subr.mxu0 0.0
  %723 = vmatpush1.msra.mxu0 0.0
  %724 = vmatprep.subr.mxu0 0.0
  %725 = vmatpush1.msra.mxu0 0.0
  %726 = vmatprep.subr.mxu0 0.0
  %727 = vmatpush1.msra.mxu0 0.0
  %728 = vmatprep.subr.mxu0 0.0
  %729 = vmatpush1.msra.mxu0 0.0
  %730 = vmatprep.subr.mxu0 0.0
  %731 = vmatpush1.msra.mxu0 0.0
  %732 = vmatprep.subr.mxu0 0.0
  %733 = vmatpush1.msra.mxu0 0.0
  %734 = vmatprep.subr.mxu0 0.0
  %735 = vmatpush1.msra.mxu0 0.0
  %736 = vmatprep.subr.mxu0 0.0
  %737 = vmatpush1.msra.mxu0 0.0
  %738 = vmatprep.subr.mxu0 0.0
  %739 = vmatpush1.msra.mxu0 0.0
  %740 = vmatprep.mubr.f32.mxu0 0.0
  %741 = vmatmul.mubr.f32.gmra.mrb[0].mxu0 %v590
  %v742 = vpop.f32.mrb[0].mxu0
  %v743 = vadd.f32 0.0, %v742
  %v744 = vpop.f32.mrb[0].mxu0
  %v745 = vadd.f32 0.0, %v744
  %746 = vdwg.mxu0
  %v747 = vadd.f32 %v672, %v674
  %v748 = vadd.f32 %v747, %v743
  %v749 = vadd.f32 %v748, %v745
  %750 = vadd.xlane.f32.xlu0 %v749
  %v751 = vpop.xlane.xlu0 %750
  %v752 = vrcp.pop 512.0
  %v753 = vmul.f32 %v751, %v752
  %v754 = vsub.f32 %v672, %v753
  %v755 = vsub.f32 %v674, %v753
  %v756 = vsub.f32 %v743, %v753
  %v757 = vsub.f32 %v745, %v753
  %v758 = vmul.f32 %v754, %v754
  %v759 = vmul.f32 %v755, %v755
  %v760 = vmul.f32 %v756, %v756
  %v761 = vmul.f32 %v757, %v757
  %v762 = vadd.f32 %v758, %v759
  %v763 = vadd.f32 %v762, %v760
  %v764 = vadd.f32 %v763, %v761
  %765 = vadd.xlane.f32.xlu0 %v764
  %v766 = vpop.xlane.xlu0 %765
  %v767 = vmul.f32 %v766, %v752
  %v768 = vadd.f32 %v767, 1e-05
  %v769 = vrsqrt.pop %v768
  %v770 = vld [vmem:[%s3] sm:$0xff]
  %v771 = vmul.f32 %v769, %v770
  %773 = vset.pattern.permute.xlu0 0
  %774 = vperm.xlu0 %773, %v771
  %v775 = vpop.permute.xlu0 %774
  %v777 = vmul.f32 %v754, %v775
  %v778 = vmul.f32 %v755, %v775
  %v779 = vmul.f32 %v756, %v775
  %v780 = vmul.f32 %v757, %v775
  %v781 = vld [vmem:[%s4] sm:$0xff]
  %783 = vset.pattern.permute.xlu0 0
  %784 = vperm.xlu0 %783, %v781
  %v785 = vpop.permute.xlu0 %784
  %v787 = vadd.f32 %v777, %v785
  %v788 = vadd.f32 %v778, %v785
  %v789 = vadd.f32 %v779, %v785
  %v790 = vadd.f32 %v780, %v785
  %v791 = vmax.f32 %v787, 0.0
  %v792 = vmax.f32 %v788, 0.0
  %v793 = vmax.f32 %v789, 0.0
  %v794 = vmax.f32 %v790, 0.0
  %795 = vst [vmem:[#allocation2 + $0x8] sm:$0xff] %v791
  %796 = vst [vmem:[#allocation2 + $0x10] sm:$0xff] %v792
  %797 = vst [vmem:[#allocation2 + $0x18] sm:$0xff] %v793
  %798 = vst [vmem:[#allocation2 + $0x20] sm:$0xff] %v794
  %v799 = vld [vmem:[#allocation2] sm:$0xff]
  %v800 = vld [vmem:[#allocation2 + $0x8] sm:$0xff]
  %v801 = vld [vmem:[#allocation2 + $0x10] sm:$0xff]
  %v802 = vld [vmem:[#allocation2 + $0x18] sm:$0xff]
  %v803 = vld [vmem:[#allocation2 + $0x20] sm:$0xff]
  %v804 = vld [vmem:[%s13] sm:$0xf]
  %v806 = vlaneseq
  %v807 = vshrl.u32 %v806, 7
  %v808 = vsub.s32 0, %v807
  %v809 = vrot.slane %v804, %v808
  %v810 = vlaneseq
  %v811 = vshrl.u32 %v810, 7
  %v812 = vsub.s32 1, %v811
  %v813 = vrot.slane %v804, %v812
  %v814 = vlaneseq
  %v815 = vshrl.u32 %v814, 7
  %v816 = vsub.s32 2, %v815
  %v817 = vrot.slane %v804, %v816
  %v818 = vlaneseq
  %v819 = vshrl.u32 %v818, 7
  %v820 = vsub.s32 3, %v819
  %v821 = vrot.slane %v804, %v820
  %831 = vrot.lane.b32.xlu0 %v799, 17
  %v832 = vpop.permute.xlu0 %831
  %833 = vrot.lane.b32.xlu0 %v800, 17
  %v834 = vpop.permute.xlu0 %833
  %835 = vrot.lane.b32.xlu0 %v801, 17
  %v836 = vpop.permute.xlu0 %835
  %837 = vrot.lane.b32.xlu0 %v802, 17
  %v838 = vpop.permute.xlu0 %837
  %839 = vrot.lane.b32.xlu0 %v803, 17
  %v840 = vpop.permute.xlu0 %839
  %v841 = vsel %vm112, %v832, %v834
  %v842 = vsel %vm112, %v834, %v836
  %v843 = vsel %vm112, %v836, %v838
  %v844 = vsel %vm112, %v838, %v840
  %v849 = vmul.f32 %v809, %v841
  %v850 = vmul.f32 %v813, %v842
  %v851 = vmul.f32 %v817, %v843
  %v852 = vmul.f32 %v821, %v844
  %v853 = vld [vmem:[%s5] sm:$0xff]
  %855 = vset.pattern.permute.xlu0 0
  %856 = vperm.xlu0 %855, %v853
  %v857 = vpop.permute.xlu0 %856
  %v859 = vmul.f32 %v857, %v849
  %v860 = vmul.f32 %v857, %v850
  %v861 = vmul.f32 %v857, %v851
  %v862 = vmul.f32 %v857, %v852
  %v863 = vld [vmem:[%s135] sm:$0xf]
  %v865 = vlaneseq
  %v866 = vshrl.u32 %v865, 7
  %v867 = vsub.s32 0, %v866
  %v868 = vrot.slane %v863, %v867
  %v869 = vlaneseq
  %v870 = vshrl.u32 %v869, 7
  %v871 = vsub.s32 1, %v870
  %v872 = vrot.slane %v863, %v871
  %v873 = vlaneseq
  %v874 = vshrl.u32 %v873, 7
  %v875 = vsub.s32 2, %v874
  %v876 = vrot.slane %v863, %v875
  %v877 = vlaneseq
  %v878 = vshrl.u32 %v877, 7
  %v879 = vsub.s32 3, %v878
  %v880 = vrot.slane %v863, %v879
  %885 = vrot.lane.b32.xlu0 %v799, 16
  %v886 = vpop.permute.xlu0 %885
  %887 = vrot.lane.b32.xlu0 %v800, 16
  %v888 = vpop.permute.xlu0 %887
  %889 = vrot.lane.b32.xlu0 %v801, 16
  %v890 = vpop.permute.xlu0 %889
  %891 = vrot.lane.b32.xlu0 %v802, 16
  %v892 = vpop.permute.xlu0 %891
  %893 = vrot.lane.b32.xlu0 %v803, 16
  %v894 = vpop.permute.xlu0 %893
  %v895 = vsel %vm168, %v886, %v888
  %v896 = vsel %vm168, %v888, %v890
  %v897 = vsel %vm168, %v890, %v892
  %v898 = vsel %vm168, %v892, %v894
  %v903 = vmul.f32 %v868, %v895
  %v904 = vmul.f32 %v872, %v896
  %v905 = vmul.f32 %v876, %v897
  %v906 = vmul.f32 %v880, %v898
  %s907 = scalar_lea.vmem %s5, 8
  %v908 = vld [vmem:[%s907] sm:$0xff]
  %910 = vset.pattern.permute.xlu0 0
  %911 = vperm.xlu0 %910, %v908
  %v912 = vpop.permute.xlu0 %911
  %v914 = vmul.f32 %v912, %v903
  %v915 = vmul.f32 %v912, %v904
  %v916 = vmul.f32 %v912, %v905
  %v917 = vmul.f32 %v912, %v906
  %v918 = vadd.f32 %v859, %v914
  %v919 = vadd.f32 %v860, %v915
  %v920 = vadd.f32 %v861, %v916
  %v921 = vadd.f32 %v862, %v917
  %v922 = vld [vmem:[%s196] sm:$0xf]
  %v924 = vlaneseq
  %v925 = vshrl.u32 %v924, 7
  %v926 = vsub.s32 0, %v925
  %v927 = vrot.slane %v922, %v926
  %v928 = vlaneseq
  %v929 = vshrl.u32 %v928, 7
  %v930 = vsub.s32 1, %v929
  %v931 = vrot.slane %v922, %v930
  %v932 = vlaneseq
  %v933 = vshrl.u32 %v932, 7
  %v934 = vsub.s32 2, %v933
  %v935 = vrot.slane %v922, %v934
  %v936 = vlaneseq
  %v937 = vshrl.u32 %v936, 7
  %v938 = vsub.s32 3, %v937
  %v939 = vrot.slane %v922, %v938
  %944 = vrot.lane.b32.xlu0 %v799, 15
  %v945 = vpop.permute.xlu0 %944
  %946 = vrot.lane.b32.xlu0 %v800, 15
  %v947 = vpop.permute.xlu0 %946
  %948 = vrot.lane.b32.xlu0 %v801, 15
  %v949 = vpop.permute.xlu0 %948
  %950 = vrot.lane.b32.xlu0 %v802, 15
  %v951 = vpop.permute.xlu0 %950
  %952 = vrot.lane.b32.xlu0 %v803, 15
  %v953 = vpop.permute.xlu0 %952
  %v954 = vsel %vm229, %v945, %v947
  %v955 = vsel %vm229, %v947, %v949
  %v956 = vsel %vm229, %v949, %v951
  %v957 = vsel %vm229, %v951, %v953
  %v962 = vmul.f32 %v927, %v954
  %v963 = vmul.f32 %v931, %v955
  %v964 = vmul.f32 %v935, %v956
  %v965 = vmul.f32 %v939, %v957
  %s966 = scalar_lea.vmem %s5, 16
  %v967 = vld [vmem:[%s966] sm:$0xff]
  %969 = vset.pattern.permute.xlu0 0
  %970 = vperm.xlu0 %969, %v967
  %v971 = vpop.permute.xlu0 %970
  %v973 = vmul.f32 %v971, %v962
  %v974 = vmul.f32 %v971, %v963
  %v975 = vmul.f32 %v971, %v964
  %v976 = vmul.f32 %v971, %v965
  %v977 = vadd.f32 %v918, %v973
  %v978 = vadd.f32 %v919, %v974
  %v979 = vadd.f32 %v920, %v975
  %v980 = vadd.f32 %v921, %v976
  %v981 = vld [vmem:[%s257] sm:$0xf]
  %v983 = vlaneseq
  %v984 = vshrl.u32 %v983, 7
  %v985 = vsub.s32 0, %v984
  %v986 = vrot.slane %v981, %v985
  %v987 = vlaneseq
  %v988 = vshrl.u32 %v987, 7
  %v989 = vsub.s32 1, %v988
  %v990 = vrot.slane %v981, %v989
  %v991 = vlaneseq
  %v992 = vshrl.u32 %v991, 7
  %v993 = vsub.s32 2, %v992
  %v994 = vrot.slane %v981, %v993
  %v995 = vlaneseq
  %v996 = vshrl.u32 %v995, 7
  %v997 = vsub.s32 3, %v996
  %v998 = vrot.slane %v981, %v997
  %1003 = vrot.lane.b32.xlu0 %v799, 1
  %v1004 = vpop.permute.xlu0 %1003
  %1005 = vrot.lane.b32.xlu0 %v800, 1
  %v1006 = vpop.permute.xlu0 %1005
  %1007 = vrot.lane.b32.xlu0 %v801, 1
  %v1008 = vpop.permute.xlu0 %1007
  %1009 = vrot.lane.b32.xlu0 %v802, 1
  %v1010 = vpop.permute.xlu0 %1009
  %1011 = vrot.lane.b32.xlu0 %v803, 1
  %v1012 = vpop.permute.xlu0 %1011
  %v1013 = vsel %vm290, %v1004, %v1006
  %v1014 = vsel %vm290, %v1006, %v1008
  %v1015 = vsel %vm290, %v1008, %v1010
  %v1016 = vsel %vm290, %v1010, %v1012
  %v1021 = vmul.f32 %v986, %v1013
  %v1022 = vmul.f32 %v990, %v1014
  %v1023 = vmul.f32 %v994, %v1015
  %v1024 = vmul.f32 %v998, %v1016
  %s1025 = scalar_lea.vmem %s5, 24
  %v1026 = vld [vmem:[%s1025] sm:$0xff]
  %1028 = vset.pattern.permute.xlu0 0
  %1029 = vperm.xlu0 %1028, %v1026
  %v1030 = vpop.permute.xlu0 %1029
  %v1032 = vmul.f32 %v1030, %v1021
  %v1033 = vmul.f32 %v1030, %v1022
  %v1034 = vmul.f32 %v1030, %v1023
  %v1035 = vmul.f32 %v1030, %v1024
  %v1036 = vadd.f32 %v977, %v1032
  %v1037 = vadd.f32 %v978, %v1033
  %v1038 = vadd.f32 %v979, %v1034
  %v1039 = vadd.f32 %v980, %v1035
  %s1040 = scalar_lea.vmem %s5, 32
  %v1041 = vld [vmem:[%s1040] sm:$0xff]
  %1043 = vset.pattern.permute.xlu0 0
  %1044 = vperm.xlu0 %1043, %v1041
  %v1045 = vpop.permute.xlu0 %1044
  %v1047 = vmul.f32 %v1045, %v791
  %v1048 = vmul.f32 %v1045, %v792
  %v1049 = vmul.f32 %v1045, %v793
  %v1050 = vmul.f32 %v1045, %v794
  %v1051 = vadd.f32 %v1036, %v1047
  %v1052 = vadd.f32 %v1037, %v1048
  %v1053 = vadd.f32 %v1038, %v1049
  %v1054 = vadd.f32 %v1039, %v1050
  %v1055 = vld [vmem:[#allocation2 + $0x8] sm:$0xff]
  %v1056 = vld [vmem:[#allocation2 + $0x10] sm:$0xff]
  %v1057 = vld [vmem:[#allocation2 + $0x18] sm:$0xff]
  %v1058 = vld [vmem:[#allocation2 + $0x20] sm:$0xff]
  %v1059 = vld [vmem:[#allocation2 + $0x28] sm:$0xff]
  %v1060 = vld [vmem:[%s338] sm:$0xf]
  %v1062 = vlaneseq
  %v1063 = vshrl.u32 %v1062, 7
  %v1064 = vsub.s32 0, %v1063
  %v1065 = vrot.slane %v1060, %v1064
  %v1066 = vlaneseq
  %v1067 = vshrl.u32 %v1066, 7
  %v1068 = vsub.s32 1, %v1067
  %v1069 = vrot.slane %v1060, %v1068
  %v1070 = vlaneseq
  %v1071 = vshrl.u32 %v1070, 7
  %v1072 = vsub.s32 2, %v1071
  %v1073 = vrot.slane %v1060, %v1072
  %v1074 = vlaneseq
  %v1075 = vshrl.u32 %v1074, 7
  %v1076 = vsub.s32 3, %v1075
  %v1077 = vrot.slane %v1060, %v1076
  %1087 = vrot.lane.b32.xlu0 %v1055, 127
  %v1088 = vpop.permute.xlu0 %1087
  %1089 = vrot.lane.b32.xlu0 %v1056, 127
  %v1090 = vpop.permute.xlu0 %1089
  %1091 = vrot.lane.b32.xlu0 %v1057, 127
  %v1092 = vpop.permute.xlu0 %1091
  %1093 = vrot.lane.b32.xlu0 %v1058, 127
  %v1094 = vpop.permute.xlu0 %1093
  %1095 = vrot.lane.b32.xlu0 %v1059, 127
  %v1096 = vpop.permute.xlu0 %1095
  %v1097 = vsel %vm376, %v1088, %v1090
  %v1098 = vsel %vm376, %v1090, %v1092
  %v1099 = vsel %vm376, %v1092, %v1094
  %v1100 = vsel %vm376, %v1094, %v1096
  %v1105 = vmul.f32 %v1065, %v1097
  %v1106 = vmul.f32 %v1069, %v1098
  %v1107 = vmul.f32 %v1073, %v1099
  %v1108 = vmul.f32 %v1077, %v1100
  %s1109 = scalar_lea.vmem %s5, 40
  %v1110 = vld [vmem:[%s1109] sm:$0xff]
  %1112 = vset.pattern.permute.xlu0 0
  %1113 = vperm.xlu0 %1112, %v1110
  %v1114 = vpop.permute.xlu0 %1113
  %v1116 = vmul.f32 %v1114, %v1105
  %v1117 = vmul.f32 %v1114, %v1106
  %v1118 = vmul.f32 %v1114, %v1107
  %v1119 = vmul.f32 %v1114, %v1108
  %v1120 = vadd.f32 %v1051, %v1116
  %v1121 = vadd.f32 %v1052, %v1117
  %v1122 = vadd.f32 %v1053, %v1118
  %v1123 = vadd.f32 %v1054, %v1119
  %v1124 = vld [vmem:[%s404] sm:$0xf]
  %v1126 = vlaneseq
  %v1127 = vshrl.u32 %v1126, 7
  %v1128 = vsub.s32 0, %v1127
  %v1129 = vrot.slane %v1124, %v1128
  %v1130 = vlaneseq
  %v1131 = vshrl.u32 %v1130, 7
  %v1132 = vsub.s32 1, %v1131
  %v1133 = vrot.slane %v1124, %v1132
  %v1134 = vlaneseq
  %v1135 = vshrl.u32 %v1134, 7
  %v1136 = vsub.s32 2, %v1135
  %v1137 = vrot.slane %v1124, %v1136
  %v1138 = vlaneseq
  %v1139 = vshrl.u32 %v1138, 7
  %v1140 = vsub.s32 3, %v1139
  %v1141 = vrot.slane %v1124, %v1140
  %1146 = vrot.lane.b32.xlu0 %v1055, 113
  %v1147 = vpop.permute.xlu0 %1146
  %1148 = vrot.lane.b32.xlu0 %v1056, 113
  %v1149 = vpop.permute.xlu0 %1148
  %1150 = vrot.lane.b32.xlu0 %v1057, 113
  %v1151 = vpop.permute.xlu0 %1150
  %1152 = vrot.lane.b32.xlu0 %v1058, 113
  %v1153 = vpop.permute.xlu0 %1152
  %1154 = vrot.lane.b32.xlu0 %v1059, 113
  %v1155 = vpop.permute.xlu0 %1154
  %v1156 = vsel %vm437, %v1147, %v1149
  %v1157 = vsel %vm437, %v1149, %v1151
  %v1158 = vsel %vm437, %v1151, %v1153
  %v1159 = vsel %vm437, %v1153, %v1155
  %v1164 = vmul.f32 %v1129, %v1156
  %v1165 = vmul.f32 %v1133, %v1157
  %v1166 = vmul.f32 %v1137, %v1158
  %v1167 = vmul.f32 %v1141, %v1159
  %s1168 = scalar_lea.vmem %s5, 48
  %v1169 = vld [vmem:[%s1168] sm:$0xff]
  %1171 = vset.pattern.permute.xlu0 0
  %1172 = vperm.xlu0 %1171, %v1169
  %v1173 = vpop.permute.xlu0 %1172
  %v1175 = vmul.f32 %v1173, %v1164
  %v1176 = vmul.f32 %v1173, %v1165
  %v1177 = vmul.f32 %v1173, %v1166
  %v1178 = vmul.f32 %v1173, %v1167
  %v1179 = vadd.f32 %v1120, %v1175
  %v1180 = vadd.f32 %v1121, %v1176
  %v1181 = vadd.f32 %v1122, %v1177
  %v1182 = vadd.f32 %v1123, %v1178
  %v1183 = vld [vmem:[%s465] sm:$0xf]
  %v1185 = vlaneseq
  %v1186 = vshrl.u32 %v1185, 7
  %v1187 = vsub.s32 0, %v1186
  %v1188 = vrot.slane %v1183, %v1187
  %v1189 = vlaneseq
  %v1190 = vshrl.u32 %v1189, 7
  %v1191 = vsub.s32 1, %v1190
  %v1192 = vrot.slane %v1183, %v1191
  %v1193 = vlaneseq
  %v1194 = vshrl.u32 %v1193, 7
  %v1195 = vsub.s32 2, %v1194
  %v1196 = vrot.slane %v1183, %v1195
  %v1197 = vlaneseq
  %v1198 = vshrl.u32 %v1197, 7
  %v1199 = vsub.s32 3, %v1198
  %v1200 = vrot.slane %v1183, %v1199
  %1205 = vrot.lane.b32.xlu0 %v1055, 112
  %v1206 = vpop.permute.xlu0 %1205
  %1207 = vrot.lane.b32.xlu0 %v1056, 112
  %v1208 = vpop.permute.xlu0 %1207
  %1209 = vrot.lane.b32.xlu0 %v1057, 112
  %v1210 = vpop.permute.xlu0 %1209
  %1211 = vrot.lane.b32.xlu0 %v1058, 112
  %v1212 = vpop.permute.xlu0 %1211
  %1213 = vrot.lane.b32.xlu0 %v1059, 112
  %v1214 = vpop.permute.xlu0 %1213
  %v1215 = vsel %vm498, %v1206, %v1208
  %v1216 = vsel %vm498, %v1208, %v1210
  %v1217 = vsel %vm498, %v1210, %v1212
  %v1218 = vsel %vm498, %v1212, %v1214
  %v1223 = vmul.f32 %v1188, %v1215
  %v1224 = vmul.f32 %v1192, %v1216
  %v1225 = vmul.f32 %v1196, %v1217
  %v1226 = vmul.f32 %v1200, %v1218
  %s1227 = scalar_lea.vmem %s5, 56
  %v1228 = vld [vmem:[%s1227] sm:$0xff]
  %1230 = vset.pattern.permute.xlu0 0
  %1231 = vperm.xlu0 %1230, %v1228
  %v1232 = vpop.permute.xlu0 %1231
  %v1234 = vmul.f32 %v1232, %v1223
  %v1235 = vmul.f32 %v1232, %v1224
  %v1236 = vmul.f32 %v1232, %v1225
  %v1237 = vmul.f32 %v1232, %v1226
  %v1238 = vadd.f32 %v1179, %v1234
  %v1239 = vadd.f32 %v1180, %v1235
  %v1240 = vadd.f32 %v1181, %v1236
  %v1241 = vadd.f32 %v1182, %v1237
  %v1242 = vld [vmem:[%s526] sm:$0xf]
  %v1244 = vlaneseq
  %v1245 = vshrl.u32 %v1244, 7
  %v1246 = vsub.s32 0, %v1245
  %v1247 = vrot.slane %v1242, %v1246
  %v1248 = vlaneseq
  %v1249 = vshrl.u32 %v1248, 7
  %v1250 = vsub.s32 1, %v1249
  %v1251 = vrot.slane %v1242, %v1250
  %v1252 = vlaneseq
  %v1253 = vshrl.u32 %v1252, 7
  %v1254 = vsub.s32 2, %v1253
  %v1255 = vrot.slane %v1242, %v1254
  %v1256 = vlaneseq
  %v1257 = vshrl.u32 %v1256, 7
  %v1258 = vsub.s32 3, %v1257
  %v1259 = vrot.slane %v1242, %v1258
  %1264 = vrot.lane.b32.xlu0 %v1055, 111
  %v1265 = vpop.permute.xlu0 %1264
  %1266 = vrot.lane.b32.xlu0 %v1056, 111
  %v1267 = vpop.permute.xlu0 %1266
  %1268 = vrot.lane.b32.xlu0 %v1057, 111
  %v1269 = vpop.permute.xlu0 %1268
  %1270 = vrot.lane.b32.xlu0 %v1058, 111
  %v1271 = vpop.permute.xlu0 %1270
  %1272 = vrot.lane.b32.xlu0 %v1059, 111
  %v1273 = vpop.permute.xlu0 %1272
  %v1274 = vsel %vm559, %v1265, %v1267
  %v1275 = vsel %vm559, %v1267, %v1269
  %v1276 = vsel %vm559, %v1269, %v1271
  %v1277 = vsel %vm559, %v1271, %v1273
  %v1282 = vmul.f32 %v1247, %v1274
  %v1283 = vmul.f32 %v1251, %v1275
  %v1284 = vmul.f32 %v1255, %v1276
  %v1285 = vmul.f32 %v1259, %v1277
  %s1286 = scalar_lea.vmem %s5, 64
  %v1287 = vld [vmem:[%s1286] sm:$0xff]
  %1289 = vset.pattern.permute.xlu0 0
  %1290 = vperm.xlu0 %1289, %v1287
  %v1291 = vpop.permute.xlu0 %1290
  %v1293 = vmul.f32 %v1291, %v1282
  %v1294 = vmul.f32 %v1291, %v1283
  %v1295 = vmul.f32 %v1291, %v1284
  %v1296 = vmul.f32 %v1291, %v1285
  %v1297 = vadd.f32 %v1238, %v1293
  %v1298 = vadd.f32 %v1239, %v1294
  %v1299 = vadd.f32 %v1240, %v1295
  %v1300 = vadd.f32 %v1241, %v1296
  %v1301 = vld [vmem:[%s6] sm:$0xff]
  %vm1302 = vcmask 64512
  %v1304 = vsel %vm1302, %v1301, 0
  %1306 = vmatprep.subr.mxu0 %v1298
  %1307 = vmatpush1.msra.mxu0 %v1297
  %1308 = vmatprep.subr.mxu0 0.0
  %1309 = vmatpush1.msra.mxu0 0.0
  %1310 = vmatprep.subr.mxu0 0.0
  %1311 = vmatpush1.msra.mxu0 0.0
  %1312 = vmatprep.subr.mxu0 0.0
  %1313 = vmatpush1.msra.mxu0 0.0
  %1314 = vmatprep.subr.mxu0 0.0
  %1315 = vmatpush1.msra.mxu0 0.0
  %1316 = vmatprep.subr.mxu0 0.0
  %1317 = vmatpush1.msra.mxu0 0.0
  %1318 = vmatprep.subr.mxu0 0.0
  %1319 = vmatpush1.msra.mxu0 0.0
  %1320 = vmatprep.subr.mxu0 0.0
  %1321 = vmatpush1.msra.mxu0 0.0
  %1322 = vmatprep.subr.mxu0 0.0
  %1323 = vmatpush1.msra.mxu0 0.0
  %1324 = vmatprep.subr.mxu0 0.0
  %1325 = vmatpush1.msra.mxu0 0.0
  %1326 = vmatprep.subr.mxu0 0.0
  %1327 = vmatpush1.msra.mxu0 0.0
  %1328 = vmatprep.subr.mxu0 0.0
  %1329 = vmatpush1.msra.mxu0 0.0
  %1330 = vmatprep.subr.mxu0 0.0
  %1331 = vmatpush1.msra.mxu0 0.0
  %1332 = vmatprep.subr.mxu0 0.0
  %1333 = vmatpush1.msra.mxu0 0.0
  %1334 = vmatprep.subr.mxu0 0.0
  %1335 = vmatpush1.msra.mxu0 0.0
  %1336 = vmatprep.subr.mxu0 0.0
  %1337 = vmatpush1.msra.mxu0 0.0
  %1338 = vmatprep.subr.mxu0 0.0
  %1339 = vmatpush1.msra.mxu0 0.0
  %1340 = vmatprep.subr.mxu0 0.0
  %1341 = vmatpush1.msra.mxu0 0.0
  %1342 = vmatprep.subr.mxu0 0.0
  %1343 = vmatpush1.msra.mxu0 0.0
  %1344 = vmatprep.subr.mxu0 0.0
  %1345 = vmatpush1.msra.mxu0 0.0
  %1346 = vmatprep.subr.mxu0 0.0
  %1347 = vmatpush1.msra.mxu0 0.0
  %1348 = vmatprep.subr.mxu0 0.0
  %1349 = vmatpush1.msra.mxu0 0.0
  %1350 = vmatprep.subr.mxu0 0.0
  %1351 = vmatpush1.msra.mxu0 0.0
  %1352 = vmatprep.subr.mxu0 0.0
  %1353 = vmatpush1.msra.mxu0 0.0
  %1354 = vmatprep.subr.mxu0 0.0
  %1355 = vmatpush1.msra.mxu0 0.0
  %1356 = vmatprep.subr.mxu0 0.0
  %1357 = vmatpush1.msra.mxu0 0.0
  %1358 = vmatprep.subr.mxu0 0.0
  %1359 = vmatpush1.msra.mxu0 0.0
  %1360 = vmatprep.subr.mxu0 0.0
  %1361 = vmatpush1.msra.mxu0 0.0
  %1362 = vmatprep.subr.mxu0 0.0
  %1363 = vmatpush1.msra.mxu0 0.0
  %1364 = vmatprep.subr.mxu0 0.0
  %1365 = vmatpush1.msra.mxu0 0.0
  %1366 = vmatprep.subr.mxu0 0.0
  %1367 = vmatpush1.msra.mxu0 0.0
  %1368 = vmatprep.subr.mxu0 0.0
  %1369 = vmatpush1.msra.mxu0 0.0
  %1370 = vmatprep.mubr.f32.mxu0 0.0
  %1371 = vmatmul.mubr.f32.gmra.mrb[0].mxu0 %v1304
  %v1372 = vpop.f32.mrb[0].mxu0
  %v1373 = vadd.f32 0.0, %v1372
  %v1374 = vpop.f32.mrb[0].mxu0
  %v1375 = vadd.f32 0.0, %v1374
  %1376 = vdwg.mxu0
  %1377 = vmatprep.subr.mxu0 %v1300
  %1378 = vmatpush1.msra.mxu0 %v1299
  %1379 = vmatprep.subr.mxu0 0.0
  %1380 = vmatpush1.msra.mxu0 0.0
  %1381 = vmatprep.subr.mxu0 0.0
  %1382 = vmatpush1.msra.mxu0 0.0
  %1383 = vmatprep.subr.mxu0 0.0
  %1384 = vmatpush1.msra.mxu0 0.0
  %1385 = vmatprep.subr.mxu0 0.0
  %1386 = vmatpush1.msra.mxu0 0.0
  %1387 = vmatprep.subr.mxu0 0.0
  %1388 = vmatpush1.msra.mxu0 0.0
  %1389 = vmatprep.subr.mxu0 0.0
  %1390 = vmatpush1.msra.mxu0 0.0
  %1391 = vmatprep.subr.mxu0 0.0
  %1392 = vmatpush1.msra.mxu0 0.0
  %1393 = vmatprep.subr.mxu0 0.0
  %1394 = vmatpush1.msra.mxu0 0.0
  %1395 = vmatprep.subr.mxu0 0.0
  %1396 = vmatpush1.msra.mxu0 0.0
  %1397 = vmatprep.subr.mxu0 0.0
  %1398 = vmatpush1.msra.mxu0 0.0
  %1399 = vmatprep.subr.mxu0 0.0
  %1400 = vmatpush1.msra.mxu0 0.0
  %1401 = vmatprep.subr.mxu0 0.0
  %1402 = vmatpush1.msra.mxu0 0.0
  %1403 = vmatprep.subr.mxu0 0.0
  %1404 = vmatpush1.msra.mxu0 0.0
  %1405 = vmatprep.subr.mxu0 0.0
  %1406 = vmatpush1.msra.mxu0 0.0
  %1407 = vmatprep.subr.mxu0 0.0
  %1408 = vmatpush1.msra.mxu0 0.0
  %1409 = vmatprep.subr.mxu0 0.0
  %1410 = vmatpush1.msra.mxu0 0.0
  %1411 = vmatprep.subr.mxu0 0.0
  %1412 = vmatpush1.msra.mxu0 0.0
  %1413 = vmatprep.subr.mxu0 0.0
  %1414 = vmatpush1.msra.mxu0 0.0
  %1415 = vmatprep.subr.mxu0 0.0
  %1416 = vmatpush1.msra.mxu0 0.0
  %1417 = vmatprep.subr.mxu0 0.0
  %1418 = vmatpush1.msra.mxu0 0.0
  %1419 = vmatprep.subr.mxu0 0.0
  %1420 = vmatpush1.msra.mxu0 0.0
  %1421 = vmatprep.subr.mxu0 0.0
  %1422 = vmatpush1.msra.mxu0 0.0
  %1423 = vmatprep.subr.mxu0 0.0
  %1424 = vmatpush1.msra.mxu0 0.0
  %1425 = vmatprep.subr.mxu0 0.0
  %1426 = vmatpush1.msra.mxu0 0.0
  %1427 = vmatprep.subr.mxu0 0.0
  %1428 = vmatpush1.msra.mxu0 0.0
  %1429 = vmatprep.subr.mxu0 0.0
  %1430 = vmatpush1.msra.mxu0 0.0
  %1431 = vmatprep.subr.mxu0 0.0
  %1432 = vmatpush1.msra.mxu0 0.0
  %1433 = vmatprep.subr.mxu0 0.0
  %1434 = vmatpush1.msra.mxu0 0.0
  %1435 = vmatprep.subr.mxu0 0.0
  %1436 = vmatpush1.msra.mxu0 0.0
  %1437 = vmatprep.subr.mxu0 0.0
  %1438 = vmatpush1.msra.mxu0 0.0
  %1439 = vmatprep.subr.mxu0 0.0
  %1440 = vmatpush1.msra.mxu0 0.0
  %1441 = vmatprep.mubr.f32.mxu0 0.0
  %1442 = vmatmul.mubr.f32.gmra.mrb[0].mxu0 %v1304
  %v1443 = vpop.f32.mrb[0].mxu0
  %v1444 = vadd.f32 0.0, %v1443
  %v1445 = vpop.f32.mrb[0].mxu0
  %v1446 = vadd.f32 0.0, %v1445
  %1447 = vdwg.mxu0
  %v1448 = vadd.f32 %v1373, %v1375
  %v1449 = vadd.f32 %v1448, %v1444
  %v1450 = vadd.f32 %v1449, %v1446
  %1451 = vadd.xlane.f32.xlu0 %v1450
  %v1452 = vpop.xlane.xlu0 %1451
  %v1453 = vmul.f32 %v1452, %v752
  %v1454 = vsub.f32 %v1373, %v1453
  %v1455 = vsub.f32 %v1375, %v1453
  %v1456 = vsub.f32 %v1444, %v1453
  %v1457 = vsub.f32 %v1446, %v1453
  %v1458 = vmul.f32 %v1454, %v1454
  %v1459 = vmul.f32 %v1455, %v1455
  %v1460 = vmul.f32 %v1456, %v1456
  %v1461 = vmul.f32 %v1457, %v1457
  %v1462 = vadd.f32 %v1458, %v1459
  %v1463 = vadd.f32 %v1462, %v1460
  %v1464 = vadd.f32 %v1463, %v1461
  %1465 = vadd.xlane.f32.xlu0 %v1464
  %v1466 = vpop.xlane.xlu0 %1465
  %v1467 = vmul.f32 %v1466, %v752
  %v1468 = vadd.f32 %v1467, 1e-05
  %v1469 = vrsqrt.pop %v1468
  %v1470 = vld [vmem:[%s7] sm:$0xff]
  %v1471 = vmul.f32 %v1469, %v1470
  %1473 = vset.pattern.permute.xlu0 0
  %1474 = vperm.xlu0 %1473, %v1471
  %v1475 = vpop.permute.xlu0 %1474
  %v1477 = vmul.f32 %v1454, %v1475
  %v1478 = vmul.f32 %v1455, %v1475
  %v1479 = vmul.f32 %v1456, %v1475
  %v1480 = vmul.f32 %v1457, %v1475
  %v1481 = vld [vmem:[%s8] sm:$0xff]
  %1483 = vset.pattern.permute.xlu0 0
  %1484 = vperm.xlu0 %1483, %v1481
  %v1485 = vpop.permute.xlu0 %1484
  %v1487 = vadd.f32 %v1477, %v1485
  %v1488 = vadd.f32 %v1478, %v1485
  %v1489 = vadd.f32 %v1479, %v1485
  %v1490 = vadd.f32 %v1480, %v1485
  %v1491 = vmax.f32 %v1487, 0.0
  %v1492 = vmax.f32 %v1488, 0.0
  %v1493 = vmax.f32 %v1489, 0.0
  %v1494 = vmax.f32 %v1490, 0.0
  %1495 = vst [vmem:[#allocation2 + $0x8] sm:$0xff] %v1491
  %1496 = vst [vmem:[#allocation2 + $0x10] sm:$0xff] %v1492
  %1497 = vst [vmem:[#allocation2 + $0x18] sm:$0xff] %v1493
  %1498 = vst [vmem:[#allocation2 + $0x20] sm:$0xff] %v1494
  %v1499 = vld [vmem:[#allocation2] sm:$0xff]
  %v1500 = vld [vmem:[#allocation2 + $0x8] sm:$0xff]
  %v1501 = vld [vmem:[#allocation2 + $0x10] sm:$0xff]
  %v1502 = vld [vmem:[#allocation2 + $0x18] sm:$0xff]
  %v1503 = vld [vmem:[#allocation2 + $0x20] sm:$0xff]
  %v1504 = vld [vmem:[%s13] sm:$0xf]
  %v1506 = vlaneseq
  %v1507 = vshrl.u32 %v1506, 7
  %v1508 = vsub.s32 0, %v1507
  %v1509 = vrot.slane %v1504, %v1508
  %v1510 = vlaneseq
  %v1511 = vshrl.u32 %v1510, 7
  %v1512 = vsub.s32 1, %v1511
  %v1513 = vrot.slane %v1504, %v1512
  %v1514 = vlaneseq
  %v1515 = vshrl.u32 %v1514, 7
  %v1516 = vsub.s32 2, %v1515
  %v1517 = vrot.slane %v1504, %v1516
  %v1518 = vlaneseq
  %v1519 = vshrl.u32 %v1518, 7
  %v1520 = vsub.s32 3, %v1519
  %v1521 = vrot.slane %v1504, %v1520
  %1531 = vrot.lane.b32.xlu0 %v1499, 17
  %v1532 = vpop.permute.xlu0 %1531
  %1533 = vrot.lane.b32.xlu0 %v1500, 17
  %v1534 = vpop.permute.xlu0 %1533
  %1535 = vrot.lane.b32.xlu0 %v1501, 17
  %v1536 = vpop.permute.xlu0 %1535
  %1537 = vrot.lane.b32.xlu0 %v1502, 17
  %v1538 = vpop.permute.xlu0 %1537
  %1539 = vrot.lane.b32.xlu0 %v1503, 17
  %v1540 = vpop.permute.xlu0 %1539
  %v1541 = vsel %vm112, %v1532, %v1534
  %v1542 = vsel %vm112, %v1534, %v1536
  %v1543 = vsel %vm112, %v1536, %v1538
  %v1544 = vsel %vm112, %v1538, %v1540
  %v1549 = vmul.f32 %v1509, %v1541
  %v1550 = vmul.f32 %v1513, %v1542
  %v1551 = vmul.f32 %v1517, %v1543
  %v1552 = vmul.f32 %v1521, %v1544
  %v1553 = vld [vmem:[%s9] sm:$0xff]
  %1555 = vset.pattern.permute.xlu0 0
  %1556 = vperm.xlu0 %1555, %v1553
  %v1557 = vpop.permute.xlu0 %1556
  %v1559 = vmul.f32 %v1557, %v1549
  %v1560 = vmul.f32 %v1557, %v1550
  %v1561 = vmul.f32 %v1557, %v1551
  %v1562 = vmul.f32 %v1557, %v1552
  %v1563 = vld [vmem:[%s135] sm:$0xf]
  %v1565 = vlaneseq
  %v1566 = vshrl.u32 %v1565, 7
  %v1567 = vsub.s32 0, %v1566
  %v1568 = vrot.slane %v1563, %v1567
  %v1569 = vlaneseq
  %v1570 = vshrl.u32 %v1569, 7
  %v1571 = vsub.s32 1, %v1570
  %v1572 = vrot.slane %v1563, %v1571
  %v1573 = vlaneseq
  %v1574 = vshrl.u32 %v1573, 7
  %v1575 = vsub.s32 2, %v1574
  %v1576 = vrot.slane %v1563, %v1575
  %v1577 = vlaneseq
  %v1578 = vshrl.u32 %v1577, 7
  %v1579 = vsub.s32 3, %v1578
  %v1580 = vrot.slane %v1563, %v1579
  %1585 = vrot.lane.b32.xlu0 %v1499, 16
  %v1586 = vpop.permute.xlu0 %1585
  %1587 = vrot.lane.b32.xlu0 %v1500, 16
  %v1588 = vpop.permute.xlu0 %1587
  %1589 = vrot.lane.b32.xlu0 %v1501, 16
  %v1590 = vpop.permute.xlu0 %1589
  %1591 = vrot.lane.b32.xlu0 %v1502, 16
  %v1592 = vpop.permute.xlu0 %1591
  %1593 = vrot.lane.b32.xlu0 %v1503, 16
  %v1594 = vpop.permute.xlu0 %1593
  %v1595 = vsel %vm168, %v1586, %v1588
  %v1596 = vsel %vm168, %v1588, %v1590
  %v1597 = vsel %vm168, %v1590, %v1592
  %v1598 = vsel %vm168, %v1592, %v1594
  %v1603 = vmul.f32 %v1568, %v1595
  %v1604 = vmul.f32 %v1572, %v1596
  %v1605 = vmul.f32 %v1576, %v1597
  %v1606 = vmul.f32 %v1580, %v1598
  %s1607 = scalar_lea.vmem %s9, 8
  %v1608 = vld [vmem:[%s1607] sm:$0xff]
  %1610 = vset.pattern.permute.xlu0 0
  %1611 = vperm.xlu0 %1610, %v1608
  %v1612 = vpop.permute.xlu0 %1611
  %v1614 = vmul.f32 %v1612, %v1603
  %v1615 = vmul.f32 %v1612, %v1604
  %v1616 = vmul.f32 %v1612, %v1605
  %v1617 = vmul.f32 %v1612, %v1606
  %v1618 = vadd.f32 %v1559, %v1614
  %v1619 = vadd.f32 %v1560, %v1615
  %v1620 = vadd.f32 %v1561, %v1616
  %v1621 = vadd.f32 %v1562, %v1617
  %v1622 = vld [vmem:[%s196] sm:$0xf]
  %v1624 = vlaneseq
  %v1625 = vshrl.u32 %v1624, 7
  %v1626 = vsub.s32 0, %v1625
  %v1627 = vrot.slane %v1622, %v1626
  %v1628 = vlaneseq
  %v1629 = vshrl.u32 %v1628, 7
  %v1630 = vsub.s32 1, %v1629
  %v1631 = vrot.slane %v1622, %v1630
  %v1632 = vlaneseq
  %v1633 = vshrl.u32 %v1632, 7
  %v1634 = vsub.s32 2, %v1633
  %v1635 = vrot.slane %v1622, %v1634
  %v1636 = vlaneseq
  %v1637 = vshrl.u32 %v1636, 7
  %v1638 = vsub.s32 3, %v1637
  %v1639 = vrot.slane %v1622, %v1638
  %1644 = vrot.lane.b32.xlu0 %v1499, 15
  %v1645 = vpop.permute.xlu0 %1644
  %1646 = vrot.lane.b32.xlu0 %v1500, 15
  %v1647 = vpop.permute.xlu0 %1646
  %1648 = vrot.lane.b32.xlu0 %v1501, 15
  %v1649 = vpop.permute.xlu0 %1648
  %1650 = vrot.lane.b32.xlu0 %v1502, 15
  %v1651 = vpop.permute.xlu0 %1650
  %1652 = vrot.lane.b32.xlu0 %v1503, 15
  %v1653 = vpop.permute.xlu0 %1652
  %v1654 = vsel %vm229, %v1645, %v1647
  %v1655 = vsel %vm229, %v1647, %v1649
  %v1656 = vsel %vm229, %v1649, %v1651
  %v1657 = vsel %vm229, %v1651, %v1653
  %v1662 = vmul.f32 %v1627, %v1654
  %v1663 = vmul.f32 %v1631, %v1655
  %v1664 = vmul.f32 %v1635, %v1656
  %v1665 = vmul.f32 %v1639, %v1657
  %s1666 = scalar_lea.vmem %s9, 16
  %v1667 = vld [vmem:[%s1666] sm:$0xff]
  %1669 = vset.pattern.permute.xlu0 0
  %1670 = vperm.xlu0 %1669, %v1667
  %v1671 = vpop.permute.xlu0 %1670
  %v1673 = vmul.f32 %v1671, %v1662
  %v1674 = vmul.f32 %v1671, %v1663
  %v1675 = vmul.f32 %v1671, %v1664
  %v1676 = vmul.f32 %v1671, %v1665
  %v1677 = vadd.f32 %v1618, %v1673
  %v1678 = vadd.f32 %v1619, %v1674
  %v1679 = vadd.f32 %v1620, %v1675
  %v1680 = vadd.f32 %v1621, %v1676
  %v1681 = vld [vmem:[%s257] sm:$0xf]
  %v1683 = vlaneseq
  %v1684 = vshrl.u32 %v1683, 7
  %v1685 = vsub.s32 0, %v1684
  %v1686 = vrot.slane %v1681, %v1685
  %v1687 = vlaneseq
  %v1688 = vshrl.u32 %v1687, 7
  %v1689 = vsub.s32 1, %v1688
  %v1690 = vrot.slane %v1681, %v1689
  %v1691 = vlaneseq
  %v1692 = vshrl.u32 %v1691, 7
  %v1693 = vsub.s32 2, %v1692
  %v1694 = vrot.slane %v1681, %v1693
  %v1695 = vlaneseq
  %v1696 = vshrl.u32 %v1695, 7
  %v1697 = vsub.s32 3, %v1696
  %v1698 = vrot.slane %v1681, %v1697
  %1703 = vrot.lane.b32.xlu0 %v1499, 1
  %v1704 = vpop.permute.xlu0 %1703
  %1705 = vrot.lane.b32.xlu0 %v1500, 1
  %v1706 = vpop.permute.xlu0 %1705
  %1707 = vrot.lane.b32.xlu0 %v1501, 1
  %v1708 = vpop.permute.xlu0 %1707
  %1709 = vrot.lane.b32.xlu0 %v1502, 1
  %v1710 = vpop.permute.xlu0 %1709
  %1711 = vrot.lane.b32.xlu0 %v1503, 1
  %v1712 = vpop.permute.xlu0 %1711
  %v1713 = vsel %vm290, %v1704, %v1706
  %v1714 = vsel %vm290, %v1706, %v1708
  %v1715 = vsel %vm290, %v1708, %v1710
  %v1716 = vsel %vm290, %v1710, %v1712
  %v1721 = vmul.f32 %v1686, %v1713
  %v1722 = vmul.f32 %v1690, %v1714
  %v1723 = vmul.f32 %v1694, %v1715
  %v1724 = vmul.f32 %v1698, %v1716
  %s1725 = scalar_lea.vmem %s9, 24
  %v1726 = vld [vmem:[%s1725] sm:$0xff]
  %1728 = vset.pattern.permute.xlu0 0
  %1729 = vperm.xlu0 %1728, %v1726
  %v1730 = vpop.permute.xlu0 %1729
  %v1732 = vmul.f32 %v1730, %v1721
  %v1733 = vmul.f32 %v1730, %v1722
  %v1734 = vmul.f32 %v1730, %v1723
  %v1735 = vmul.f32 %v1730, %v1724
  %v1736 = vadd.f32 %v1677, %v1732
  %v1737 = vadd.f32 %v1678, %v1733
  %v1738 = vadd.f32 %v1679, %v1734
  %v1739 = vadd.f32 %v1680, %v1735
  %s1740 = scalar_lea.vmem %s9, 32
  %v1741 = vld [vmem:[%s1740] sm:$0xff]
  %1743 = vset.pattern.permute.xlu0 0
  %1744 = vperm.xlu0 %1743, %v1741
  %v1745 = vpop.permute.xlu0 %1744
  %v1747 = vmul.f32 %v1745, %v1491
  %v1748 = vmul.f32 %v1745, %v1492
  %v1749 = vmul.f32 %v1745, %v1493
  %v1750 = vmul.f32 %v1745, %v1494
  %v1751 = vadd.f32 %v1736, %v1747
  %v1752 = vadd.f32 %v1737, %v1748
  %v1753 = vadd.f32 %v1738, %v1749
  %v1754 = vadd.f32 %v1739, %v1750
  %v1755 = vld [vmem:[#allocation2 + $0x8] sm:$0xff]
  %v1756 = vld [vmem:[#allocation2 + $0x10] sm:$0xff]
  %v1757 = vld [vmem:[#allocation2 + $0x18] sm:$0xff]
  %v1758 = vld [vmem:[#allocation2 + $0x20] sm:$0xff]
  %v1759 = vld [vmem:[#allocation2 + $0x28] sm:$0xff]
  %v1760 = vld [vmem:[%s338] sm:$0xf]
  %v1762 = vlaneseq
  %v1763 = vshrl.u32 %v1762, 7
  %v1764 = vsub.s32 0, %v1763
  %v1765 = vrot.slane %v1760, %v1764
  %v1766 = vlaneseq
  %v1767 = vshrl.u32 %v1766, 7
  %v1768 = vsub.s32 1, %v1767
  %v1769 = vrot.slane %v1760, %v1768
  %v1770 = vlaneseq
  %v1771 = vshrl.u32 %v1770, 7
  %v1772 = vsub.s32 2, %v1771
  %v1773 = vrot.slane %v1760, %v1772
  %v1774 = vlaneseq
  %v1775 = vshrl.u32 %v1774, 7
  %v1776 = vsub.s32 3, %v1775
  %v1777 = vrot.slane %v1760, %v1776
  %1787 = vrot.lane.b32.xlu0 %v1755, 127
  %v1788 = vpop.permute.xlu0 %1787
  %1789 = vrot.lane.b32.xlu0 %v1756, 127
  %v1790 = vpop.permute.xlu0 %1789
  %1791 = vrot.lane.b32.xlu0 %v1757, 127
  %v1792 = vpop.permute.xlu0 %1791
  %1793 = vrot.lane.b32.xlu0 %v1758, 127
  %v1794 = vpop.permute.xlu0 %1793
  %1795 = vrot.lane.b32.xlu0 %v1759, 127
  %v1796 = vpop.permute.xlu0 %1795
  %v1797 = vsel %vm376, %v1788, %v1790
  %v1798 = vsel %vm376, %v1790, %v1792
  %v1799 = vsel %vm376, %v1792, %v1794
  %v1800 = vsel %vm376, %v1794, %v1796
  %v1805 = vmul.f32 %v1765, %v1797
  %v1806 = vmul.f32 %v1769, %v1798
  %v1807 = vmul.f32 %v1773, %v1799
  %v1808 = vmul.f32 %v1777, %v1800
  %s1809 = scalar_lea.vmem %s9, 40
  %v1810 = vld [vmem:[%s1809] sm:$0xff]
  %1812 = vset.pattern.permute.xlu0 0
  %1813 = vperm.xlu0 %1812, %v1810
  %v1814 = vpop.permute.xlu0 %1813
  %v1816 = vmul.f32 %v1814, %v1805
  %v1817 = vmul.f32 %v1814, %v1806
  %v1818 = vmul.f32 %v1814, %v1807
  %v1819 = vmul.f32 %v1814, %v1808
  %v1820 = vadd.f32 %v1751, %v1816
  %v1821 = vadd.f32 %v1752, %v1817
  %v1822 = vadd.f32 %v1753, %v1818
  %v1823 = vadd.f32 %v1754, %v1819
  %v1824 = vld [vmem:[%s404] sm:$0xf]
  %v1826 = vlaneseq
  %v1827 = vshrl.u32 %v1826, 7
  %v1828 = vsub.s32 0, %v1827
  %v1829 = vrot.slane %v1824, %v1828
  %v1830 = vlaneseq
  %v1831 = vshrl.u32 %v1830, 7
  %v1832 = vsub.s32 1, %v1831
  %v1833 = vrot.slane %v1824, %v1832
  %v1834 = vlaneseq
  %v1835 = vshrl.u32 %v1834, 7
  %v1836 = vsub.s32 2, %v1835
  %v1837 = vrot.slane %v1824, %v1836
  %v1838 = vlaneseq
  %v1839 = vshrl.u32 %v1838, 7
  %v1840 = vsub.s32 3, %v1839
  %v1841 = vrot.slane %v1824, %v1840
  %1846 = vrot.lane.b32.xlu0 %v1755, 113
  %v1847 = vpop.permute.xlu0 %1846
  %1848 = vrot.lane.b32.xlu0 %v1756, 113
  %v1849 = vpop.permute.xlu0 %1848
  %1850 = vrot.lane.b32.xlu0 %v1757, 113
  %v1851 = vpop.permute.xlu0 %1850
  %1852 = vrot.lane.b32.xlu0 %v1758, 113
  %v1853 = vpop.permute.xlu0 %1852
  %1854 = vrot.lane.b32.xlu0 %v1759, 113
  %v1855 = vpop.permute.xlu0 %1854
  %v1856 = vsel %vm437, %v1847, %v1849
  %v1857 = vsel %vm437, %v1849, %v1851
  %v1858 = vsel %vm437, %v1851, %v1853
  %v1859 = vsel %vm437, %v1853, %v1855
  %v1864 = vmul.f32 %v1829, %v1856
  %v1865 = vmul.f32 %v1833, %v1857
  %v1866 = vmul.f32 %v1837, %v1858
  %v1867 = vmul.f32 %v1841, %v1859
  %s1868 = scalar_lea.vmem %s9, 48
  %v1869 = vld [vmem:[%s1868] sm:$0xff]
  %1871 = vset.pattern.permute.xlu0 0
  %1872 = vperm.xlu0 %1871, %v1869
  %v1873 = vpop.permute.xlu0 %1872
  %v1875 = vmul.f32 %v1873, %v1864
  %v1876 = vmul.f32 %v1873, %v1865
  %v1877 = vmul.f32 %v1873, %v1866
  %v1878 = vmul.f32 %v1873, %v1867
  %v1879 = vadd.f32 %v1820, %v1875
  %v1880 = vadd.f32 %v1821, %v1876
  %v1881 = vadd.f32 %v1822, %v1877
  %v1882 = vadd.f32 %v1823, %v1878
  %v1883 = vld [vmem:[%s465] sm:$0xf]
  %v1885 = vlaneseq
  %v1886 = vshrl.u32 %v1885, 7
  %v1887 = vsub.s32 0, %v1886
  %v1888 = vrot.slane %v1883, %v1887
  %v1889 = vlaneseq
  %v1890 = vshrl.u32 %v1889, 7
  %v1891 = vsub.s32 1, %v1890
  %v1892 = vrot.slane %v1883, %v1891
  %v1893 = vlaneseq
  %v1894 = vshrl.u32 %v1893, 7
  %v1895 = vsub.s32 2, %v1894
  %v1896 = vrot.slane %v1883, %v1895
  %v1897 = vlaneseq
  %v1898 = vshrl.u32 %v1897, 7
  %v1899 = vsub.s32 3, %v1898
  %v1900 = vrot.slane %v1883, %v1899
  %1905 = vrot.lane.b32.xlu0 %v1755, 112
  %v1906 = vpop.permute.xlu0 %1905
  %1907 = vrot.lane.b32.xlu0 %v1756, 112
  %v1908 = vpop.permute.xlu0 %1907
  %1909 = vrot.lane.b32.xlu0 %v1757, 112
  %v1910 = vpop.permute.xlu0 %1909
  %1911 = vrot.lane.b32.xlu0 %v1758, 112
  %v1912 = vpop.permute.xlu0 %1911
  %1913 = vrot.lane.b32.xlu0 %v1759, 112
  %v1914 = vpop.permute.xlu0 %1913
  %v1915 = vsel %vm498, %v1906, %v1908
  %v1916 = vsel %vm498, %v1908, %v1910
  %v1917 = vsel %vm498, %v1910, %v1912
  %v1918 = vsel %vm498, %v1912, %v1914
  %v1923 = vmul.f32 %v1888, %v1915
  %v1924 = vmul.f32 %v1892, %v1916
  %v1925 = vmul.f32 %v1896, %v1917
  %v1926 = vmul.f32 %v1900, %v1918
  %s1927 = scalar_lea.vmem %s9, 56
  %v1928 = vld [vmem:[%s1927] sm:$0xff]
  %1930 = vset.pattern.permute.xlu0 0
  %1931 = vperm.xlu0 %1930, %v1928
  %v1932 = vpop.permute.xlu0 %1931
  %v1934 = vmul.f32 %v1932, %v1923
  %v1935 = vmul.f32 %v1932, %v1924
  %v1936 = vmul.f32 %v1932, %v1925
  %v1937 = vmul.f32 %v1932, %v1926
  %v1938 = vadd.f32 %v1879, %v1934
  %v1939 = vadd.f32 %v1880, %v1935
  %v1940 = vadd.f32 %v1881, %v1936
  %v1941 = vadd.f32 %v1882, %v1937
  %v1942 = vld [vmem:[%s526] sm:$0xf]
  %v1944 = vlaneseq
  %v1945 = vshrl.u32 %v1944, 7
  %v1946 = vsub.s32 0, %v1945
  %v1947 = vrot.slane %v1942, %v1946
  %v1948 = vlaneseq
  %v1949 = vshrl.u32 %v1948, 7
  %v1950 = vsub.s32 1, %v1949
  %v1951 = vrot.slane %v1942, %v1950
  %v1952 = vlaneseq
  %v1953 = vshrl.u32 %v1952, 7
  %v1954 = vsub.s32 2, %v1953
  %v1955 = vrot.slane %v1942, %v1954
  %v1956 = vlaneseq
  %v1957 = vshrl.u32 %v1956, 7
  %v1958 = vsub.s32 3, %v1957
  %v1959 = vrot.slane %v1942, %v1958
  %1964 = vrot.lane.b32.xlu0 %v1755, 111
  %v1965 = vpop.permute.xlu0 %1964
  %1966 = vrot.lane.b32.xlu0 %v1756, 111
  %v1967 = vpop.permute.xlu0 %1966
  %1968 = vrot.lane.b32.xlu0 %v1757, 111
  %v1969 = vpop.permute.xlu0 %1968
  %1970 = vrot.lane.b32.xlu0 %v1758, 111
  %v1971 = vpop.permute.xlu0 %1970
  %1972 = vrot.lane.b32.xlu0 %v1759, 111
  %v1973 = vpop.permute.xlu0 %1972
  %v1974 = vsel %vm559, %v1965, %v1967
  %v1975 = vsel %vm559, %v1967, %v1969
  %v1976 = vsel %vm559, %v1969, %v1971
  %v1977 = vsel %vm559, %v1971, %v1973
  %v1982 = vmul.f32 %v1947, %v1974
  %v1983 = vmul.f32 %v1951, %v1975
  %v1984 = vmul.f32 %v1955, %v1976
  %v1985 = vmul.f32 %v1959, %v1977
  %s1986 = scalar_lea.vmem %s9, 64
  %v1987 = vld [vmem:[%s1986] sm:$0xff]
  %1989 = vset.pattern.permute.xlu0 0
  %1990 = vperm.xlu0 %1989, %v1987
  %v1991 = vpop.permute.xlu0 %1990
  %v1993 = vmul.f32 %v1991, %v1982
  %v1994 = vmul.f32 %v1991, %v1983
  %v1995 = vmul.f32 %v1991, %v1984
  %v1996 = vmul.f32 %v1991, %v1985
  %v1997 = vadd.f32 %v1938, %v1993
  %v1998 = vadd.f32 %v1939, %v1994
  %v1999 = vadd.f32 %v1940, %v1995
  %v2000 = vadd.f32 %v1941, %v1996
  %v2001 = vld [vmem:[%s10] sm:$0xff]
  %v2003 = vsel %vm1302, %v2001, 0
  %2005 = vmatprep.subr.mxu0 %v1998
  %2006 = vmatpush1.msra.mxu0 %v1997
  %2007 = vmatprep.subr.mxu0 0.0
  %2008 = vmatpush1.msra.mxu0 0.0
  %2009 = vmatprep.subr.mxu0 0.0
  %2010 = vmatpush1.msra.mxu0 0.0
  %2011 = vmatprep.subr.mxu0 0.0
  %2012 = vmatpush1.msra.mxu0 0.0
  %2013 = vmatprep.subr.mxu0 0.0
  %2014 = vmatpush1.msra.mxu0 0.0
  %2015 = vmatprep.subr.mxu0 0.0
  %2016 = vmatpush1.msra.mxu0 0.0
  %2017 = vmatprep.subr.mxu0 0.0
  %2018 = vmatpush1.msra.mxu0 0.0
  %2019 = vmatprep.subr.mxu0 0.0
  %2020 = vmatpush1.msra.mxu0 0.0
  %2021 = vmatprep.subr.mxu0 0.0
  %2022 = vmatpush1.msra.mxu0 0.0
  %2023 = vmatprep.subr.mxu0 0.0
  %2024 = vmatpush1.msra.mxu0 0.0
  %2025 = vmatprep.subr.mxu0 0.0
  %2026 = vmatpush1.msra.mxu0 0.0
  %2027 = vmatprep.subr.mxu0 0.0
  %2028 = vmatpush1.msra.mxu0 0.0
  %2029 = vmatprep.subr.mxu0 0.0
  %2030 = vmatpush1.msra.mxu0 0.0
  %2031 = vmatprep.subr.mxu0 0.0
  %2032 = vmatpush1.msra.mxu0 0.0
  %2033 = vmatprep.subr.mxu0 0.0
  %2034 = vmatpush1.msra.mxu0 0.0
  %2035 = vmatprep.subr.mxu0 0.0
  %2036 = vmatpush1.msra.mxu0 0.0
  %2037 = vmatprep.subr.mxu0 0.0
  %2038 = vmatpush1.msra.mxu0 0.0
  %2039 = vmatprep.subr.mxu0 0.0
  %2040 = vmatpush1.msra.mxu0 0.0
  %2041 = vmatprep.subr.mxu0 0.0
  %2042 = vmatpush1.msra.mxu0 0.0
  %2043 = vmatprep.subr.mxu0 0.0
  %2044 = vmatpush1.msra.mxu0 0.0
  %2045 = vmatprep.subr.mxu0 0.0
  %2046 = vmatpush1.msra.mxu0 0.0
  %2047 = vmatprep.subr.mxu0 0.0
  %2048 = vmatpush1.msra.mxu0 0.0
  %2049 = vmatprep.subr.mxu0 0.0
  %2050 = vmatpush1.msra.mxu0 0.0
  %2051 = vmatprep.subr.mxu0 0.0
  %2052 = vmatpush1.msra.mxu0 0.0
  %2053 = vmatprep.subr.mxu0 0.0
  %2054 = vmatpush1.msra.mxu0 0.0
  %2055 = vmatprep.subr.mxu0 0.0
  %2056 = vmatpush1.msra.mxu0 0.0
  %2057 = vmatprep.subr.mxu0 0.0
  %2058 = vmatpush1.msra.mxu0 0.0
  %2059 = vmatprep.subr.mxu0 0.0
  %2060 = vmatpush1.msra.mxu0 0.0
  %2061 = vmatprep.subr.mxu0 0.0
  %2062 = vmatpush1.msra.mxu0 0.0
  %2063 = vmatprep.subr.mxu0 0.0
  %2064 = vmatpush1.msra.mxu0 0.0
  %2065 = vmatprep.subr.mxu0 0.0
  %2066 = vmatpush1.msra.mxu0 0.0
  %2067 = vmatprep.subr.mxu0 0.0
  %2068 = vmatpush1.msra.mxu0 0.0
  %2069 = vmatprep.mubr.f32.mxu0 0.0
  %2070 = vmatmul.mubr.f32.gmra.mrb[0].mxu0 %v2003
  %v2071 = vpop.f32.mrb[0].mxu0
  %v2072 = vadd.f32 0.0, %v2071
  %v2073 = vpop.f32.mrb[0].mxu0
  %v2074 = vadd.f32 0.0, %v2073
  %2075 = vdwg.mxu0
  %2076 = vmatprep.subr.mxu0 %v2000
  %2077 = vmatpush1.msra.mxu0 %v1999
  %2078 = vmatprep.subr.mxu0 0.0
  %2079 = vmatpush1.msra.mxu0 0.0
  %2080 = vmatprep.subr.mxu0 0.0
  %2081 = vmatpush1.msra.mxu0 0.0
  %2082 = vmatprep.subr.mxu0 0.0
  %2083 = vmatpush1.msra.mxu0 0.0
  %2084 = vmatprep.subr.mxu0 0.0
  %2085 = vmatpush1.msra.mxu0 0.0
  %2086 = vmatprep.subr.mxu0 0.0
  %2087 = vmatpush1.msra.mxu0 0.0
  %2088 = vmatprep.subr.mxu0 0.0
  %2089 = vmatpush1.msra.mxu0 0.0
  %2090 = vmatprep.subr.mxu0 0.0
  %2091 = vmatpush1.msra.mxu0 0.0
  %2092 = vmatprep.subr.mxu0 0.0
  %2093 = vmatpush1.msra.mxu0 0.0
  %2094 = vmatprep.subr.mxu0 0.0
  %2095 = vmatpush1.msra.mxu0 0.0
  %2096 = vmatprep.subr.mxu0 0.0
  %2097 = vmatpush1.msra.mxu0 0.0
  %2098 = vmatprep.subr.mxu0 0.0
  %2099 = vmatpush1.msra.mxu0 0.0
  %2100 = vmatprep.subr.mxu0 0.0
  %2101 = vmatpush1.msra.mxu0 0.0
  %2102 = vmatprep.subr.mxu0 0.0
  %2103 = vmatpush1.msra.mxu0 0.0
  %2104 = vmatprep.subr.mxu0 0.0
  %2105 = vmatpush1.msra.mxu0 0.0
  %2106 = vmatprep.subr.mxu0 0.0
  %2107 = vmatpush1.msra.mxu0 0.0
  %2108 = vmatprep.subr.mxu0 0.0
  %2109 = vmatpush1.msra.mxu0 0.0
  %2110 = vmatprep.subr.mxu0 0.0
  %2111 = vmatpush1.msra.mxu0 0.0
  %2112 = vmatprep.subr.mxu0 0.0
  %2113 = vmatpush1.msra.mxu0 0.0
  %2114 = vmatprep.subr.mxu0 0.0
  %2115 = vmatpush1.msra.mxu0 0.0
  %2116 = vmatprep.subr.mxu0 0.0
  %2117 = vmatpush1.msra.mxu0 0.0
  %2118 = vmatprep.subr.mxu0 0.0
  %2119 = vmatpush1.msra.mxu0 0.0
  %2120 = vmatprep.subr.mxu0 0.0
  %2121 = vmatpush1.msra.mxu0 0.0
  %2122 = vmatprep.subr.mxu0 0.0
  %2123 = vmatpush1.msra.mxu0 0.0
  %2124 = vmatprep.subr.mxu0 0.0
  %2125 = vmatpush1.msra.mxu0 0.0
  %2126 = vmatprep.subr.mxu0 0.0
  %2127 = vmatpush1.msra.mxu0 0.0
  %2128 = vmatprep.subr.mxu0 0.0
  %2129 = vmatpush1.msra.mxu0 0.0
  %2130 = vmatprep.subr.mxu0 0.0
  %2131 = vmatpush1.msra.mxu0 0.0
  %2132 = vmatprep.subr.mxu0 0.0
  %2133 = vmatpush1.msra.mxu0 0.0
  %2134 = vmatprep.subr.mxu0 0.0
  %2135 = vmatpush1.msra.mxu0 0.0
  %2136 = vmatprep.subr.mxu0 0.0
  %2137 = vmatpush1.msra.mxu0 0.0
  %2138 = vmatprep.subr.mxu0 0.0
  %2139 = vmatpush1.msra.mxu0 0.0
  %2140 = vmatprep.mubr.f32.mxu0 0.0
  %2141 = vmatmul.mubr.f32.gmra.mrb[0].mxu0 %v2003
  %v2142 = vpop.f32.mrb[0].mxu0
  %v2143 = vadd.f32 0.0, %v2142
  %v2144 = vpop.f32.mrb[0].mxu0
  %v2145 = vadd.f32 0.0, %v2144
  %2146 = vdwg.mxu0
  %v2147 = vadd.f32 %v2072, %v2074
  %v2148 = vadd.f32 %v2147, %v2143
  %v2149 = vadd.f32 %v2148, %v2145
  %2150 = vadd.xlane.f32.xlu0 %v2149
  %v2151 = vpop.xlane.xlu0 %2150
  %v2152 = vmul.f32 %v2151, %v752
  %v2153 = vsub.f32 %v2072, %v2152
  %v2154 = vsub.f32 %v2074, %v2152
  %v2155 = vsub.f32 %v2143, %v2152
  %v2156 = vsub.f32 %v2145, %v2152
  %v2157 = vmul.f32 %v2153, %v2153
  %v2158 = vmul.f32 %v2154, %v2154
  %v2159 = vmul.f32 %v2155, %v2155
  %v2160 = vmul.f32 %v2156, %v2156
  %v2161 = vadd.f32 %v2157, %v2158
  %v2162 = vadd.f32 %v2161, %v2159
  %v2163 = vadd.f32 %v2162, %v2160
  %2164 = vadd.xlane.f32.xlu0 %v2163
  %v2165 = vpop.xlane.xlu0 %2164
  %v2166 = vmul.f32 %v2165, %v752
  %v2167 = vadd.f32 %v2166, 1e-05
  %v2168 = vrsqrt.pop %v2167
  %v2169 = vld [vmem:[%s11] sm:$0xff]
  %v2170 = vmul.f32 %v2168, %v2169
  %2172 = vset.pattern.permute.xlu0 0
  %2173 = vperm.xlu0 %2172, %v2170
  %v2174 = vpop.permute.xlu0 %2173
  %v2176 = vmul.f32 %v2153, %v2174
  %v2177 = vmul.f32 %v2154, %v2174
  %v2178 = vmul.f32 %v2155, %v2174
  %v2179 = vmul.f32 %v2156, %v2174
  %v2180 = vld [vmem:[%s12] sm:$0xff]
  %2182 = vset.pattern.permute.xlu0 0
  %2183 = vperm.xlu0 %2182, %v2180
  %v2184 = vpop.permute.xlu0 %2183
  %v2186 = vadd.f32 %v2176, %v2184
  %v2187 = vadd.f32 %v2177, %v2184
  %v2188 = vadd.f32 %v2178, %v2184
  %v2189 = vadd.f32 %v2179, %v2184
  %v2190 = vmax.f32 %v2186, 0.0
  %v2191 = vmax.f32 %v2187, 0.0
  %v2192 = vmax.f32 %v2188, 0.0
  %v2193 = vmax.f32 %v2189, 0.0
  %2194 = vst [vmem:[#allocation2 + $0x8] sm:$0xff] %v2190
  %2195 = vst [vmem:[#allocation2 + $0x10] sm:$0xff] %v2191
  %2196 = vst [vmem:[#allocation2 + $0x18] sm:$0xff] %v2192
  %2197 = vst [vmem:[#allocation2 + $0x20] sm:$0xff] %v2193
  %v2198 = vld [vmem:[%s14] sm:$0xf]
  %v2199 = vlaneseq
  %v2200 = vshrl.u32 %v2199, 7
  %v2201 = vsub.s32 0, %v2200
  %v2202 = vrot.slane %v2198, %v2201
  %v2203 = vlaneseq
  %v2204 = vshrl.u32 %v2203, 7
  %v2205 = vsub.s32 1, %v2204
  %v2206 = vrot.slane %v2198, %v2205
  %v2207 = vlaneseq
  %v2208 = vshrl.u32 %v2207, 7
  %v2209 = vsub.s32 2, %v2208
  %v2210 = vrot.slane %v2198, %v2209
  %v2211 = vlaneseq
  %v2212 = vshrl.u32 %v2211, 7
  %v2213 = vsub.s32 3, %v2212
  %v2214 = vrot.slane %v2198, %v2213
  %v2215 = vld [vmem:[#allocation2 + $0x8] sm:$0xff]
  %v2216 = vld [vmem:[#allocation2 + $0x10] sm:$0xff]
  %v2217 = vld [vmem:[#allocation2 + $0x18] sm:$0xff]
  %v2218 = vld [vmem:[#allocation2 + $0x20] sm:$0xff]
  %v2219 = vld [vmem:[#allocation2 + $0x28] sm:$0xff]
  %2224 = vrot.lane.b32.xlu0 %v2190, 1
  %v2225 = vpop.permute.xlu0 %2224
  %2226 = vrot.lane.b32.xlu0 %v2191, 1
  %v2227 = vpop.permute.xlu0 %2226
  %2228 = vrot.lane.b32.xlu0 %v2192, 1
  %v2229 = vpop.permute.xlu0 %2228
  %2230 = vrot.lane.b32.xlu0 %v2193, 1
  %v2231 = vpop.permute.xlu0 %2230
  %v2232 = vsel %vm290, %v2225, %v2227
  %v2233 = vsel %vm290, %v2227, %v2229
  %v2234 = vsel %vm290, %v2229, %v2231
  %vm2240 = vcmp.gt.f32.partialorder %v2215, %v2225
  %vm2241 = vcmp.gt.f32.partialorder %v2216, %v2232
  %vm2242 = vcmp.gt.f32.partialorder %v2217, %v2233
  %vm2243 = vcmp.gt.f32.partialorder %v2218, %v2234
  %vm2244 = vcmp.gt.f32.partialorder %v2219, %v2231
  %v2245 = vadd.s32 %v2198, 1
  %v2246 = vlaneseq
  %v2247 = vshrl.u32 %v2246, 7
  %v2248 = vsub.s32 0, %v2247
  %v2249 = vrot.slane %v2245, %v2248
  %v2250 = vlaneseq
  %v2251 = vshrl.u32 %v2250, 7
  %v2252 = vsub.s32 1, %v2251
  %v2253 = vrot.slane %v2245, %v2252
  %v2254 = vlaneseq
  %v2255 = vshrl.u32 %v2254, 7
  %v2256 = vsub.s32 2, %v2255
  %v2257 = vrot.slane %v2245, %v2256
  %v2258 = vlaneseq
  %v2259 = vshrl.u32 %v2258, 7
  %v2260 = vsub.s32 3, %v2259
  %v2261 = vrot.slane %v2245, %v2260
  %2262 = vrot.lane.b32.xlu0 %v2249, 1
  %v2263 = vpop.permute.xlu0 %2262
  %2264 = vrot.lane.b32.xlu0 %v2253, 1
  %v2265 = vpop.permute.xlu0 %2264
  %2266 = vrot.lane.b32.xlu0 %v2257, 1
  %v2267 = vpop.permute.xlu0 %2266
  %2268 = vrot.lane.b32.xlu0 %v2261, 1
  %v2269 = vpop.permute.xlu0 %2268
  %v2270 = vsel %vm290, %v2263, %v2265
  %v2271 = vsel %vm290, %v2265, %v2267
  %v2272 = vsel %vm290, %v2267, %v2269
  %2273 = vrot.lane.b32.xlu0 %v2202, 1
  %v2274 = vpop.permute.xlu0 %2273
  %2275 = vrot.lane.b32.xlu0 %v2206, 1
  %v2276 = vpop.permute.xlu0 %2275
  %2277 = vrot.lane.b32.xlu0 %v2210, 1
  %v2278 = vpop.permute.xlu0 %2277
  %2279 = vrot.lane.b32.xlu0 %v2214, 1
  %v2280 = vpop.permute.xlu0 %2279
  %v2281 = vsel %vm290, %v2274, %v2276
  %v2282 = vsel %vm290, %v2276, %v2278
  %v2283 = vsel %vm290, %v2278, %v2280
  %v2284 = vsel %vm2240, %v2263, %v2274
  %v2285 = vsel %vm2241, %v2270, %v2281
  %v2286 = vsel %vm2242, %v2271, %v2282
  %v2287 = vsel %vm2243, %v2272, %v2283
  %v2288 = vsel %vm2244, %v2269, %v2280
  %v2289 = vsel %vm2240, %v2215, %v2225
  %v2290 = vsel %vm2241, %v2216, %v2232
  %v2291 = vsel %vm2242, %v2217, %v2233
  %v2292 = vsel %vm2243, %v2218, %v2234
  %v2293 = vsel %vm2244, %v2219, %v2231
  %2299 = vrot.lane.b32.xlu0 %v2289, 15
  %v2300 = vpop.permute.xlu0 %2299
  %2301 = vrot.lane.b32.xlu0 %v2290, 15
  %v2302 = vpop.permute.xlu0 %2301
  %2303 = vrot.lane.b32.xlu0 %v2291, 15
  %v2304 = vpop.permute.xlu0 %2303
  %2305 = vrot.lane.b32.xlu0 %v2292, 15
  %v2306 = vpop.permute.xlu0 %2305
  %2307 = vrot.lane.b32.xlu0 %v2293, 15
  %v2308 = vpop.permute.xlu0 %2307
  %v2309 = vsel %vm229, %v2300, %v2302
  %v2310 = vsel %vm229, %v2302, %v2304
  %v2311 = vsel %vm229, %v2304, %v2306
  %v2312 = vsel %vm229, %v2306, %v2308
  %vm2318 = vcmp.gt.f32.partialorder %v2215, %v2300
  %vm2319 = vcmp.gt.f32.partialorder %v2216, %v2309
  %vm2320 = vcmp.gt.f32.partialorder %v2217, %v2310
  %vm2321 = vcmp.gt.f32.partialorder %v2218, %v2311
  %vm2322 = vcmp.gt.f32.partialorder %v2219, %v2312
  %v2323 = vadd.s32 %v2198, 16
  %v2324 = vlaneseq
  %v2325 = vshrl.u32 %v2324, 7
  %v2326 = vsub.s32 0, %v2325
  %v2327 = vrot.slane %v2323, %v2326
  %v2328 = vlaneseq
  %v2329 = vshrl.u32 %v2328, 7
  %v2330 = vsub.s32 1, %v2329
  %v2331 = vrot.slane %v2323, %v2330
  %v2332 = vlaneseq
  %v2333 = vshrl.u32 %v2332, 7
  %v2334 = vsub.s32 2, %v2333
  %v2335 = vrot.slane %v2323, %v2334
  %v2336 = vlaneseq
  %v2337 = vshrl.u32 %v2336, 7
  %v2338 = vsub.s32 3, %v2337
  %v2339 = vrot.slane %v2323, %v2338
  %2340 = vrot.lane.b32.xlu0 %v2327, 16
  %v2341 = vpop.permute.xlu0 %2340
  %2342 = vrot.lane.b32.xlu0 %v2331, 16
  %v2343 = vpop.permute.xlu0 %2342
  %2344 = vrot.lane.b32.xlu0 %v2335, 16
  %v2345 = vpop.permute.xlu0 %2344
  %2346 = vrot.lane.b32.xlu0 %v2339, 16
  %v2347 = vpop.permute.xlu0 %2346
  %v2348 = vsel %vm168, %v2341, %v2343
  %v2349 = vsel %vm168, %v2343, %v2345
  %v2350 = vsel %vm168, %v2345, %v2347
  %2351 = vrot.lane.b32.xlu0 %v2284, 15
  %v2352 = vpop.permute.xlu0 %2351
  %2353 = vrot.lane.b32.xlu0 %v2285, 15
  %v2354 = vpop.permute.xlu0 %2353
  %2355 = vrot.lane.b32.xlu0 %v2286, 15
  %v2356 = vpop.permute.xlu0 %2355
  %2357 = vrot.lane.b32.xlu0 %v2287, 15
  %v2358 = vpop.permute.xlu0 %2357
  %2359 = vrot.lane.b32.xlu0 %v2288, 15
  %v2360 = vpop.permute.xlu0 %2359
  %v2361 = vsel %vm229, %v2352, %v2354
  %v2362 = vsel %vm229, %v2354, %v2356
  %v2363 = vsel %vm229, %v2356, %v2358
  %v2364 = vsel %vm229, %v2358, %v2360
  %v2365 = vsel %vm2318, %v2341, %v2352
  %v2366 = vsel %vm2319, %v2348, %v2361
  %v2367 = vsel %vm2320, %v2349, %v2362
  %v2368 = vsel %vm2321, %v2350, %v2363
  %v2369 = vsel %vm2322, %v2347, %v2364
  %v2370 = vsel %vm2318, %v2215, %v2300
  %v2371 = vsel %vm2319, %v2216, %v2309
  %v2372 = vsel %vm2320, %v2217, %v2310
  %v2373 = vsel %vm2321, %v2218, %v2311
  %v2374 = vsel %vm2322, %v2219, %v2312
  %2380 = vrot.lane.b32.xlu0 %v2370, 1
  %v2381 = vpop.permute.xlu0 %2380
  %2382 = vrot.lane.b32.xlu0 %v2371, 1
  %v2383 = vpop.permute.xlu0 %2382
  %2384 = vrot.lane.b32.xlu0 %v2372, 1
  %v2385 = vpop.permute.xlu0 %2384
  %2386 = vrot.lane.b32.xlu0 %v2373, 1
  %v2387 = vpop.permute.xlu0 %2386
  %2388 = vrot.lane.b32.xlu0 %v2374, 1
  %v2389 = vpop.permute.xlu0 %2388
  %v2390 = vsel %vm290, %v2381, %v2383
  %v2391 = vsel %vm290, %v2383, %v2385
  %v2392 = vsel %vm290, %v2385, %v2387
  %v2393 = vsel %vm290, %v2387, %v2389
  %vm2399 = vcmp.gt.f32.partialorder %v2215, %v2381
  %vm2400 = vcmp.gt.f32.partialorder %v2216, %v2390
  %vm2401 = vcmp.gt.f32.partialorder %v2217, %v2391
  %vm2402 = vcmp.gt.f32.partialorder %v2218, %v2392
  %vm2403 = vcmp.gt.f32.partialorder %v2219, %v2393
  %v2404 = vadd.s32 %v2198, 17
  %v2405 = vlaneseq
  %v2406 = vshrl.u32 %v2405, 7
  %v2407 = vsub.s32 0, %v2406
  %v2408 = vrot.slane %v2404, %v2407
  %v2409 = vlaneseq
  %v2410 = vshrl.u32 %v2409, 7
  %v2411 = vsub.s32 1, %v2410
  %v2412 = vrot.slane %v2404, %v2411
  %v2413 = vlaneseq
  %v2414 = vshrl.u32 %v2413, 7
  %v2415 = vsub.s32 2, %v2414
  %v2416 = vrot.slane %v2404, %v2415
  %v2417 = vlaneseq
  %v2418 = vshrl.u32 %v2417, 7
  %v2419 = vsub.s32 3, %v2418
  %v2420 = vrot.slane %v2404, %v2419
  %2421 = vrot.lane.b32.xlu0 %v2408, 17
  %v2422 = vpop.permute.xlu0 %2421
  %2423 = vrot.lane.b32.xlu0 %v2412, 17
  %v2424 = vpop.permute.xlu0 %2423
  %2425 = vrot.lane.b32.xlu0 %v2416, 17
  %v2426 = vpop.permute.xlu0 %2425
  %2427 = vrot.lane.b32.xlu0 %v2420, 17
  %v2428 = vpop.permute.xlu0 %2427
  %v2429 = vsel %vm112, %v2422, %v2424
  %v2430 = vsel %vm112, %v2424, %v2426
  %v2431 = vsel %vm112, %v2426, %v2428
  %2432 = vrot.lane.b32.xlu0 %v2365, 1
  %v2433 = vpop.permute.xlu0 %2432
  %2434 = vrot.lane.b32.xlu0 %v2366, 1
  %v2435 = vpop.permute.xlu0 %2434
  %2436 = vrot.lane.b32.xlu0 %v2367, 1
  %v2437 = vpop.permute.xlu0 %2436
  %2438 = vrot.lane.b32.xlu0 %v2368, 1
  %v2439 = vpop.permute.xlu0 %2438
  %2440 = vrot.lane.b32.xlu0 %v2369, 1
  %v2441 = vpop.permute.xlu0 %2440
  %v2442 = vsel %vm290, %v2433, %v2435
  %v2443 = vsel %vm290, %v2435, %v2437
  %v2444 = vsel %vm290, %v2437, %v2439
  %v2445 = vsel %vm290, %v2439, %v2441
  %v2446 = vsel %vm2399, %v2422, %v2433
  %v2447 = vsel %vm2400, %v2429, %v2442
  %v2448 = vsel %vm2401, %v2430, %v2443
  %v2449 = vsel %vm2402, %v2431, %v2444
  %v2450 = vsel %vm2403, %v2428, %v2445
  %v2451 = vsel %vm2399, %v2215, %v2381
  %v2452 = vsel %vm2400, %v2216, %v2390
  %v2453 = vsel %vm2401, %v2217, %v2391
  %v2454 = vsel %vm2402, %v2218, %v2392
  %v2455 = vsel %vm2403, %v2219, %v2393
  %2461 = vrot.lane.b32.xlu0 %v2451, 111
  %v2462 = vpop.permute.xlu0 %2461
  %2463 = vrot.lane.b32.xlu0 %v2452, 111
  %v2464 = vpop.permute.xlu0 %2463
  %2465 = vrot.lane.b32.xlu0 %v2453, 111
  %v2466 = vpop.permute.xlu0 %2465
  %2467 = vrot.lane.b32.xlu0 %v2454, 111
  %v2468 = vpop.permute.xlu0 %2467
  %2469 = vrot.lane.b32.xlu0 %v2455, 111
  %v2470 = vpop.permute.xlu0 %2469
  %v2471 = vsel %vm559, %v2462, %v2464
  %v2472 = vsel %vm559, %v2464, %v2466
  %v2473 = vsel %vm559, %v2466, %v2468
  %v2474 = vsel %vm559, %v2468, %v2470
  %2479 = vst [vmem:[%s15] sm:$0xff] %v2471
  %2480 = vst [vmem:[%s15 + $0x8] sm:$0xff] %v2472
  %2481 = vst [vmem:[%s15 + $0x10] sm:$0xff] %v2473
  %2482 = vst [vmem:[%s15 + $0x18] sm:$0xff] %v2474
  %2483 = vrot.lane.b32.xlu0 %v2446, 111
  %v2484 = vpop.permute.xlu0 %2483
  %2485 = vrot.lane.b32.xlu0 %v2447, 111
  %v2486 = vpop.permute.xlu0 %2485
  %2487 = vrot.lane.b32.xlu0 %v2448, 111
  %v2488 = vpop.permute.xlu0 %2487
  %2489 = vrot.lane.b32.xlu0 %v2449, 111
  %v2490 = vpop.permute.xlu0 %2489
  %2491 = vrot.lane.b32.xlu0 %v2450, 111
  %v2492 = vpop.permute.xlu0 %2491
  %v2493 = vsel %vm559, %v2484, %v2486
  %v2494 = vsel %vm559, %v2486, %v2488
  %v2495 = vsel %vm559, %v2488, %v2490
  %v2496 = vsel %vm559, %v2490, %v2492
  %2497 = vst [vmem:[%s16] sm:$0xff] %v2493
  %2498 = vst [vmem:[%s16 + $0x8] sm:$0xff] %v2494
  %2499 = vst [vmem:[%s16 + $0x10] sm:$0xff] %v2495
  %2500 = vst [vmem:[%s16 + $0x18] sm:$0xff] %v2496
  // Predicated region
  $region62: #{downdsconv3_forward.1} parent=0 // pred_check
    _
  $region63: #{downdsconv3_forward.1} parent=0 // pred_check_branch
    %2502 = sbr.rel (0) target = $region65
  $region64: #{downdsconv3_forward.1} parent=0 // pred_region
    _
  $region65: #{downdsconv3_forward.1} parent=0 // pred_fallthru
    _
  // Predicated region
  $region66: #{downdsconv3_forward.1} parent=0 // pred_check
    _
  $region67: #{downdsconv3_forward.1} parent=0 // pred_check_branch
    %2504 = sbr.rel (0) target = $region69
  $region68: #{downdsconv3_forward.1} parent=0 // pred_region
    _
  $region69: #{downdsconv3_forward.1} parent=0 // pred_fallthru
    _
  // Predicated region
  $region70: #{downdsconv3_forward.1} parent=0 // pred_check
    _
  $region71: #{downdsconv3_forward.1} parent=0 // pred_check_branch
    %2506 = sbr.rel (0) target = $region73
  $region72: #{downdsconv3_forward.1} parent=0 // pred_region
    _
  $region73: #{downdsconv3_forward.1} parent=0 // pred_fallthru
    _
  // Predicated region
  $region74: #{downdsconv3_forward.1} parent=0 // pred_check
    _
  $region75: #{downdsconv3_forward.1} parent=0 // pred_check_branch
    %2508 = sbr.rel (0) target = $region77
  $region76: #{downdsconv3_forward.1} parent=0 // pred_region
    _
  $region77: #{downdsconv3_forward.1} parent=0 // pred_fallthru
    _

</llo_original>
